<compile_context>
chip_gen: v5e
topology: v5e:2x2
jax: 0.10.0
libtpu: 0.0.40
codegen_flags: <defaults>
</compile_context>

<pallas_src>
import math
import functools

import jax
import jax.numpy as jnp
from jax.experimental import pallas as pl
from jax.experimental.pallas import tpu as pltpu

VMEM = pltpu.MemorySpace.VMEM
SMEM = pltpu.MemorySpace.SMEM
NEG_INF = -1e9

_LAYER_WEIGHT_NAMES = ('ln1_g', 'ln1_b', 'wq', 'bq', 'wk', 'bk', 'wv', 'bv',
                       'wo', 'bo', 'ln2_g', 'ln2_b', 'w1', 'b1', 'w2', 'b2')
N_LAYER_WEIGHTS = len(_LAYER_WEIGHT_NAMES)


# ----------------------------- in-kernel helpers -----------------------------

def _bf16(x):
    # MXU operand cast (f32 accumulate is kept via preferred_element_type).
    return x.astype(jnp.bfloat16)


def _layernorm(x, g, b):
    mu = jnp.mean(x, axis=-1, keepdims=True)
    var = jnp.mean(jnp.square(x - mu), axis=-1, keepdims=True)
    return (x - mu) * jax.lax.rsqrt(var + 1e-5) * g + b


def _fused_layer_body(x, bias_fn, num_heads,
                      ln1_g, ln1_b, wq, bq, wk, bk, wv, bv, wo, bo,
                      ln2_g, ln2_b, w1, b1, w2, b2):
    """One pre-LN transformer block on a (S, D) tile. Weight args are Refs."""
    S, D = x.shape
    dh = D // num_heads
    inv_sqrt_dh = 1.0 / math.sqrt(dh)

    # ---- attention sub-block (residual fused) ----
    xn = _layernorm(x, ln1_g[...], ln1_b[...])
    xn_b = _bf16(xn)
    attn_out = bo[...]                                    # (1, D) bias, broadcasts up
    for h in range(num_heads):                            # heads on a leading weight axis
        q = (jnp.dot(xn_b, _bf16(wq[h]), preferred_element_type=jnp.float32)
             + bq[h]) * inv_sqrt_dh                       # fold 1/sqrt(dh) into q
        k = jnp.dot(xn_b, _bf16(wk[h]), preferred_element_type=jnp.float32) + bk[h]
        v = jnp.dot(xn_b, _bf16(wv[h]), preferred_element_type=jnp.float32) + bv[h]
        s = jax.lax.dot_general(_bf16(q), _bf16(k), (((1,), (1,)), ((), ())),
                                preferred_element_type=jnp.float32)      # (S, S)
        s = s + bias_fn(h)                                # bias built in-kernel
        s = s - jnp.max(s, axis=-1, keepdims=True)
        p = jnp.exp(s)
        p = p * pl.reciprocal(jnp.sum(p, axis=-1, keepdims=True), approx=True)
        o_h = jnp.dot(_bf16(p), _bf16(v), preferred_element_type=jnp.float32)   # (S, dh)
        attn_out = attn_out + jnp.dot(_bf16(o_h), _bf16(wo[h]),
                                      preferred_element_type=jnp.float32)       # (S, D)
    x = x + attn_out

    # ---- FFN sub-block (residual fused) ----
    xn = _layernorm(x, ln2_g[...], ln2_b[...])
    h_mid = jnp.dot(_bf16(xn), _bf16(w1[...]), preferred_element_type=jnp.float32) + b1[...]
    h_mid = jax.nn.gelu(h_mid, approximate=True)
    x = x + jnp.dot(_bf16(h_mid), _bf16(w2[...]), preferred_element_type=jnp.float32) + b2[...]
    return x


# ----------------------------- Pallas kernels -----------------------------

def _encoder_layer_kernel(scales_ref, x_ref, gd_ref, qmask_ref,
                          ln1_g, ln1_b, wq, bq, wk, bk, wv, bv, wo, bo,
                          ln2_g, ln2_b, w1, b1, w2, b2,
                          o_ref, *, num_heads):
    gd = gd_ref[...]                                      # (S, S) graph distances
    qmask = qmask_ref[...]                                # (S, 1) additive pad-query mask

    def bias_fn(h):
        # matches PyTorch ref: per-head scale * graph_distances + query-axis pad mask
        return scales_ref[h] * gd + qmask

    o_ref[...] = _fused_layer_body(
        x_ref[...], bias_fn, num_heads,
        ln1_g, ln1_b, wq, bq, wk, bk, wv, bv, wo, bo,
        ln2_g, ln2_b, w1, b1, w2, b2)


def _decoder_layer_kernel(x_ref,
                          ln1_g, ln1_b, wq, bq, wk, bk, wv, bv, wo, bo,
                          ln2_g, ln2_b, w1, b1, w2, b2,
                          o_ref, *, num_heads):
    S = x_ref.shape[0]
    row = jax.lax.broadcasted_iota(jnp.int32, (S, S), 0)
    col = jax.lax.broadcasted_iota(jnp.int32, (S, S), 1)
    causal = jnp.where(col <= row, 0.0, NEG_INF).astype(jnp.float32)

    def bias_fn(h):
        return causal

    o_ref[...] = _fused_layer_body(
        x_ref[...], bias_fn, num_heads,
        ln1_g, ln1_b, wq, bq, wk, bk, wv, bv, wo, bo,
        ln2_g, ln2_b, w1, b1, w2, b2)


def _enc_final_pool_kernel(x_ref, mask_ref, g_ref, b_ref, fp_ref):
    # fused final LayerNorm + masked mean-pool -> fingerprint
    xn = _layernorm(x_ref[...], g_ref[...], b_ref[...])   # (S, D)
    m = mask_ref[...]                                     # (S, 1), 1.0 for non-pad tokens
    cnt = jnp.maximum(jnp.sum(m, axis=0, keepdims=True), 1.0)     # (1, 1)
    fp_ref[...] = (jnp.sum(xn * m, axis=0, keepdims=True)
                   * pl.reciprocal(cnt, approx=True))


def _decoder_head_xent_kernel(x_ref, tgt_ref, emb_ref, g_ref, b_ref,
                              loss_ref, cnt_ref):
    # fused final LN + tied-embedding LM head + cross_entropy(ignore_index=0);
    # logits stay in VMEM / registers, never materialized in HBM.
    S1, D = x_ref.shape
    Sd = S1 - 1
    x = x_ref[pl.ds(0, Sd), :]                            # drop last position (logits[:, :-1])
    xn = _layernorm(x, g_ref[...], b_ref[...])
    logits = jax.lax.dot_general(_bf16(xn), _bf16(emb_ref[...]),
                                 (((1,), (1,)), ((), ())),
                                 preferred_element_type=jnp.float32)   # (Sd, V)
    tgt = tgt_ref[...]                                    # (Sd, 1) int32
    m = jnp.max(logits, axis=-1, keepdims=True)
    lse = jnp.log(jnp.sum(jnp.exp(logits - m), axis=-1, keepdims=True)) + m
    col = jax.lax.broadcasted_iota(jnp.int32, logits.shape, 1)
    tgt_logit = jnp.sum(jnp.where(col == tgt, logits, 0.0), axis=-1, keepdims=True)
    nll = lse - tgt_logit                                 # (Sd, 1)
    valid = (tgt != 0).astype(jnp.float32)                # ignore_index = 0
    loss_ref[...] = jnp.sum(nll * valid, axis=0, keepdims=True)   # (1, 1)
    cnt_ref[...] = jnp.sum(valid, axis=0, keepdims=True)          # (1, 1)


# ----------------------------- pallas_call wrappers -----------------------------

def _layer_weights(p):
    return [p[n] for n in _LAYER_WEIGHT_NAMES]


def encoder_layer(x, graph_distances, qmask, head_scales, p, num_heads):
    B, S, D = x.shape
    return pl.pallas_call(
        functools.partial(_encoder_layer_kernel, num_heads=num_heads),
        grid=(B,),
        out_shape=jax.ShapeDtypeStruct((B, S, D), jnp.float32),
        in_specs=([pl.BlockSpec(memory_space=SMEM),                       # per-head scales
                   pl.BlockSpec((None, S, D), lambda b: (b, 0, 0)),       # x
                   pl.BlockSpec((None, S, S), lambda b: (b, 0, 0)),       # graph distances
                   pl.BlockSpec((None, S, 1), lambda b: (b, 0, 0))]       # pad-query mask
                  + [pl.BlockSpec(memory_space=VMEM)] * N_LAYER_WEIGHTS),
        out_specs=pl.BlockSpec((None, S, D), lambda b: (b, 0, 0)),
        compiler_params=pltpu.CompilerParams(dimension_semantics=("parallel",)),
    )(head_scales, x, graph_distances, qmask, *_layer_weights(p))


def decoder_layer(x, p, num_heads):
    B, S, D = x.shape
    return pl.pallas_call(
        functools.partial(_decoder_layer_kernel, num_heads=num_heads),
        grid=(B,),
        out_shape=jax.ShapeDtypeStruct((B, S, D), jnp.float32),
        in_specs=([pl.BlockSpec((None, S, D), lambda b: (b, 0, 0))]
                  + [pl.BlockSpec(memory_space=VMEM)] * N_LAYER_WEIGHTS),
        out_specs=pl.BlockSpec((None, S, D), lambda b: (b, 0, 0)),
        compiler_params=pltpu.CompilerParams(dimension_semantics=("parallel",)),
    )(x, *_layer_weights(p))


def encoder_final_pool(h, notpad, g, b):
    B, S, D = h.shape
    return pl.pallas_call(
        _enc_final_pool_kernel,
        grid=(B,),
        out_shape=jax.ShapeDtypeStruct((B, 1, D), jnp.float32),
        in_specs=[pl.BlockSpec((None, S, D), lambda i: (i, 0, 0)),
                  pl.BlockSpec((None, S, 1), lambda i: (i, 0, 0)),
                  pl.BlockSpec(memory_space=VMEM),
                  pl.BlockSpec(memory_space=VMEM)],
        out_specs=pl.BlockSpec((None, 1, D), lambda i: (i, 0, 0)),
        compiler_params=pltpu.CompilerParams(dimension_semantics=("parallel",)),
    )(h, notpad, g, b)


def decoder_head_xent(x, targets, emb, g, b):
    B, S1, D = x.shape
    Sd = targets.shape[1]
    loss_sum, cnt = pl.pallas_call(
        _decoder_head_xent_kernel,
        grid=(B,),
        out_shape=(jax.ShapeDtypeStruct((B, 1, 1), jnp.float32),
                   jax.ShapeDtypeStruct((B, 1, 1), jnp.float32)),
        in_specs=[pl.BlockSpec((None, S1, D), lambda i: (i, 0, 0)),
                  pl.BlockSpec((None, Sd, 1), lambda i: (i, 0, 0)),
                  pl.BlockSpec(memory_space=VMEM),
                  pl.BlockSpec(memory_space=VMEM),
                  pl.BlockSpec(memory_space=VMEM)],
        out_specs=(pl.BlockSpec((None, 1, 1), lambda i: (i, 0, 0)),
                   pl.BlockSpec((None, 1, 1), lambda i: (i, 0, 0))),
        compiler_params=pltpu.CompilerParams(dimension_semantics=("parallel",)),
    )(x, targets.reshape(B, Sd, 1).astype(jnp.int32), emb, g, b)
    return loss_sum, cnt


# ----------------------------- parameters -----------------------------

def init_layer_params(key, hidden, num_heads, ffn_mult=4):
    dh = hidden // num_heads
    ks = jax.random.split(key, 6)
    std = 0.02

    def w(k, shape):
        return std * jax.random.normal(k, shape, jnp.float32)

    return {
        'ln1_g': jnp.ones((1, hidden), jnp.float32),
        'ln1_b': jnp.zeros((1, hidden), jnp.float32),
        # per-head weight layout: heads on a leading axis (no lane-axis head slicing)
        'wq': w(ks[0], (num_heads, hidden, dh)),
        'bq': jnp.zeros((num_heads, 1, dh), jnp.float32),
        'wk': w(ks[1], (num_heads, hidden, dh)),
        'bk': jnp.zeros((num_heads, 1, dh), jnp.float32),
        'wv': w(ks[2], (num_heads, hidden, dh)),
        'bv': jnp.zeros((num_heads, 1, dh), jnp.float32),
        'wo': w(ks[3], (num_heads, dh, hidden)),
        'bo': jnp.zeros((1, hidden), jnp.float32),
        'ln2_g': jnp.ones((1, hidden), jnp.float32),
        'ln2_b': jnp.zeros((1, hidden), jnp.float32),
        'w1': w(ks[4], (hidden, ffn_mult * hidden)),
        'b1': jnp.zeros((1, ffn_mult * hidden), jnp.float32),
        'w2': w(ks[5], (ffn_mult * hidden, hidden)),
        'b2': jnp.zeros((1, hidden), jnp.float32),
    }


def init_params(key, cfg):
    hidden = cfg['hidden_size']
    emb_std = 1.0 / math.sqrt(hidden)
    n_layers = cfg['num_encoder_layers'] + cfg['num_decoder_layers']
    keys = jax.random.split(key, 2 + n_layers)
    return {
        'decoder_embedding': emb_std * jax.random.normal(
            keys[0], (cfg['decoder_vocab_size'], hidden), jnp.float32),
        'encoder_embedding': emb_std * jax.random.normal(
            keys[1], (cfg['encoder_vocab_size'], hidden), jnp.float32),
        'encoder_bias': jnp.logspace(0.0, -3.0, num=cfg['num_encoder_heads'],
                                     base=2.0, dtype=jnp.float32),
        'enc_lnf_g': jnp.ones((1, hidden), jnp.float32),
        'enc_lnf_b': jnp.zeros((1, hidden), jnp.float32),
        'dec_lnf_g': jnp.ones((1, hidden), jnp.float32),
        'dec_lnf_b': jnp.zeros((1, hidden), jnp.float32),
        'encoder_layers': [init_layer_params(keys[2 + i], hidden, cfg['num_encoder_heads'])
                           for i in range(cfg['num_encoder_layers'])],
        'decoder_layers': [init_layer_params(keys[2 + cfg['num_encoder_layers'] + i],
                                             hidden, cfg['num_decoder_heads'])
                           for i in range(cfg['num_decoder_layers'])],
    }


# ----------------------------- forward -----------------------------

def smiles_transformer_forward(params, encoder_tokens, graph_distances,
                               decoder_target_tokens, *, num_enc_heads, num_dec_heads):
    B, Se = encoder_tokens.shape
    _, Sd = decoder_target_tokens.shape

    # ---------------- encode ----------------
    # TODO(synk): data-dependent token-embedding gather kept as XLA glue.
    h = jnp.take(params['encoder_embedding'], encoder_tokens, axis=0)          # (B, Se, D)
    # Additive pad mask along the *query* axis — exactly the PyTorch reference:
    #   (tokens == 0).unsqueeze(-1).expand(-1, -1, S) * -1e9
    qmask = (encoder_tokens == 0).astype(jnp.float32)[:, :, None] * NEG_INF    # (B, Se, 1)
    for p in params['encoder_layers']:
        h = encoder_layer(h, graph_distances, qmask, params['encoder_bias'],
                          p, num_enc_heads)
    notpad = (encoder_tokens != 0).astype(jnp.float32)[:, :, None]             # (B, Se, 1)
    fingerprints = encoder_final_pool(h, notpad,
                                      params['enc_lnf_g'], params['enc_lnf_b'])  # (B, 1, D)

    # ---------------- decode ----------------
    dec_emb = jnp.take(params['decoder_embedding'], decoder_target_tokens, axis=0)
    x = jnp.concatenate([fingerprints, dec_emb], axis=1)                       # (B, Sd+1, D)
    for p in params['decoder_layers']:
        x = decoder_layer(x, p, num_dec_heads)

    # fused final LN + tied LM head + cross-entropy (ignore_index=0, 0/0 guarded)
    loss_sum, cnt = decoder_head_xent(x, decoder_target_tokens,
                                      params['decoder_embedding'],
                                      params['dec_lnf_g'], params['dec_lnf_b'])
    loss = jnp.sum(loss_sum) / jnp.maximum(jnp.sum(cnt), 1.0)
    return {'loss': loss, 'fingerprints': fingerprints[:, 0, :]}


# ----------------------------- main -----------------------------

if __name__ == "__main__":
    cfg = dict(
        decoder_vocab_size=16,
        encoder_vocab_size=16,
        hidden_size=32,
        num_decoder_layers=2,
        num_encoder_layers=2,
        num_decoder_heads=4,
        num_encoder_heads=4,
        dropout=0.0,
    )
    B, Se, Sd = 2, 8, 8

    key = jax.random.PRNGKey(0)
    kp, k1, k2, k3 = jax.random.split(key, 4)
    params = init_params(kp, cfg)

    encoder_tokens = jax.random.randint(k1, (B, Se), 1, cfg['encoder_vocab_size'],
                                        dtype=jnp.int32)
    encoder_tokens = encoder_tokens.at[:, -1].set(0)      # exercise pad masking
    graph_distances = jax.random.uniform(k2, (B, Se, Se), jnp.float32, 0.0, 5.0)
    decoder_target_tokens = jax.random.randint(k3, (B, Sd), 1, cfg['decoder_vocab_size'],
                                               dtype=jnp.int32)
    decoder_target_tokens = decoder_target_tokens.at[:, -1].set(0)  # exercise ignore_index

    fwd = jax.jit(functools.partial(
        smiles_transformer_forward,
        num_enc_heads=cfg['num_encoder_heads'],
        num_dec_heads=cfg['num_decoder_heads']))

    out = fwd(params, encoder_tokens, graph_distances, decoder_target_tokens)
    jax.block_until_ready(out['loss'])
    jax.block_until_ready(out['fingerprints'])
    print("KERNEL_OK")
</pallas_src>

<mosaic_0001>
module attributes {stable_mosaic.version = 11 : i64} {
  func.func @_enc_final_pool_kernel(%arg0: i32, %arg1: memref<1x8x32xf32, #tpu.memory_space<vmem>>, %arg2: memref<1x8x1xf32, #tpu.memory_space<vmem>>, %arg3: memref<1x32xf32, #tpu.memory_space<vmem>>, %arg4: memref<1x32xf32, #tpu.memory_space<vmem>>, %arg5: memref<1x1x32xf32, #tpu.memory_space<vmem>>) attributes {dimension_semantics = [#tpu.dimension_semantics<parallel>], iteration_bounds = array<i64: 2>, scalar_prefetch = 0 : i64, scratch_operands = 0 : i64, tpu.core_type = #tpu.core_type<tc>, window_params = [{transform_indices = @transform_0, window_bounds = array<i64: 1, 8, 32>}, {transform_indices = @transform_1, window_bounds = array<i64: 1, 8, 1>}, {pipeline_mode = #tpu.pipeline_mode<synchronous>, transform_indices = @transform_2, window_bounds = array<i64: 1, 32>}, {pipeline_mode = #tpu.pipeline_mode<synchronous>, transform_indices = @transform_3, window_bounds = array<i64: 1, 32>}, {transform_indices = @transform_4, window_bounds = array<i64: 1, 1, 32>}]} {
    %c0 = arith.constant 0 : index
    %c0_0 = arith.constant 0 : index
    %c0_1 = arith.constant 0 : index
    %0 = vector.load %arg1[%c0, %c0_0, %c0_1] : memref<1x8x32xf32, #tpu.memory_space<vmem>>, vector<1x8x32xf32>
    %1 = vector.shape_cast %0 : vector<1x8x32xf32> to vector<8x32xf32>
    %c0_2 = arith.constant 0 : index
    %c0_3 = arith.constant 0 : index
    %2 = vector.load %arg3[%c0_2, %c0_3] : memref<1x32xf32, #tpu.memory_space<vmem>>, vector<1x32xf32>
    %c0_4 = arith.constant 0 : index
    %c0_5 = arith.constant 0 : index
    %3 = vector.load %arg4[%c0_4, %c0_5] : memref<1x32xf32, #tpu.memory_space<vmem>>, vector<1x32xf32>
    %cst = arith.constant dense<0.000000e+00> : vector<8xf32>
    %4 = vector.multi_reduction <add>, %1, %cst [1] : vector<8x32xf32> to vector<8xf32>
    %5 = vector.shape_cast %4 : vector<8xf32> to vector<8x1xf32>
    %cst_6 = arith.constant 3.200000e+01 : f32
    %6 = vector.broadcast %cst_6 : f32 to vector<8x1xf32>
    %7 = arith.divf %5, %6 : vector<8x1xf32>
    %8 = vector.broadcast %7 : vector<8x1xf32> to vector<8x32xf32>
    %9 = arith.subf %1, %8 : vector<8x32xf32>
    %10 = arith.mulf %9, %9 : vector<8x32xf32>
    %cst_7 = arith.constant dense<0.000000e+00> : vector<8xf32>
    %11 = vector.multi_reduction <add>, %10, %cst_7 [1] : vector<8x32xf32> to vector<8xf32>
    %12 = vector.shape_cast %11 : vector<8xf32> to vector<8x1xf32>
    %cst_8 = arith.constant 3.200000e+01 : f32
    %13 = vector.broadcast %cst_8 : f32 to vector<8x1xf32>
    %14 = arith.divf %12, %13 : vector<8x1xf32>
    %15 = vector.broadcast %7 : vector<8x1xf32> to vector<8x32xf32>
    %16 = arith.subf %1, %15 : vector<8x32xf32>
    %cst_9 = arith.constant 9.99999974E-6 : f32
    %17 = vector.broadcast %cst_9 : f32 to vector<8x1xf32>
    %18 = arith.addf %14, %17 : vector<8x1xf32>
    %19 = math.rsqrt %18 : vector<8x1xf32>
    %20 = vector.broadcast %19 : vector<8x1xf32> to vector<8x32xf32>
    %21 = arith.mulf %16, %20 : vector<8x32xf32>
    %22 = vector.broadcast %2 : vector<1x32xf32> to vector<8x32xf32>
    %23 = arith.mulf %21, %22 : vector<8x32xf32>
    %24 = vector.broadcast %3 : vector<1x32xf32> to vector<8x32xf32>
    %25 = arith.addf %23, %24 : vector<8x32xf32>
    %c0_10 = arith.constant 0 : index
    %c0_11 = arith.constant 0 : index
    %c0_12 = arith.constant 0 : index
    %26 = vector.load %arg2[%c0_10, %c0_11, %c0_12] : memref<1x8x1xf32, #tpu.memory_space<vmem>>, vector<1x8x1xf32>
    %27 = vector.shape_cast %26 : vector<1x8x1xf32> to vector<8x1xf32>
    %cst_13 = arith.constant dense<0.000000e+00> : vector<1xf32>
    %28 = vector.multi_reduction <add>, %27, %cst_13 [0] : vector<8x1xf32> to vector<1xf32>
    %29 = vector.shape_cast %28 : vector<1xf32> to vector<1x1xf32>
    %cst_14 = arith.constant 1.000000e+00 : f32
    %30 = vector.broadcast %cst_14 : f32 to vector<1x1xf32>
    %31 = arith.maximumf %29, %30 : vector<1x1xf32>
    %32 = vector.broadcast %27 : vector<8x1xf32> to vector<8x32xf32>
    %33 = arith.mulf %25, %32 : vector<8x32xf32>
    %cst_15 = arith.constant dense<0.000000e+00> : vector<32xf32>
    %34 = vector.multi_reduction <add>, %33, %cst_15 [0] : vector<8x32xf32> to vector<32xf32>
    %35 = vector.shape_cast %34 : vector<32xf32> to vector<1x32xf32>
    %36 = tpu.reciprocal %31 {approx = true} : vector<1x1xf32> -> vector<1x1xf32>
    %37 = vector.broadcast %36 : vector<1x1xf32> to vector<1x32xf32>
    %38 = arith.mulf %35, %37 : vector<1x32xf32>
    %c0_16 = arith.constant 0 : index
    %c0_17 = arith.constant 0 : index
    %c0_18 = arith.constant 0 : index
    %39 = vector.load %arg5[%c0_16, %c0_17, %c0_18] : memref<1x1x32xf32, #tpu.memory_space<vmem>>, vector<1x1x32xf32>
    %40 = vector.shape_cast %39 : vector<1x1x32xf32> to vector<1x32xf32>
    %41 = vector.shape_cast %38 : vector<1x32xf32> to vector<1x1x32xf32>
    tpu.vector_store %arg5[%c0_16, %c0_17, %c0_18], %41 {strides = array<i32>} : memref<1x1x32xf32, #tpu.memory_space<vmem>>, vector<1x1x32xf32>,
    return
  }
  func.func @transform_0(%arg0: i32) -> (i32, i32, i32) {
    %c0_i32 = arith.constant 0 : i32
    %c0_i32_0 = arith.constant 0 : i32
    %c0_i32_1 = arith.constant 0 : i32
    return %arg0, %c0_i32, %c0_i32_0 : i32, i32, i32
  }
  func.func @transform_1(%arg0: i32) -> (i32, i32, i32) {
    %c0_i32 = arith.constant 0 : i32
    %c0_i32_0 = arith.constant 0 : i32
    %c0_i32_1 = arith.constant 0 : i32
    return %arg0, %c0_i32, %c0_i32_0 : i32, i32, i32
  }
  func.func @transform_2(%arg0: i32) -> (i32, i32) {
    %c0_i32 = arith.constant 0 : i32
    %c0_i32_0 = arith.constant 0 : i32
    %c0_i32_1 = arith.constant 0 : i32
    return %c0_i32, %c0_i32_0 : i32, i32
  }
  func.func @transform_3(%arg0: i32) -> (i32, i32) {
    %c0_i32 = arith.constant 0 : i32
    %c0_i32_0 = arith.constant 0 : i32
    %c0_i32_1 = arith.constant 0 : i32
    return %c0_i32, %c0_i32_0 : i32, i32
  }
  func.func @transform_4(%arg0: i32) -> (i32, i32, i32) {
    %c0_i32 = arith.constant 0 : i32
    %c0_i32_0 = arith.constant 0 : i32
    %c0_i32_1 = arith.constant 0 : i32
    return %arg0, %c0_i32, %c0_i32_0 : i32, i32, i32
  }
}

module attributes {stable_mosaic.version = 11 : i64} {
  func.func @_encoder_layer_kernel(%arg0: i32, %arg1: memref<4xf32, #tpu.memory_space<smem>>, %arg2: memref<1x8x32xf32, #tpu.memory_space<vmem>>, %arg3: memref<1x8x8xf32, #tpu.memory_space<vmem>>, %arg4: memref<1x8x1xf32, #tpu.memory_space<vmem>>, %arg5: memref<1x32xf32, #tpu.memory_space<vmem>>, %arg6: memref<1x32xf32, #tpu.memory_space<vmem>>, %arg7: memref<4x32x8xf32, #tpu.memory_space<vmem>>, %arg8: memref<4x1x8xf32, #tpu.memory_space<vmem>>, %arg9: memref<4x32x8xf32, #tpu.memory_space<vmem>>, %arg10: memref<4x1x8xf32, #tpu.memory_space<vmem>>, %arg11: memref<4x32x8xf32, #tpu.memory_space<vmem>>, %arg12: memref<4x1x8xf32, #tpu.memory_space<vmem>>, %arg13: memref<4x8x32xf32, #tpu.memory_space<vmem>>, %arg14: memref<1x32xf32, #tpu.memory_space<vmem>>, %arg15: memref<1x32xf32, #tpu.memory_space<vmem>>, %arg16: memref<1x32xf32, #tpu.memory_space<vmem>>, %arg17: memref<32x128xf32, #tpu.memory_space<vmem>>, %arg18: memref<1x128xf32, #tpu.memory_space<vmem>>, %arg19: memref<128x32xf32, #tpu.memory_space<vmem>>, %arg20: memref<1x32xf32, #tpu.memory_space<vmem>>, %arg21: memref<1x8x32xf32, #tpu.memory_space<vmem>>) attributes {dimension_semantics = [#tpu.dimension_semantics<parallel>], iteration_bounds = array<i64: 2>, scalar_prefetch = 0 : i64, scratch_operands = 0 : i64, tpu.core_type = #tpu.core_type<tc>, window_params = [{transform_indices = @transform_0, window_bounds = array<i64: 4>}, {transform_indices = @transform_1, window_bounds = array<i64: 1, 8, 32>}, {transform_indices = @transform_2, window_bounds = array<i64: 1, 8, 8>}, {transform_indices = @transform_3, window_bounds = array<i64: 1, 8, 1>}, {pipeline_mode = #tpu.pipeline_mode<synchronous>, transform_indices = @transform_4, window_bounds = array<i64: 1, 32>}, {pipeline_mode = #tpu.pipeline_mode<synchronous>, transform_indices = @transform_5, window_bounds = array<i64: 1, 32>}, {pipeline_mode = #tpu.pipeline_mode<synchronous>, transform_indices = @transform_6, window_bounds = array<i64: 4, 32, 8>}, {pipeline_mode = #tpu.pipeline_mode<synchronous>, transform_indices = @transform_7, window_bounds = array<i64: 4, 1, 8>}, {pipeline_mode = #tpu.pipeline_mode<synchronous>, transform_indices = @transform_8, window_bounds = array<i64: 4, 32, 8>}, {pipeline_mode = #tpu.pipeline_mode<synchronous>, transform_indices = @transform_9, window_bounds = array<i64: 4, 1, 8>}, {pipeline_mode = #tpu.pipeline_mode<synchronous>, transform_indices = @transform_10, window_bounds = array<i64: 4, 32, 8>}, {pipeline_mode = #tpu.pipeline_mode<synchronous>, transform_indices = @transform_11, window_bounds = array<i64: 4, 1, 8>}, {pipeline_mode = #tpu.pipeline_mode<synchronous>, transform_indices = @transform_12, window_bounds = array<i64: 4, 8, 32>}, {pipeline_mode = #tpu.pipeline_mode<synchronous>, transform_indices = @transform_13, window_bounds = array<i64: 1, 32>}, {pipeline_mode = #tpu.pipeline_mode<synchronous>, transform_indices = @transform_14, window_bounds = array<i64: 1, 32>}, {pipeline_mode = #tpu.pipeline_mode<synchronous>, transform_indices = @transform_15, window_bounds = array<i64: 1, 32>}, {pipeline_mode = #tpu.pipeline_mode<synchronous>, transform_indices = @transform_16, window_bounds = array<i64: 32, 128>}, {pipeline_mode = #tpu.pipeline_mode<synchronous>, transform_indices = @transform_17, window_bounds = array<i64: 1, 128>}, {pipeline_mode = #tpu.pipeline_mode<synchronous>, transform_indices = @transform_18, window_bounds = array<i64: 128, 32>}, {pipeline_mode = #tpu.pipeline_mode<synchronous>, transform_indices = @transform_19, window_bounds = array<i64: 1, 32>}, {transform_indices = @transform_20, window_bounds = array<i64: 1, 8, 32>}]} {
    %c0 = arith.constant 0 : index
    %c0_0 = arith.constant 0 : index
    %c0_1 = arith.constant 0 : index
    %0 = vector.load %arg3[%c0, %c0_0, %c0_1] : memref<1x8x8xf32, #tpu.memory_space<vmem>>, vector<1x8x8xf32>
    %1 = vector.shape_cast %0 : vector<1x8x8xf32> to vector<8x8xf32>
    %c0_2 = arith.constant 0 : index
    %c0_3 = arith.constant 0 : index
    %c0_4 = arith.constant 0 : index
    %2 = vector.load %arg4[%c0_2, %c0_3, %c0_4] : memref<1x8x1xf32, #tpu.memory_space<vmem>>, vector<1x8x1xf32>
    %3 = vector.shape_cast %2 : vector<1x8x1xf32> to vector<8x1xf32>
    %c0_5 = arith.constant 0 : index
    %c0_6 = arith.constant 0 : index
    %c0_7 = arith.constant 0 : index
    %4 = vector.load %arg2[%c0_5, %c0_6, %c0_7] : memref<1x8x32xf32, #tpu.memory_space<vmem>>, vector<1x8x32xf32>
    %5 = vector.shape_cast %4 : vector<1x8x32xf32> to vector<8x32xf32>
    %c0_8 = arith.constant 0 : index
    %c0_9 = arith.constant 0 : index
    %6 = vector.load %arg5[%c0_8, %c0_9] : memref<1x32xf32, #tpu.memory_space<vmem>>, vector<1x32xf32>
    %c0_10 = arith.constant 0 : index
    %c0_11 = arith.constant 0 : index
    %7 = vector.load %arg6[%c0_10, %c0_11] : memref<1x32xf32, #tpu.memory_space<vmem>>, vector<1x32xf32>
    %cst = arith.constant dense<0.000000e+00> : vector<8xf32>
    %8 = vector.multi_reduction <add>, %5, %cst [1] : vector<8x32xf32> to vector<8xf32>
    %9 = vector.shape_cast %8 : vector<8xf32> to vector<8x1xf32>
    %cst_12 = arith.constant 3.200000e+01 : f32
    %10 = vector.broadcast %cst_12 : f32 to vector<8x1xf32>
    %11 = arith.divf %9, %10 : vector<8x1xf32>
    %12 = vector.broadcast %11 : vector<8x1xf32> to vector<8x32xf32>
    %13 = arith.subf %5, %12 : vector<8x32xf32>
    %14 = arith.mulf %13, %13 : vector<8x32xf32>
    %cst_13 = arith.constant dense<0.000000e+00> : vector<8xf32>
    %15 = vector.multi_reduction <add>, %14, %cst_13 [1] : vector<8x32xf32> to vector<8xf32>
    %16 = vector.shape_cast %15 : vector<8xf32> to vector<8x1xf32>
    %cst_14 = arith.constant 3.200000e+01 : f32
    %17 = vector.broadcast %cst_14 : f32 to vector<8x1xf32>
    %18 = arith.divf %16, %17 : vector<8x1xf32>
    %19 = vector.broadcast %11 : vector<8x1xf32> to vector<8x32xf32>
    %20 = arith.subf %5, %19 : vector<8x32xf32>
    %cst_15 = arith.constant 9.99999974E-6 : f32
    %21 = vector.broadcast %cst_15 : f32 to vector<8x1xf32>
    %22 = arith.addf %18, %21 : vector<8x1xf32>
    %23 = math.rsqrt %22 : vector<8x1xf32>
    %24 = vector.broadcast %23 : vector<8x1xf32> to vector<8x32xf32>
    %25 = arith.mulf %20, %24 : vector<8x32xf32>
    %26 = vector.broadcast %6 : vector<1x32xf32> to vector<8x32xf32>
    %27 = arith.mulf %25, %26 : vector<8x32xf32>
    %28 = vector.broadcast %7 : vector<1x32xf32> to vector<8x32xf32>
    %29 = arith.addf %27, %28 : vector<8x32xf32>
    %30 = arith.truncf %29 : vector<8x32xf32> to vector<8x32xbf16>
    %c0_16 = arith.constant 0 : index
    %c0_17 = arith.constant 0 : index
    %31 = vector.load %arg14[%c0_16, %c0_17] : memref<1x32xf32, #tpu.memory_space<vmem>>, vector<1x32xf32>
    %c0_18 = arith.constant 0 : index
    %c0_19 = arith.constant 0 : index
    %c0_20 = arith.constant 0 : index
    %32 = vector.load %arg7[%c0_18, %c0_19, %c0_20] : memref<4x32x8xf32, #tpu.memory_space<vmem>>, vector<1x32x8xf32>
    %33 = vector.shape_cast %32 : vector<1x32x8xf32> to vector<32x8xf32>
    %34 = arith.truncf %33 : vector<32x8xf32> to vector<32x8xbf16>
    %cst_21 = arith.constant dense<0.000000e+00> : vector<8x8xf32>
    %35 = tpu.matmul %30, %34, %cst_21 {dimension_numbers = #tpu.dot_dimension_numbers<[1], [0], [0], [1], [0, 0, 1, 1], [], []>} : vector<8x32xbf16>, vector<32x8xbf16>, vector<8x8xf32> -> vector<8x8xf32>
    %c0_22 = arith.constant 0 : index
    %c0_23 = arith.constant 0 : index
    %c0_24 = arith.constant 0 : index
    %36 = vector.load %arg8[%c0_22, %c0_23, %c0_24] : memref<4x1x8xf32, #tpu.memory_space<vmem>>, vector<1x1x8xf32>
    %37 = vector.shape_cast %36 : vector<1x1x8xf32> to vector<1x8xf32>
    %38 = vector.broadcast %37 : vector<1x8xf32> to vector<8x8xf32>
    %39 = arith.addf %35, %38 : vector<8x8xf32>
    %cst_25 = arith.constant 0.353553385 : f32
    %40 = vector.broadcast %cst_25 : f32 to vector<8x8xf32>
    %41 = arith.mulf %39, %40 : vector<8x8xf32>
    %c0_26 = arith.constant 0 : index
    %c0_27 = arith.constant 0 : index
    %c0_28 = arith.constant 0 : index
    %42 = vector.load %arg9[%c0_26, %c0_27, %c0_28] : memref<4x32x8xf32, #tpu.memory_space<vmem>>, vector<1x32x8xf32>
    %43 = vector.shape_cast %42 : vector<1x32x8xf32> to vector<32x8xf32>
    %44 = arith.truncf %43 : vector<32x8xf32> to vector<32x8xbf16>
    %cst_29 = arith.constant dense<0.000000e+00> : vector<8x8xf32>
    %45 = tpu.matmul %30, %44, %cst_29 {dimension_numbers = #tpu.dot_dimension_numbers<[1], [0], [0], [1], [0, 0, 1, 1], [], []>} : vector<8x32xbf16>, vector<32x8xbf16>, vector<8x8xf32> -> vector<8x8xf32>
    %c0_30 = arith.constant 0 : index
    %c0_31 = arith.constant 0 : index
    %c0_32 = arith.constant 0 : index
    %46 = vector.load %arg10[%c0_30, %c0_31, %c0_32] : memref<4x1x8xf32, #tpu.memory_space<vmem>>, vector<1x1x8xf32>
    %47 = vector.shape_cast %46 : vector<1x1x8xf32> to vector<1x8xf32>
    %48 = vector.broadcast %47 : vector<1x8xf32> to vector<8x8xf32>
    %49 = arith.addf %45, %48 : vector<8x8xf32>
    %c0_33 = arith.constant 0 : index
    %c0_34 = arith.constant 0 : index
    %c0_35 = arith.constant 0 : index
    %50 = vector.load %arg11[%c0_33, %c0_34, %c0_35] : memref<4x32x8xf32, #tpu.memory_space<vmem>>, vector<1x32x8xf32>
    %51 = vector.shape_cast %50 : vector<1x32x8xf32> to vector<32x8xf32>
    %52 = arith.truncf %51 : vector<32x8xf32> to vector<32x8xbf16>
    %cst_36 = arith.constant dense<0.000000e+00> : vector<8x8xf32>
    %53 = tpu.matmul %30, %52, %cst_36 {dimension_numbers = #tpu.dot_dimension_numbers<[1], [0], [0], [1], [0, 0, 1, 1], [], []>} : vector<8x32xbf16>, vector<32x8xbf16>, vector<8x8xf32> -> vector<8x8xf32>
    %c0_37 = arith.constant 0 : index
    %c0_38 = arith.constant 0 : index
    %c0_39 = arith.constant 0 : index
    %54 = vector.load %arg12[%c0_37, %c0_38, %c0_39] : memref<4x1x8xf32, #tpu.memory_space<vmem>>, vector<1x1x8xf32>
    %55 = vector.shape_cast %54 : vector<1x1x8xf32> to vector<1x8xf32>
    %56 = vector.broadcast %55 : vector<1x8xf32> to vector<8x8xf32>
    %57 = arith.addf %53, %56 : vector<8x8xf32>
    %58 = arith.truncf %41 : vector<8x8xf32> to vector<8x8xbf16>
    %59 = arith.truncf %49 : vector<8x8xf32> to vector<8x8xbf16>
    %cst_40 = arith.constant dense<0.000000e+00> : vector<8x8xf32>
    %60 = tpu.matmul %58, %59, %cst_40 {dimension_numbers = #tpu.dot_dimension_numbers<[1], [1], [0], [0], [0, 0, 1, 0], [], []>} : vector<8x8xbf16>, vector<8x8xbf16>, vector<8x8xf32> -> vector<8x8xf32>
    %c0_41 = arith.constant 0 : index
    %61 = memref.load %arg1[%c0_41] : memref<4xf32, #tpu.memory_space<smem>>
    %62 = vector.broadcast %61 : f32 to vector<8x8xf32>
    %63 = arith.mulf %62, %1 : vector<8x8xf32>
    %64 = vector.broadcast %3 : vector<8x1xf32> to vector<8x8xf32>
    %65 = arith.addf %63, %64 : vector<8x8xf32>
    %66 = arith.addf %60, %65 : vector<8x8xf32>
    %cst_42 = arith.constant dense<0xFF800000> : vector<8xf32>
    %67 = vector.multi_reduction <maximumf>, %66, %cst_42 [1] : vector<8x8xf32> to vector<8xf32>
    %68 = vector.shape_cast %67 : vector<8xf32> to vector<8x1xf32>
    %69 = vector.broadcast %68 : vector<8x1xf32> to vector<8x8xf32>
    %70 = arith.subf %66, %69 : vector<8x8xf32>
    %71 = math.exp %70 : vector<8x8xf32>
    %cst_43 = arith.constant dense<0.000000e+00> : vector<8xf32>
    %72 = vector.multi_reduction <add>, %71, %cst_43 [1] : vector<8x8xf32> to vector<8xf32>
    %73 = vector.shape_cast %72 : vector<8xf32> to vector<8x1xf32>
    %74 = tpu.reciprocal %73 {approx = true} : vector<8x1xf32> -> vector<8x1xf32>
    %75 = vector.broadcast %74 : vector<8x1xf32> to vector<8x8xf32>
    %76 = arith.mulf %71, %75 : vector<8x8xf32>
    %77 = arith.truncf %76 : vector<8x8xf32> to vector<8x8xbf16>
    %78 = arith.truncf %57 : vector<8x8xf32> to vector<8x8xbf16>
    %cst_44 = arith.constant dense<0.000000e+00> : vector<8x8xf32>
    %79 = tpu.matmul %77, %78, %cst_44 {dimension_numbers = #tpu.dot_dimension_numbers<[1], [0], [0], [1], [0, 0, 1, 1], [], []>} : vector<8x8xbf16>, vector<8x8xbf16>, vector<8x8xf32> -> vector<8x8xf32>
    %80 = arith.truncf %79 : vector<8x8xf32> to vector<8x8xbf16>
    %c0_45 = arith.constant 0 : index
    %c0_46 = arith.constant 0 : index
    %c0_47 = arith.constant 0 : index
    %81 = vector.load %arg13[%c0_45, %c0_46, %c0_47] : memref<4x8x32xf32, #tpu.memory_space<vmem>>, vector<1x8x32xf32>
    %82 = vector.shape_cast %81 : vector<1x8x32xf32> to vector<8x32xf32>
    %83 = arith.truncf %82 : vector<8x32xf32> to vector<8x32xbf16>
    %cst_48 = arith.constant dense<0.000000e+00> : vector<8x32xf32>
    %84 = tpu.matmul %80, %83, %cst_48 {dimension_numbers = #tpu.dot_dimension_numbers<[1], [0], [0], [1], [0, 0, 1, 1], [], []>} : vector<8x8xbf16>, vector<8x32xbf16>, vector<8x32xf32> -> vector<8x32xf32>
    %85 = vector.broadcast %31 : vector<1x32xf32> to vector<8x32xf32>
    %86 = arith.addf %85, %84 : vector<8x32xf32>
    %c1 = arith.constant 1 : index
    %c0_49 = arith.constant 0 : index
    %c0_50 = arith.constant 0 : index
    %87 = vector.load %arg7[%c1, %c0_49, %c0_50] : memref<4x32x8xf32, #tpu.memory_space<vmem>>, vector<1x32x8xf32>
    %88 = vector.shape_cast %87 : vector<1x32x8xf32> to vector<32x8xf32>
    %89 = arith.truncf %88 : vector<32x8xf32> to vector<32x8xbf16>
    %cst_51 = arith.constant dense<0.000000e+00> : vector<8x8xf32>
    %90 = tpu.matmul %30, %89, %cst_51 {dimension_numbers = #tpu.dot_dimension_numbers<[1], [0], [0], [1], [0, 0, 1, 1], [], []>} : vector<8x32xbf16>, vector<32x8xbf16>, vector<8x8xf32> -> vector<8x8xf32>
    %c1_52 = arith.constant 1 : index
    %c0_53 = arith.constant 0 : index
    %c0_54 = arith.constant 0 : index
    %91 = vector.load %arg8[%c1_52, %c0_53, %c0_54] : memref<4x1x8xf32, #tpu.memory_space<vmem>>, vector<1x1x8xf32>
    %92 = vector.shape_cast %91 : vector<1x1x8xf32> to vector<1x8xf32>
    %93 = vector.broadcast %92 : vector<1x8xf32> to vector<8x8xf32>
    %94 = arith.addf %90, %93 : vector<8x8xf32>
    %cst_55 = arith.constant 0.353553385 : f32
    %95 = vector.broadcast %cst_55 : f32 to vector<8x8xf32>
    %96 = arith.mulf %94, %95 : vector<8x8xf32>
    %c1_56 = arith.constant 1 : index
    %c0_57 = arith.constant 0 : index
    %c0_58 = arith.constant 0 : index
    %97 = vector.load %arg9[%c1_56, %c0_57, %c0_58] : memref<4x32x8xf32, #tpu.memory_space<vmem>>, vector<1x32x8xf32>
    %98 = vector.shape_cast %97 : vector<1x32x8xf32> to vector<32x8xf32>
    %99 = arith.truncf %98 : vector<32x8xf32> to vector<32x8xbf16>
    %cst_59 = arith.constant dense<0.000000e+00> : vector<8x8xf32>
    %100 = tpu.matmul %30, %99, %cst_59 {dimension_numbers = #tpu.dot_dimension_numbers<[1], [0], [0], [1], [0, 0, 1, 1], [], []>} : vector<8x32xbf16>, vector<32x8xbf16>, vector<8x8xf32> -> vector<8x8xf32>
    %c1_60 = arith.constant 1 : index
    %c0_61 = arith.constant 0 : index
    %c0_62 = arith.constant 0 : index
    %101 = vector.load %arg10[%c1_60, %c0_61, %c0_62] : memref<4x1x8xf32, #tpu.memory_space<vmem>>, vector<1x1x8xf32>
    %102 = vector.shape_cast %101 : vector<1x1x8xf32> to vector<1x8xf32>
    %103 = vector.broadcast %102 : vector<1x8xf32> to vector<8x8xf32>
    %104 = arith.addf %100, %103 : vector<8x8xf32>
    %c1_63 = arith.constant 1 : index
    %c0_64 = arith.constant 0 : index
    %c0_65 = arith.constant 0 : index
    %105 = vector.load %arg11[%c1_63, %c0_64, %c0_65] : memref<4x32x8xf32, #tpu.memory_space<vmem>>, vector<1x32x8xf32>
    %106 = vector.shape_cast %105 : vector<1x32x8xf32> to vector<32x8xf32>
    %107 = arith.truncf %106 : vector<32x8xf32> to vector<32x8xbf16>
    %cst_66 = arith.constant dense<0.000000e+00> : vector<8x8xf32>
    %108 = tpu.matmul %30, %107, %cst_66 {dimension_numbers = #tpu.dot_dimension_numbers<[1], [0], [0], [1], [0, 0, 1, 1], [], []>} : vector<8x32xbf16>, vector<32x8xbf16>, vector<8x8xf32> -> vector<8x8xf32>
    %c1_67 = arith.constant 1 : index
    %c0_68 = arith.constant 0 : index
    %c0_69 = arith.constant 0 : index
    %109 = vector.load %arg12[%c1_67, %c0_68, %c0_69] : memref<4x1x8xf32, #tpu.memory_space<vmem>>, vector<1x1x8xf32>
    %110 = vector.shape_cast %109 : vector<1x1x8xf32> to vector<1x8xf32>
    %111 = vector.broadcast %110 : vector<1x8xf32> to vector<8x8xf32>
    %112 = arith.addf %108, %111 : vector<8x8xf32>
    %113 = arith.truncf %96 : vector<8x8xf32> to vector<8x8xbf16>
    %114 = arith.truncf %104 : vector<8x8xf32> to vector<8x8xbf16>
    %cst_70 = arith.constant dense<0.000000e+00> : vector<8x8xf32>
    %115 = tpu.matmul %113, %114, %cst_70 {dimension_numbers = #tpu.dot_dimension_numbers<[1], [1], [0], [0], [0, 0, 1, 0], [], []>} : vector<8x8xbf16>, vector<8x8xbf16>, vector<8x8xf32> -> vector<8x8xf32>
    %c1_71 = arith.constant 1 : index
    %116 = memref.load %arg1[%c1_71] : memref<4xf32, #tpu.memory_space<smem>>
    %117 = vector.broadcast %116 : f32 to vector<8x8xf32>
    %118 = arith.mulf %117, %1 : vector<8x8xf32>
    %119 = vector.broadcast %3 : vector<8x1xf32> to vector<8x8xf32>
    %120 = arith.addf %118, %119 : vector<8x8xf32>
    %121 = arith.addf %115, %120 : vector<8x8xf32>
    %cst_72 = arith.constant dense<0xFF800000> : vector<8xf32>
    %122 = vector.multi_reduction <maximumf>, %121, %cst_72 [1] : vector<8x8xf32> to vector<8xf32>
    %123 = vector.shape_cast %122 : vector<8xf32> to vector<8x1xf32>
    %124 = vector.broadcast %123 : vector<8x1xf32> to vector<8x8xf32>
    %125 = arith.subf %121, %124 : vector<8x8xf32>
    %126 = math.exp %125 : vector<8x8xf32>
    %cst_73 = arith.constant dense<0.000000e+00> : vector<8xf32>
    %127 = vector.multi_reduction <add>, %126, %cst_73 [1] : vector<8x8xf32> to vector<8xf32>
    %128 = vector.shape_cast %127 : vector<8xf32> to vector<8x1xf32>
    %129 = tpu.reciprocal %128 {approx = true} : vector<8x1xf32> -> vector<8x1xf32>
    %130 = vector.broadcast %129 : vector<8x1xf32> to vector<8x8xf32>
    %131 = arith.mulf %126, %130 : vector<8x8xf32>
    %132 = arith.truncf %131 : vector<8x8xf32> to vector<8x8xbf16>
    %133 = arith.truncf %112 : vector<8x8xf32> to vector<8x8xbf16>
    %cst_74 = arith.constant dense<0.000000e+00> : vector<8x8xf32>
    %134 = tpu.matmul %132, %133, %cst_74 {dimension_numbers = #tpu.dot_dimension_numbers<[1], [0], [0], [1], [0, 0, 1, 1], [], []>} : vector<8x8xbf16>, vector<8x8xbf16>, vector<8x8xf32> -> vector<8x8xf32>
    %135 = arith.truncf %134 : vector<8x8xf32> to vector<8x8xbf16>
    %c1_75 = arith.constant 1 : index
    %c0_76 = arith.constant 0 : index
    %c0_77 = arith.constant 0 : index
    %136 = vector.load %arg13[%c1_75, %c0_76, %c0_77] : memref<4x8x32xf32, #tpu.memory_space<vmem>>, vector<1x8x32xf32>
    %137 = vector.shape_cast %136 : vector<1x8x32xf32> to vector<8x32xf32>
    %138 = arith.truncf %137 : vector<8x32xf32> to vector<8x32xbf16>
    %cst_78 = arith.constant dense<0.000000e+00> : vector<8x32xf32>
    %139 = tpu.matmul %135, %138, %cst_78 {dimension_numbers = #tpu.dot_dimension_numbers<[1], [0], [0], [1], [0, 0, 1, 1], [], []>} : vector<8x8xbf16>, vector<8x32xbf16>, vector<8x32xf32> -> vector<8x32xf32>
    %140 = arith.addf %86, %139 : vector<8x32xf32>
    %c2 = arith.constant 2 : index
    %c0_79 = arith.constant 0 : index
    %c0_80 = arith.constant 0 : index
    %141 = vector.load %arg7[%c2, %c0_79, %c0_80] : memref<4x32x8xf32, #tpu.memory_space<vmem>>, vector<1x32x8xf32>
    %142 = vector.shape_cast %141 : vector<1x32x8xf32> to vector<32x8xf32>
    %143 = arith.truncf %142 : vector<32x8xf32> to vector<32x8xbf16>
    %cst_81 = arith.constant dense<0.000000e+00> : vector<8x8xf32>
    %144 = tpu.matmul %30, %143, %cst_81 {dimension_numbers = #tpu.dot_dimension_numbers<[1], [0], [0], [1], [0, 0, 1, 1], [], []>} : vector<8x32xbf16>, vector<32x8xbf16>, vector<8x8xf32> -> vector<8x8xf32>
    %c2_82 = arith.constant 2 : index
    %c0_83 = arith.constant 0 : index
    %c0_84 = arith.constant 0 : index
    %145 = vector.load %arg8[%c2_82, %c0_83, %c0_84] : memref<4x1x8xf32, #tpu.memory_space<vmem>>, vector<1x1x8xf32>
    %146 = vector.shape_cast %145 : vector<1x1x8xf32> to vector<1x8xf32>
    %147 = vector.broadcast %146 : vector<1x8xf32> to vector<8x8xf32>
    %148 = arith.addf %144, %147 : vector<8x8xf32>
    %cst_85 = arith.constant 0.353553385 : f32
    %149 = vector.broadcast %cst_85 : f32 to vector<8x8xf32>
    %150 = arith.mulf %148, %149 : vector<8x8xf32>
    %c2_86 = arith.constant 2 : index
    %c0_87 = arith.constant 0 : index
    %c0_88 = arith.constant 0 : index
    %151 = vector.load %arg9[%c2_86, %c0_87, %c0_88] : memref<4x32x8xf32, #tpu.memory_space<vmem>>, vector<1x32x8xf32>
    %152 = vector.shape_cast %151 : vector<1x32x8xf32> to vector<32x8xf32>
    %153 = arith.truncf %152 : vector<32x8xf32> to vector<32x8xbf16>
    %cst_89 = arith.constant dense<0.000000e+00> : vector<8x8xf32>
    %154 = tpu.matmul %30, %153, %cst_89 {dimension_numbers = #tpu.dot_dimension_numbers<[1], [0], [0], [1], [0, 0, 1, 1], [], []>} : vector<8x32xbf16>, vector<32x8xbf16>, vector<8x8xf32> -> vector<8x8xf32>
    %c2_90 = arith.constant 2 : index
    %c0_91 = arith.constant 0 : index
    %c0_92 = arith.constant 0 : index
    %155 = vector.load %arg10[%c2_90, %c0_91, %c0_92] : memref<4x1x8xf32, #tpu.memory_space<vmem>>, vector<1x1x8xf32>
    %156 = vector.shape_cast %155 : vector<1x1x8xf32> to vector<1x8xf32>
    %157 = vector.broadcast %156 : vector<1x8xf32> to vector<8x8xf32>
    %158 = arith.addf %154, %157 : vector<8x8xf32>
    %c2_93 = arith.constant 2 : index
    %c0_94 = arith.constant 0 : index
    %c0_95 = arith.constant 0 : index
    %159 = vector.load %arg11[%c2_93, %c0_94, %c0_95] : memref<4x32x8xf32, #tpu.memory_space<vmem>>, vector<1x32x8xf32>
    %160 = vector.shape_cast %159 : vector<1x32x8xf32> to vector<32x8xf32>
    %161 = arith.truncf %160 : vector<32x8xf32> to vector<32x8xbf16>
    %cst_96 = arith.constant dense<0.000000e+00> : vector<8x8xf32>
    %162 = tpu.matmul %30, %161, %cst_96 {dimension_numbers = #tpu.dot_dimension_numbers<[1], [0], [0], [1], [0, 0, 1, 1], [], []>} : vector<8x32xbf16>, vector<32x8xbf16>, vector<8x8xf32> -> vector<8x8xf32>
    %c2_97 = arith.constant 2 : index
    %c0_98 = arith.constant 0 : index
    %c0_99 = arith.constant 0 : index
    %163 = vector.load %arg12[%c2_97, %c0_98, %c0_99] : memref<4x1x8xf32, #tpu.memory_space<vmem>>, vector<1x1x8xf32>
    %164 = vector.shape_cast %163 : vector<1x1x8xf32> to vector<1x8xf32>
    %165 = vector.broadcast %164 : vector<1x8xf32> to vector<8x8xf32>
    %166 = arith.addf %162, %165 : vector<8x8xf32>
    %167 = arith.truncf %150 : vector<8x8xf32> to vector<8x8xbf16>
    %168 = arith.truncf %158 : vector<8x8xf32> to vector<8x8xbf16>
    %cst_100 = arith.constant dense<0.000000e+00> : vector<8x8xf32>
    %169 = tpu.matmul %167, %168, %cst_100 {dimension_numbers = #tpu.dot_dimension_numbers<[1], [1], [0], [0], [0, 0, 1, 0], [], []>} : vector<8x8xbf16>, vector<8x8xbf16>, vector<8x8xf32> -> vector<8x8xf32>
    %c2_101 = arith.constant 2 : index
    %170 = memref.load %arg1[%c2_101] : memref<4xf32, #tpu.memory_space<smem>>
    %171 = vector.broadcast %170 : f32 to vector<8x8xf32>
    %172 = arith.mulf %171, %1 : vector<8x8xf32>
    %173 = vector.broadcast %3 : vector<8x1xf32> to vector<8x8xf32>
    %174 = arith.addf %172, %173 : vector<8x8xf32>
    %175 = arith.addf %169, %174 : vector<8x8xf32>
    %cst_102 = arith.constant dense<0xFF800000> : vector<8xf32>
    %176 = vector.multi_reduction <maximumf>, %175, %cst_102 [1] : vector<8x8xf32> to vector<8xf32>
    %177 = vector.shape_cast %176 : vector<8xf32> to vector<8x1xf32>
    %178 = vector.broadcast %177 : vector<8x1xf32> to vector<8x8xf32>
    %179 = arith.subf %175, %178 : vector<8x8xf32>
    %180 = math.exp %179 : vector<8x8xf32>
    %cst_103 = arith.constant dense<0.000000e+00> : vector<8xf32>
    %181 = vector.multi_reduction <add>, %180, %cst_103 [1] : vector<8x8xf32> to vector<8xf32>
    %182 = vector.shape_cast %181 : vector<8xf32> to vector<8x1xf32>
    %183 = tpu.reciprocal %182 {approx = true} : vector<8x1xf32> -> vector<8x1xf32>
    %184 = vector.broadcast %183 : vector<8x1xf32> to vector<8x8xf32>
    %185 = arith.mulf %180, %184 : vector<8x8xf32>
    %186 = arith.truncf %185 : vector<8x8xf32> to vector<8x8xbf16>
    %187 = arith.truncf %166 : vector<8x8xf32> to vector<8x8xbf16>
    %cst_104 = arith.constant dense<0.000000e+00> : vector<8x8xf32>
    %188 = tpu.matmul %186, %187, %cst_104 {dimension_numbers = #tpu.dot_dimension_numbers<[1], [0], [0], [1], [0, 0, 1, 1], [], []>} : vector<8x8xbf16>, vector<8x8xbf16>, vector<8x8xf32> -> vector<8x8xf32>
    %189 = arith.truncf %188 : vector<8x8xf32> to vector<8x8xbf16>
    %c2_105 = arith.constant 2 : index
    %c0_106 = arith.constant 0 : index
    %c0_107 = arith.constant 0 : index
    %190 = vector.load %arg13[%c2_105, %c0_106, %c0_107] : memref<4x8x32xf32, #tpu.memory_space<vmem>>, vector<1x8x32xf32>
    %191 = vector.shape_cast %190 : vector<1x8x32xf32> to vector<8x32xf32>
    %192 = arith.truncf %191 : vector<8x32xf32> to vector<8x32xbf16>
    %cst_108 = arith.constant dense<0.000000e+00> : vector<8x32xf32>
    %193 = tpu.matmul %189, %192, %cst_108 {dimension_numbers = #tpu.dot_dimension_numbers<[1], [0], [0], [1], [0, 0, 1, 1], [], []>} : vector<8x8xbf16>, vector<8x32xbf16>, vector<8x32xf32> -> vector<8x32xf32>
    %194 = arith.addf %140, %193 : vector<8x32xf32>
    %c3 = arith.constant 3 : index
    %c0_109 = arith.constant 0 : index
    %c0_110 = arith.constant 0 : index
    %195 = vector.load %arg7[%c3, %c0_109, %c0_110] : memref<4x32x8xf32, #tpu.memory_space<vmem>>, vector<1x32x8xf32>
    %196 = vector.shape_cast %195 : vector<1x32x8xf32> to vector<32x8xf32>
    %197 = arith.truncf %196 : vector<32x8xf32> to vector<32x8xbf16>
    %cst_111 = arith.constant dense<0.000000e+00> : vector<8x8xf32>
    %198 = tpu.matmul %30, %197, %cst_111 {dimension_numbers = #tpu.dot_dimension_numbers<[1], [0], [0], [1], [0, 0, 1, 1], [], []>} : vector<8x32xbf16>, vector<32x8xbf16>, vector<8x8xf32> -> vector<8x8xf32>
    %c3_112 = arith.constant 3 : index
    %c0_113 = arith.constant 0 : index
    %c0_114 = arith.constant 0 : index
    %199 = vector.load %arg8[%c3_112, %c0_113, %c0_114] : memref<4x1x8xf32, #tpu.memory_space<vmem>>, vector<1x1x8xf32>
    %200 = vector.shape_cast %199 : vector<1x1x8xf32> to vector<1x8xf32>
    %201 = vector.broadcast %200 : vector<1x8xf32> to vector<8x8xf32>
    %202 = arith.addf %198, %201 : vector<8x8xf32>
    %cst_115 = arith.constant 0.353553385 : f32
    %203 = vector.broadcast %cst_115 : f32 to vector<8x8xf32>
    %204 = arith.mulf %202, %203 : vector<8x8xf32>
    %c3_116 = arith.constant 3 : index
    %c0_117 = arith.constant 0 : index
    %c0_118 = arith.constant 0 : index
    %205 = vector.load %arg9[%c3_116, %c0_117, %c0_118] : memref<4x32x8xf32, #tpu.memory_space<vmem>>, vector<1x32x8xf32>
    %206 = vector.shape_cast %205 : vector<1x32x8xf32> to vector<32x8xf32>
    %207 = arith.truncf %206 : vector<32x8xf32> to vector<32x8xbf16>
    %cst_119 = arith.constant dense<0.000000e+00> : vector<8x8xf32>
    %208 = tpu.matmul %30, %207, %cst_119 {dimension_numbers = #tpu.dot_dimension_numbers<[1], [0], [0], [1], [0, 0, 1, 1], [], []>} : vector<8x32xbf16>, vector<32x8xbf16>, vector<8x8xf32> -> vector<8x8xf32>
    %c3_120 = arith.constant 3 : index
    %c0_121 = arith.constant 0 : index
    %c0_122 = arith.constant 0 : index
    %209 = vector.load %arg10[%c3_120, %c0_121, %c0_122] : memref<4x1x8xf32, #tpu.memory_space<vmem>>, vector<1x1x8xf32>
    %210 = vector.shape_cast %209 : vector<1x1x8xf32> to vector<1x8xf32>
    %211 = vector.broadcast %210 : vector<1x8xf32> to vector<8x8xf32>
    %212 = arith.addf %208, %211 : vector<8x8xf32>
    %c3_123 = arith.constant 3 : index
    %c0_124 = arith.constant 0 : index
    %c0_125 = arith.constant 0 : index
    %213 = vector.load %arg11[%c3_123, %c0_124, %c0_125] : memref<4x32x8xf32, #tpu.memory_space<vmem>>, vector<1x32x8xf32>
    %214 = vector.shape_cast %213 : vector<1x32x8xf32> to vector<32x8xf32>
    %215 = arith.truncf %214 : vector<32x8xf32> to vector<32x8xbf16>
    %cst_126 = arith.constant dense<0.000000e+00> : vector<8x8xf32>
    %216 = tpu.matmul %30, %215, %cst_126 {dimension_numbers = #tpu.dot_dimension_numbers<[1], [0], [0], [1], [0, 0, 1, 1], [], []>} : vector<8x32xbf16>, vector<32x8xbf16>, vector<8x8xf32> -> vector<8x8xf32>
    %c3_127 = arith.constant 3 : index
    %c0_128 = arith.constant 0 : index
    %c0_129 = arith.constant 0 : index
    %217 = vector.load %arg12[%c3_127, %c0_128, %c0_129] : memref<4x1x8xf32, #tpu.memory_space<vmem>>, vector<1x1x8xf32>
    %218 = vector.shape_cast %217 : vector<1x1x8xf32> to vector<1x8xf32>
    %219 = vector.broadcast %218 : vector<1x8xf32> to vector<8x8xf32>
    %220 = arith.addf %216, %219 : vector<8x8xf32>
    %221 = arith.truncf %204 : vector<8x8xf32> to vector<8x8xbf16>
    %222 = arith.truncf %212 : vector<8x8xf32> to vector<8x8xbf16>
    %cst_130 = arith.constant dense<0.000000e+00> : vector<8x8xf32>
    %223 = tpu.matmul %221, %222, %cst_130 {dimension_numbers = #tpu.dot_dimension_numbers<[1], [1], [0], [0], [0, 0, 1, 0], [], []>} : vector<8x8xbf16>, vector<8x8xbf16>, vector<8x8xf32> -> vector<8x8xf32>
    %c3_131 = arith.constant 3 : index
    %224 = memref.load %arg1[%c3_131] : memref<4xf32, #tpu.memory_space<smem>>
    %225 = vector.broadcast %224 : f32 to vector<8x8xf32>
    %226 = arith.mulf %225, %1 : vector<8x8xf32>
    %227 = vector.broadcast %3 : vector<8x1xf32> to vector<8x8xf32>
    %228 = arith.addf %226, %227 : vector<8x8xf32>
    %229 = arith.addf %223, %228 : vector<8x8xf32>
    %cst_132 = arith.constant dense<0xFF800000> : vector<8xf32>
    %230 = vector.multi_reduction <maximumf>, %229, %cst_132 [1] : vector<8x8xf32> to vector<8xf32>
    %231 = vector.shape_cast %230 : vector<8xf32> to vector<8x1xf32>
    %232 = vector.broadcast %231 : vector<8x1xf32> to vector<8x8xf32>
    %233 = arith.subf %229, %232 : vector<8x8xf32>
    %234 = math.exp %233 : vector<8x8xf32>
    %cst_133 = arith.constant dense<0.000000e+00> : vector<8xf32>
    %235 = vector.multi_reduction <add>, %234, %cst_133 [1] : vector<8x8xf32> to vector<8xf32>
    %236 = vector.shape_cast %235 : vector<8xf32> to vector<8x1xf32>
    %237 = tpu.reciprocal %236 {approx = true} : vector<8x1xf32> -> vector<8x1xf32>
    %238 = vector.broadcast %237 : vector<8x1xf32> to vector<8x8xf32>
    %239 = arith.mulf %234, %238 : vector<8x8xf32>
    %240 = arith.truncf %239 : vector<8x8xf32> to vector<8x8xbf16>
    %241 = arith.truncf %220 : vector<8x8xf32> to vector<8x8xbf16>
    %cst_134 = arith.constant dense<0.000000e+00> : vector<8x8xf32>
    %242 = tpu.matmul %240, %241, %cst_134 {dimension_numbers = #tpu.dot_dimension_numbers<[1], [0], [0], [1], [0, 0, 1, 1], [], []>} : vector<8x8xbf16>, vector<8x8xbf16>, vector<8x8xf32> -> vector<8x8xf32>
    %243 = arith.truncf %242 : vector<8x8xf32> to vector<8x8xbf16>
    %c3_135 = arith.constant 3 : index
    %c0_136 = arith.constant 0 : index
    %c0_137 = arith.constant 0 : index
    %244 = vector.load %arg13[%c3_135, %c0_136, %c0_137] : memref<4x8x32xf32, #tpu.memory_space<vmem>>, vector<1x8x32xf32>
    %245 = vector.shape_cast %244 : vector<1x8x32xf32> to vector<8x32xf32>
    %246 = arith.truncf %245 : vector<8x32xf32> to vector<8x32xbf16>
    %cst_138 = arith.constant dense<0.000000e+00> : vector<8x32xf32>
    %247 = tpu.matmul %243, %246, %cst_138 {dimension_numbers = #tpu.dot_dimension_numbers<[1], [0], [0], [1], [0, 0, 1, 1], [], []>} : vector<8x8xbf16>, vector<8x32xbf16>, vector<8x32xf32> -> vector<8x32xf32>
    %248 = arith.addf %194, %247 : vector<8x32xf32>
    %249 = arith.addf %5, %248 : vector<8x32xf32>
    %c0_139 = arith.constant 0 : index
    %c0_140 = arith.constant 0 : index
    %250 = vector.load %arg15[%c0_139, %c0_140] : memref<1x32xf32, #tpu.memory_space<vmem>>, vector<1x32xf32>
    %c0_141 = arith.constant 0 : index
    %c0_142 = arith.constant 0 : index
    %251 = vector.load %arg16[%c0_141, %c0_142] : memref<1x32xf32, #tpu.memory_space<vmem>>, vector<1x32xf32>
    %cst_143 = arith.constant dense<0.000000e+00> : vector<8xf32>
    %252 = vector.multi_reduction <add>, %249, %cst_143 [1] : vector<8x32xf32> to vector<8xf32>
    %253 = vector.shape_cast %252 : vector<8xf32> to vector<8x1xf32>
    %cst_144 = arith.constant 3.200000e+01 : f32
    %254 = vector.broadcast %cst_144 : f32 to vector<8x1xf32>
    %255 = arith.divf %253, %254 : vector<8x1xf32>
    %256 = vector.broadcast %255 : vector<8x1xf32> to vector<8x32xf32>
    %257 = arith.subf %249, %256 : vector<8x32xf32>
    %258 = arith.mulf %257, %257 : vector<8x32xf32>
    %cst_145 = arith.constant dense<0.000000e+00> : vector<8xf32>
    %259 = vector.multi_reduction <add>, %258, %cst_145 [1] : vector<8x32xf32> to vector<8xf32>
    %260 = vector.shape_cast %259 : vector<8xf32> to vector<8x1xf32>
    %cst_146 = arith.constant 3.200000e+01 : f32
    %261 = vector.broadcast %cst_146 : f32 to vector<8x1xf32>
    %262 = arith.divf %260, %261 : vector<8x1xf32>
    %263 = vector.broadcast %255 : vector<8x1xf32> to vector<8x32xf32>
    %264 = arith.subf %249, %263 : vector<8x32xf32>
    %cst_147 = arith.constant 9.99999974E-6 : f32
    %265 = vector.broadcast %cst_147 : f32 to vector<8x1xf32>
    %266 = arith.addf %262, %265 : vector<8x1xf32>
    %267 = math.rsqrt %266 : vector<8x1xf32>
    %268 = vector.broadcast %267 : vector<8x1xf32> to vector<8x32xf32>
    %269 = arith.mulf %264, %268 : vector<8x32xf32>
    %270 = vector.broadcast %250 : vector<1x32xf32> to vector<8x32xf32>
    %271 = arith.mulf %269, %270 : vector<8x32xf32>
    %272 = vector.broadcast %251 : vector<1x32xf32> to vector<8x32xf32>
    %273 = arith.addf %271, %272 : vector<8x32xf32>
    %274 = arith.truncf %273 : vector<8x32xf32> to vector<8x32xbf16>
    %c0_148 = arith.constant 0 : index
    %c0_149 = arith.constant 0 : index
    %275 = vector.load %arg17[%c0_148, %c0_149] : memref<32x128xf32, #tpu.memory_space<vmem>>, vector<32x128xf32>
    %276 = arith.truncf %275 : vector<32x128xf32> to vector<32x128xbf16>
    %cst_150 = arith.constant dense<0.000000e+00> : vector<8x128xf32>
    %277 = tpu.matmul %274, %276, %cst_150 {dimension_numbers = #tpu.dot_dimension_numbers<[1], [0], [0], [1], [0, 0, 1, 1], [], []>} : vector<8x32xbf16>, vector<32x128xbf16>, vector<8x128xf32> -> vector<8x128xf32>
    %c0_151 = arith.constant 0 : index
    %c0_152 = arith.constant 0 : index
    %278 = vector.load %arg18[%c0_151, %c0_152] : memref<1x128xf32, #tpu.memory_space<vmem>>, vector<1x128xf32>
    %279 = vector.broadcast %278 : vector<1x128xf32> to vector<8x128xf32>
    %280 = arith.addf %277, %279 : vector<8x128xf32>
    %281 = arith.mulf %280, %280 : vector<8x128xf32>
    %282 = arith.mulf %280, %281 : vector<8x128xf32>
    %cst_153 = arith.constant 4.471500e-02 : f32
    %283 = vector.broadcast %cst_153 : f32 to vector<8x128xf32>
    %284 = arith.mulf %283, %282 : vector<8x128xf32>
    %285 = arith.addf %280, %284 : vector<8x128xf32>
    %cst_154 = arith.constant 0.797884583 : f32
    %286 = vector.broadcast %cst_154 : f32 to vector<8x128xf32>
    %287 = arith.mulf %286, %285 : vector<8x128xf32>
    %288 = math.tanh %287 : vector<8x128xf32>
    %cst_155 = arith.constant 1.000000e+00 : f32
    %289 = vector.broadcast %cst_155 : f32 to vector<8x128xf32>
    %290 = arith.addf %289, %288 : vector<8x128xf32>
    %cst_156 = arith.constant 5.000000e-01 : f32
    %291 = vector.broadcast %cst_156 : f32 to vector<8x128xf32>
    %292 = arith.mulf %291, %290 : vector<8x128xf32>
    %293 = arith.mulf %280, %292 : vector<8x128xf32>
    %294 = arith.truncf %293 : vector<8x128xf32> to vector<8x128xbf16>
    %c0_157 = arith.constant 0 : index
    %c0_158 = arith.constant 0 : index
    %295 = vector.load %arg19[%c0_157, %c0_158] : memref<128x32xf32, #tpu.memory_space<vmem>>, vector<128x32xf32>
    %296 = arith.truncf %295 : vector<128x32xf32> to vector<128x32xbf16>
    %cst_159 = arith.constant dense<0.000000e+00> : vector<8x32xf32>
    %297 = tpu.matmul %294, %296, %cst_159 {dimension_numbers = #tpu.dot_dimension_numbers<[1], [0], [0], [1], [0, 0, 1, 1], [], []>} : vector<8x128xbf16>, vector<128x32xbf16>, vector<8x32xf32> -> vector<8x32xf32>
    %298 = arith.addf %249, %297 : vector<8x32xf32>
    %c0_160 = arith.constant 0 : index
    %c0_161 = arith.constant 0 : index
    %299 = vector.load %arg20[%c0_160, %c0_161] : memref<1x32xf32, #tpu.memory_space<vmem>>, vector<1x32xf32>
    %300 = vector.broadcast %299 : vector<1x32xf32> to vector<8x32xf32>
    %301 = arith.addf %298, %300 : vector<8x32xf32>
    %c0_162 = arith.constant 0 : index
    %c0_163 = arith.constant 0 : index
    %c0_164 = arith.constant 0 : index
    %302 = vector.load %arg21[%c0_162, %c0_163, %c0_164] : memref<1x8x32xf32, #tpu.memory_space<vmem>>, vector<1x8x32xf32>
    %303 = vector.shape_cast %302 : vector<1x8x32xf32> to vector<8x32xf32>
    %304 = vector.shape_cast %301 : vector<8x32xf32> to vector<1x8x32xf32>
    tpu.vector_store %arg21[%c0_162, %c0_163, %c0_164], %304 {strides = array<i32>} : memref<1x8x32xf32, #tpu.memory_space<vmem>>, vector<1x8x32xf32>,
    return
  }
  func.func @transform_0(%arg0: i32) -> i32 {
    %c0_i32 = arith.constant 0 : i32
    %c0_i32_0 = arith.constant 0 : i32
    return %c0_i32 : i32
  }
  func.func @transform_1(%arg0: i32) -> (i32, i32, i32) {
    %c0_i32 = arith.constant 0 : i32
    %c0_i32_0 = arith.constant 0 : i32
    %c0_i32_1 = arith.constant 0 : i32
    return %arg0, %c0_i32, %c0_i32_0 : i32, i32, i32
  }
  func.func @transform_2(%arg0: i32) -> (i32, i32, i32) {
    %c0_i32 = arith.constant 0 : i32
    %c0_i32_0 = arith.constant 0 : i32
    %c0_i32_1 = arith.constant 0 : i32
    return %arg0, %c0_i32, %c0_i32_0 : i32, i32, i32
  }
  func.func @transform_3(%arg0: i32) -> (i32, i32, i32) {
    %c0_i32 = arith.constant 0 : i32
    %c0_i32_0 = arith.constant 0 : i32
    %c0_i32_1 = arith.constant 0 : i32
    return %arg0, %c0_i32, %c0_i32_0 : i32, i32, i32
  }
  func.func @transform_4(%arg0: i32) -> (i32, i32) {
    %c0_i32 = arith.constant 0 : i32
    %c0_i32_0 = arith.constant 0 : i32
    %c0_i32_1 = arith.constant 0 : i32
    return %c0_i32, %c0_i32_0 : i32, i32
  }
  func.func @transform_5(%arg0: i32) -> (i32, i32) {
    %c0_i32 = arith.constant 0 : i32
    %c0_i32_0 = arith.constant 0 : i32
    %c0_i32_1 = arith.constant 0 : i32
    return %c0_i32, %c0_i32_0 : i32, i32
  }
  func.func @transform_6(%arg0: i32) -> (i32, i32, i32) {
    %c0_i32 = arith.constant 0 : i32
    %c0_i32_0 = arith.constant 0 : i32
    %c0_i32_1 = arith.constant 0 : i32
    %c0_i32_2 = arith.constant 0 : i32
    return %c0_i32, %c0_i32_0, %c0_i32_1 : i32, i32, i32
  }
  func.func @transform_7(%arg0: i32) -> (i32, i32, i32) {
    %c0_i32 = arith.constant 0 : i32
    %c0_i32_0 = arith.constant 0 : i32
    %c0_i32_1 = arith.constant 0 : i32
    %c0_i32_2 = arith.constant 0 : i32
    return %c0_i32, %c0_i32_0, %c0_i32_1 : i32, i32, i32
  }
  func.func @transform_8(%arg0: i32) -> (i32, i32, i32) {
    %c0_i32 = arith.constant 0 : i32
    %c0_i32_0 = arith.constant 0 : i32
    %c0_i32_1 = arith.constant 0 : i32
    %c0_i32_2 = arith.constant 0 : i32
    return %c0_i32, %c0_i32_0, %c0_i32_1 : i32, i32, i32
  }
  func.func @transform_9(%arg0: i32) -> (i32, i32, i32) {
    %c0_i32 = arith.constant 0 : i32
    %c0_i32_0 = arith.constant 0 : i32
    %c0_i32_1 = arith.constant 0 : i32
    %c0_i32_2 = arith.constant 0 : i32
    return %c0_i32, %c0_i32_0, %c0_i32_1 : i32, i32, i32
  }
  func.func @transform_10(%arg0: i32) -> (i32, i32, i32) {
    %c0_i32 = arith.constant 0 : i32
    %c0_i32_0 = arith.constant 0 : i32
    %c0_i32_1 = arith.constant 0 : i32
    %c0_i32_2 = arith.constant 0 : i32
    return %c0_i32, %c0_i32_0, %c0_i32_1 : i32, i32, i32
  }
  func.func @transform_11(%arg0: i32) -> (i32, i32, i32) {
    %c0_i32 = arith.constant 0 : i32
    %c0_i32_0 = arith.constant 0 : i32
    %c0_i32_1 = arith.constant 0 : i32
    %c0_i32_2 = arith.constant 0 : i32
    return %c0_i32, %c0_i32_0, %c0_i32_1 : i32, i32, i32
  }
  func.func @transform_12(%arg0: i32) -> (i32, i32, i32) {
    %c0_i32 = arith.constant 0 : i32
    %c0_i32_0 = arith.constant 0 : i32
    %c0_i32_1 = arith.constant 0 : i32
    %c0_i32_2 = arith.constant 0 : i32
    return %c0_i32, %c0_i32_0, %c0_i32_1 : i32, i32, i32
  }
  func.func @transform_13(%arg0: i32) -> (i32, i32) {
    %c0_i32 = arith.constant 0 : i32
    %c0_i32_0 = arith.constant 0 : i32
    %c0_i32_1 = arith.constant 0 : i32
    return %c0_i32, %c0_i32_0 : i32, i32
  }
  func.func @transform_14(%arg0: i32) -> (i32, i32) {
    %c0_i32 = arith.constant 0 : i32
    %c0_i32_0 = arith.constant 0 : i32
    %c0_i32_1 = arith.constant 0 : i32
    return %c0_i32, %c0_i32_0 : i32, i32
  }
  func.func @transform_15(%arg0: i32) -> (i32, i32) {
    %c0_i32 = arith.constant 0 : i32
    %c0_i32_0 = arith.constant 0 : i32
    %c0_i32_1 = arith.constant 0 : i32
    return %c0_i32, %c0_i32_0 : i32, i32
  }
  func.func @transform_16(%arg0: i32) -> (i32, i32) {
    %c0_i32 = arith.constant 0 : i32
    %c0_i32_0 = arith.constant 0 : i32
    %c0_i32_1 = arith.constant 0 : i32
    return %c0_i32, %c0_i32_0 : i32, i32
  }
  func.func @transform_17(%arg0: i32) -> (i32, i32) {
    %c0_i32 = arith.constant 0 : i32
    %c0_i32_0 = arith.constant 0 : i32
    %c0_i32_1 = arith.constant 0 : i32
    return %c0_i32, %c0_i32_0 : i32, i32
  }
  func.func @transform_18(%arg0: i32) -> (i32, i32) {
    %c0_i32 = arith.constant 0 : i32
    %c0_i32_0 = arith.constant 0 : i32
    %c0_i32_1 = arith.constant 0 : i32
    return %c0_i32, %c0_i32_0 : i32, i32
  }
  func.func @transform_19(%arg0: i32) -> (i32, i32) {
    %c0_i32 = arith.constant 0 : i32
    %c0_i32_0 = arith.constant 0 : i32
    %c0_i32_1 = arith.constant 0 : i32
    return %c0_i32, %c0_i32_0 : i32, i32
  }
  func.func @transform_20(%arg0: i32) -> (i32, i32, i32) {
    %c0_i32 = arith.constant 0 : i32
    %c0_i32_0 = arith.constant 0 : i32
    %c0_i32_1 = arith.constant 0 : i32
    return %arg0, %c0_i32, %c0_i32_0 : i32, i32, i32
  }
}

module attributes {stable_mosaic.version = 11 : i64} {
  func.func @_decoder_layer_kernel(%arg0: i32, %arg1: memref<1x9x32xf32, #tpu.memory_space<vmem>>, %arg2: memref<1x32xf32, #tpu.memory_space<vmem>>, %arg3: memref<1x32xf32, #tpu.memory_space<vmem>>, %arg4: memref<4x32x8xf32, #tpu.memory_space<vmem>>, %arg5: memref<4x1x8xf32, #tpu.memory_space<vmem>>, %arg6: memref<4x32x8xf32, #tpu.memory_space<vmem>>, %arg7: memref<4x1x8xf32, #tpu.memory_space<vmem>>, %arg8: memref<4x32x8xf32, #tpu.memory_space<vmem>>, %arg9: memref<4x1x8xf32, #tpu.memory_space<vmem>>, %arg10: memref<4x8x32xf32, #tpu.memory_space<vmem>>, %arg11: memref<1x32xf32, #tpu.memory_space<vmem>>, %arg12: memref<1x32xf32, #tpu.memory_space<vmem>>, %arg13: memref<1x32xf32, #tpu.memory_space<vmem>>, %arg14: memref<32x128xf32, #tpu.memory_space<vmem>>, %arg15: memref<1x128xf32, #tpu.memory_space<vmem>>, %arg16: memref<128x32xf32, #tpu.memory_space<vmem>>, %arg17: memref<1x32xf32, #tpu.memory_space<vmem>>, %arg18: memref<1x9x32xf32, #tpu.memory_space<vmem>>) attributes {dimension_semantics = [#tpu.dimension_semantics<parallel>], iteration_bounds = array<i64: 2>, scalar_prefetch = 0 : i64, scratch_operands = 0 : i64, tpu.core_type = #tpu.core_type<tc>, window_params = [{transform_indices = @transform_0, window_bounds = array<i64: 1, 9, 32>}, {pipeline_mode = #tpu.pipeline_mode<synchronous>, transform_indices = @transform_1, window_bounds = array<i64: 1, 32>}, {pipeline_mode = #tpu.pipeline_mode<synchronous>, transform_indices = @transform_2, window_bounds = array<i64: 1, 32>}, {pipeline_mode = #tpu.pipeline_mode<synchronous>, transform_indices = @transform_3, window_bounds = array<i64: 4, 32, 8>}, {pipeline_mode = #tpu.pipeline_mode<synchronous>, transform_indices = @transform_4, window_bounds = array<i64: 4, 1, 8>}, {pipeline_mode = #tpu.pipeline_mode<synchronous>, transform_indices = @transform_5, window_bounds = array<i64: 4, 32, 8>}, {pipeline_mode = #tpu.pipeline_mode<synchronous>, transform_indices = @transform_6, window_bounds = array<i64: 4, 1, 8>}, {pipeline_mode = #tpu.pipeline_mode<synchronous>, transform_indices = @transform_7, window_bounds = array<i64: 4, 32, 8>}, {pipeline_mode = #tpu.pipeline_mode<synchronous>, transform_indices = @transform_8, window_bounds = array<i64: 4, 1, 8>}, {pipeline_mode = #tpu.pipeline_mode<synchronous>, transform_indices = @transform_9, window_bounds = array<i64: 4, 8, 32>}, {pipeline_mode = #tpu.pipeline_mode<synchronous>, transform_indices = @transform_10, window_bounds = array<i64: 1, 32>}, {pipeline_mode = #tpu.pipeline_mode<synchronous>, transform_indices = @transform_11, window_bounds = array<i64: 1, 32>}, {pipeline_mode = #tpu.pipeline_mode<synchronous>, transform_indices = @transform_12, window_bounds = array<i64: 1, 32>}, {pipeline_mode = #tpu.pipeline_mode<synchronous>, transform_indices = @transform_13, window_bounds = array<i64: 32, 128>}, {pipeline_mode = #tpu.pipeline_mode<synchronous>, transform_indices = @transform_14, window_bounds = array<i64: 1, 128>}, {pipeline_mode = #tpu.pipeline_mode<synchronous>, transform_indices = @transform_15, window_bounds = array<i64: 128, 32>}, {pipeline_mode = #tpu.pipeline_mode<synchronous>, transform_indices = @transform_16, window_bounds = array<i64: 1, 32>}, {transform_indices = @transform_17, window_bounds = array<i64: 1, 9, 32>}]} {
    %0 = tpu.iota {dimensions = array<i32: 0>} : vector<9x9xi32>
    %1 = tpu.iota {dimensions = array<i32: 1>} : vector<9x9xi32>
    %2 = arith.cmpi sle, %1, %0 : vector<9x9xi32>
    %cst = arith.constant 0.000000e+00 : f32
    %cst_0 = arith.constant -1.000000e+09 : f32
    %3 = vector.broadcast %cst : f32 to vector<9x9xf32>
    %4 = vector.broadcast %cst_0 : f32 to vector<9x9xf32>
    %5 = arith.select %2, %3, %4 : vector<9x9xi1>, vector<9x9xf32>
    %c0 = arith.constant 0 : index
    %c0_1 = arith.constant 0 : index
    %c0_2 = arith.constant 0 : index
    %6 = vector.load %arg1[%c0, %c0_1, %c0_2] : memref<1x9x32xf32, #tpu.memory_space<vmem>>, vector<1x9x32xf32>
    %7 = vector.shape_cast %6 : vector<1x9x32xf32> to vector<9x32xf32>
    %c0_3 = arith.constant 0 : index
    %c0_4 = arith.constant 0 : index
    %8 = vector.load %arg2[%c0_3, %c0_4] : memref<1x32xf32, #tpu.memory_space<vmem>>, vector<1x32xf32>
    %c0_5 = arith.constant 0 : index
    %c0_6 = arith.constant 0 : index
    %9 = vector.load %arg3[%c0_5, %c0_6] : memref<1x32xf32, #tpu.memory_space<vmem>>, vector<1x32xf32>
    %cst_7 = arith.constant dense<0.000000e+00> : vector<9xf32>
    %10 = vector.multi_reduction <add>, %7, %cst_7 [1] : vector<9x32xf32> to vector<9xf32>
    %11 = vector.shape_cast %10 : vector<9xf32> to vector<9x1xf32>
    %cst_8 = arith.constant 3.200000e+01 : f32
    %12 = vector.broadcast %cst_8 : f32 to vector<9x1xf32>
    %13 = arith.divf %11, %12 : vector<9x1xf32>
    %14 = vector.broadcast %13 : vector<9x1xf32> to vector<9x32xf32>
    %15 = arith.subf %7, %14 : vector<9x32xf32>
    %16 = arith.mulf %15, %15 : vector<9x32xf32>
    %cst_9 = arith.constant dense<0.000000e+00> : vector<9xf32>
    %17 = vector.multi_reduction <add>, %16, %cst_9 [1] : vector<9x32xf32> to vector<9xf32>
    %18 = vector.shape_cast %17 : vector<9xf32> to vector<9x1xf32>
    %cst_10 = arith.constant 3.200000e+01 : f32
    %19 = vector.broadcast %cst_10 : f32 to vector<9x1xf32>
    %20 = arith.divf %18, %19 : vector<9x1xf32>
    %21 = vector.broadcast %13 : vector<9x1xf32> to vector<9x32xf32>
    %22 = arith.subf %7, %21 : vector<9x32xf32>
    %cst_11 = arith.constant 9.99999974E-6 : f32
    %23 = vector.broadcast %cst_11 : f32 to vector<9x1xf32>
    %24 = arith.addf %20, %23 : vector<9x1xf32>
    %25 = math.rsqrt %24 : vector<9x1xf32>
    %26 = vector.broadcast %25 : vector<9x1xf32> to vector<9x32xf32>
    %27 = arith.mulf %22, %26 : vector<9x32xf32>
    %28 = vector.broadcast %8 : vector<1x32xf32> to vector<9x32xf32>
    %29 = arith.mulf %27, %28 : vector<9x32xf32>
    %30 = vector.broadcast %9 : vector<1x32xf32> to vector<9x32xf32>
    %31 = arith.addf %29, %30 : vector<9x32xf32>
    %32 = arith.truncf %31 : vector<9x32xf32> to vector<9x32xbf16>
    %c0_12 = arith.constant 0 : index
    %c0_13 = arith.constant 0 : index
    %33 = vector.load %arg11[%c0_12, %c0_13] : memref<1x32xf32, #tpu.memory_space<vmem>>, vector<1x32xf32>
    %c0_14 = arith.constant 0 : index
    %c0_15 = arith.constant 0 : index
    %c0_16 = arith.constant 0 : index
    %34 = vector.load %arg4[%c0_14, %c0_15, %c0_16] : memref<4x32x8xf32, #tpu.memory_space<vmem>>, vector<1x32x8xf32>
    %35 = vector.shape_cast %34 : vector<1x32x8xf32> to vector<32x8xf32>
    %36 = arith.truncf %35 : vector<32x8xf32> to vector<32x8xbf16>
    %cst_17 = arith.constant dense<0.000000e+00> : vector<9x8xf32>
    %37 = tpu.matmul %32, %36, %cst_17 {dimension_numbers = #tpu.dot_dimension_numbers<[1], [0], [0], [1], [0, 0, 1, 1], [], []>} : vector<9x32xbf16>, vector<32x8xbf16>, vector<9x8xf32> -> vector<9x8xf32>
    %c0_18 = arith.constant 0 : index
    %c0_19 = arith.constant 0 : index
    %c0_20 = arith.constant 0 : index
    %38 = vector.load %arg5[%c0_18, %c0_19, %c0_20] : memref<4x1x8xf32, #tpu.memory_space<vmem>>, vector<1x1x8xf32>
    %39 = vector.shape_cast %38 : vector<1x1x8xf32> to vector<1x8xf32>
    %40 = vector.broadcast %39 : vector<1x8xf32> to vector<9x8xf32>
    %41 = arith.addf %37, %40 : vector<9x8xf32>
    %cst_21 = arith.constant 0.353553385 : f32
    %42 = vector.broadcast %cst_21 : f32 to vector<9x8xf32>
    %43 = arith.mulf %41, %42 : vector<9x8xf32>
    %c0_22 = arith.constant 0 : index
    %c0_23 = arith.constant 0 : index
    %c0_24 = arith.constant 0 : index
    %44 = vector.load %arg6[%c0_22, %c0_23, %c0_24] : memref<4x32x8xf32, #tpu.memory_space<vmem>>, vector<1x32x8xf32>
    %45 = vector.shape_cast %44 : vector<1x32x8xf32> to vector<32x8xf32>
    %46 = arith.truncf %45 : vector<32x8xf32> to vector<32x8xbf16>
    %cst_25 = arith.constant dense<0.000000e+00> : vector<9x8xf32>
    %47 = tpu.matmul %32, %46, %cst_25 {dimension_numbers = #tpu.dot_dimension_numbers<[1], [0], [0], [1], [0, 0, 1, 1], [], []>} : vector<9x32xbf16>, vector<32x8xbf16>, vector<9x8xf32> -> vector<9x8xf32>
    %c0_26 = arith.constant 0 : index
    %c0_27 = arith.constant 0 : index
    %c0_28 = arith.constant 0 : index
    %48 = vector.load %arg7[%c0_26, %c0_27, %c0_28] : memref<4x1x8xf32, #tpu.memory_space<vmem>>, vector<1x1x8xf32>
    %49 = vector.shape_cast %48 : vector<1x1x8xf32> to vector<1x8xf32>
    %50 = vector.broadcast %49 : vector<1x8xf32> to vector<9x8xf32>
    %51 = arith.addf %47, %50 : vector<9x8xf32>
    %c0_29 = arith.constant 0 : index
    %c0_30 = arith.constant 0 : index
    %c0_31 = arith.constant 0 : index
    %52 = vector.load %arg8[%c0_29, %c0_30, %c0_31] : memref<4x32x8xf32, #tpu.memory_space<vmem>>, vector<1x32x8xf32>
    %53 = vector.shape_cast %52 : vector<1x32x8xf32> to vector<32x8xf32>
    %54 = arith.truncf %53 : vector<32x8xf32> to vector<32x8xbf16>
    %cst_32 = arith.constant dense<0.000000e+00> : vector<9x8xf32>
    %55 = tpu.matmul %32, %54, %cst_32 {dimension_numbers = #tpu.dot_dimension_numbers<[1], [0], [0], [1], [0, 0, 1, 1], [], []>} : vector<9x32xbf16>, vector<32x8xbf16>, vector<9x8xf32> -> vector<9x8xf32>
    %c0_33 = arith.constant 0 : index
    %c0_34 = arith.constant 0 : index
    %c0_35 = arith.constant 0 : index
    %56 = vector.load %arg9[%c0_33, %c0_34, %c0_35] : memref<4x1x8xf32, #tpu.memory_space<vmem>>, vector<1x1x8xf32>
    %57 = vector.shape_cast %56 : vector<1x1x8xf32> to vector<1x8xf32>
    %58 = vector.broadcast %57 : vector<1x8xf32> to vector<9x8xf32>
    %59 = arith.addf %55, %58 : vector<9x8xf32>
    %60 = arith.truncf %43 : vector<9x8xf32> to vector<9x8xbf16>
    %61 = arith.truncf %51 : vector<9x8xf32> to vector<9x8xbf16>
    %cst_36 = arith.constant dense<0.000000e+00> : vector<9x9xf32>
    %62 = tpu.matmul %60, %61, %cst_36 {dimension_numbers = #tpu.dot_dimension_numbers<[1], [1], [0], [0], [0, 0, 1, 0], [], []>} : vector<9x8xbf16>, vector<9x8xbf16>, vector<9x9xf32> -> vector<9x9xf32>
    %63 = arith.addf %62, %5 : vector<9x9xf32>
    %cst_37 = arith.constant dense<0xFF800000> : vector<9xf32>
    %64 = vector.multi_reduction <maximumf>, %63, %cst_37 [1] : vector<9x9xf32> to vector<9xf32>
    %65 = vector.shape_cast %64 : vector<9xf32> to vector<9x1xf32>
    %66 = vector.broadcast %65 : vector<9x1xf32> to vector<9x9xf32>
    %67 = arith.subf %63, %66 : vector<9x9xf32>
    %68 = math.exp %67 : vector<9x9xf32>
    %cst_38 = arith.constant dense<0.000000e+00> : vector<9xf32>
    %69 = vector.multi_reduction <add>, %68, %cst_38 [1] : vector<9x9xf32> to vector<9xf32>
    %70 = vector.shape_cast %69 : vector<9xf32> to vector<9x1xf32>
    %71 = tpu.reciprocal %70 {approx = true} : vector<9x1xf32> -> vector<9x1xf32>
    %72 = vector.broadcast %71 : vector<9x1xf32> to vector<9x9xf32>
    %73 = arith.mulf %68, %72 : vector<9x9xf32>
    %74 = arith.truncf %73 : vector<9x9xf32> to vector<9x9xbf16>
    %75 = arith.truncf %59 : vector<9x8xf32> to vector<9x8xbf16>
    %cst_39 = arith.constant dense<0.000000e+00> : vector<9x8xf32>
    %76 = tpu.matmul %74, %75, %cst_39 {dimension_numbers = #tpu.dot_dimension_numbers<[1], [0], [0], [1], [0, 0, 1, 1], [], []>} : vector<9x9xbf16>, vector<9x8xbf16>, vector<9x8xf32> -> vector<9x8xf32>
    %77 = arith.truncf %76 : vector<9x8xf32> to vector<9x8xbf16>
    %c0_40 = arith.constant 0 : index
    %c0_41 = arith.constant 0 : index
    %c0_42 = arith.constant 0 : index
    %78 = vector.load %arg10[%c0_40, %c0_41, %c0_42] : memref<4x8x32xf32, #tpu.memory_space<vmem>>, vector<1x8x32xf32>
    %79 = vector.shape_cast %78 : vector<1x8x32xf32> to vector<8x32xf32>
    %80 = arith.truncf %79 : vector<8x32xf32> to vector<8x32xbf16>
    %cst_43 = arith.constant dense<0.000000e+00> : vector<9x32xf32>
    %81 = tpu.matmul %77, %80, %cst_43 {dimension_numbers = #tpu.dot_dimension_numbers<[1], [0], [0], [1], [0, 0, 1, 1], [], []>} : vector<9x8xbf16>, vector<8x32xbf16>, vector<9x32xf32> -> vector<9x32xf32>
    %82 = vector.broadcast %33 : vector<1x32xf32> to vector<9x32xf32>
    %83 = arith.addf %82, %81 : vector<9x32xf32>
    %c1 = arith.constant 1 : index
    %c0_44 = arith.constant 0 : index
    %c0_45 = arith.constant 0 : index
    %84 = vector.load %arg4[%c1, %c0_44, %c0_45] : memref<4x32x8xf32, #tpu.memory_space<vmem>>, vector<1x32x8xf32>
    %85 = vector.shape_cast %84 : vector<1x32x8xf32> to vector<32x8xf32>
    %86 = arith.truncf %85 : vector<32x8xf32> to vector<32x8xbf16>
    %cst_46 = arith.constant dense<0.000000e+00> : vector<9x8xf32>
    %87 = tpu.matmul %32, %86, %cst_46 {dimension_numbers = #tpu.dot_dimension_numbers<[1], [0], [0], [1], [0, 0, 1, 1], [], []>} : vector<9x32xbf16>, vector<32x8xbf16>, vector<9x8xf32> -> vector<9x8xf32>
    %c1_47 = arith.constant 1 : index
    %c0_48 = arith.constant 0 : index
    %c0_49 = arith.constant 0 : index
    %88 = vector.load %arg5[%c1_47, %c0_48, %c0_49] : memref<4x1x8xf32, #tpu.memory_space<vmem>>, vector<1x1x8xf32>
    %89 = vector.shape_cast %88 : vector<1x1x8xf32> to vector<1x8xf32>
    %90 = vector.broadcast %89 : vector<1x8xf32> to vector<9x8xf32>
    %91 = arith.addf %87, %90 : vector<9x8xf32>
    %cst_50 = arith.constant 0.353553385 : f32
    %92 = vector.broadcast %cst_50 : f32 to vector<9x8xf32>
    %93 = arith.mulf %91, %92 : vector<9x8xf32>
    %c1_51 = arith.constant 1 : index
    %c0_52 = arith.constant 0 : index
    %c0_53 = arith.constant 0 : index
    %94 = vector.load %arg6[%c1_51, %c0_52, %c0_53] : memref<4x32x8xf32, #tpu.memory_space<vmem>>, vector<1x32x8xf32>
    %95 = vector.shape_cast %94 : vector<1x32x8xf32> to vector<32x8xf32>
    %96 = arith.truncf %95 : vector<32x8xf32> to vector<32x8xbf16>
    %cst_54 = arith.constant dense<0.000000e+00> : vector<9x8xf32>
    %97 = tpu.matmul %32, %96, %cst_54 {dimension_numbers = #tpu.dot_dimension_numbers<[1], [0], [0], [1], [0, 0, 1, 1], [], []>} : vector<9x32xbf16>, vector<32x8xbf16>, vector<9x8xf32> -> vector<9x8xf32>
    %c1_55 = arith.constant 1 : index
    %c0_56 = arith.constant 0 : index
    %c0_57 = arith.constant 0 : index
    %98 = vector.load %arg7[%c1_55, %c0_56, %c0_57] : memref<4x1x8xf32, #tpu.memory_space<vmem>>, vector<1x1x8xf32>
    %99 = vector.shape_cast %98 : vector<1x1x8xf32> to vector<1x8xf32>
    %100 = vector.broadcast %99 : vector<1x8xf32> to vector<9x8xf32>
    %101 = arith.addf %97, %100 : vector<9x8xf32>
    %c1_58 = arith.constant 1 : index
    %c0_59 = arith.constant 0 : index
    %c0_60 = arith.constant 0 : index
    %102 = vector.load %arg8[%c1_58, %c0_59, %c0_60] : memref<4x32x8xf32, #tpu.memory_space<vmem>>, vector<1x32x8xf32>
    %103 = vector.shape_cast %102 : vector<1x32x8xf32> to vector<32x8xf32>
    %104 = arith.truncf %103 : vector<32x8xf32> to vector<32x8xbf16>
    %cst_61 = arith.constant dense<0.000000e+00> : vector<9x8xf32>
    %105 = tpu.matmul %32, %104, %cst_61 {dimension_numbers = #tpu.dot_dimension_numbers<[1], [0], [0], [1], [0, 0, 1, 1], [], []>} : vector<9x32xbf16>, vector<32x8xbf16>, vector<9x8xf32> -> vector<9x8xf32>
    %c1_62 = arith.constant 1 : index
    %c0_63 = arith.constant 0 : index
    %c0_64 = arith.constant 0 : index
    %106 = vector.load %arg9[%c1_62, %c0_63, %c0_64] : memref<4x1x8xf32, #tpu.memory_space<vmem>>, vector<1x1x8xf32>
    %107 = vector.shape_cast %106 : vector<1x1x8xf32> to vector<1x8xf32>
    %108 = vector.broadcast %107 : vector<1x8xf32> to vector<9x8xf32>
    %109 = arith.addf %105, %108 : vector<9x8xf32>
    %110 = arith.truncf %93 : vector<9x8xf32> to vector<9x8xbf16>
    %111 = arith.truncf %101 : vector<9x8xf32> to vector<9x8xbf16>
    %cst_65 = arith.constant dense<0.000000e+00> : vector<9x9xf32>
    %112 = tpu.matmul %110, %111, %cst_65 {dimension_numbers = #tpu.dot_dimension_numbers<[1], [1], [0], [0], [0, 0, 1, 0], [], []>} : vector<9x8xbf16>, vector<9x8xbf16>, vector<9x9xf32> -> vector<9x9xf32>
    %113 = arith.addf %112, %5 : vector<9x9xf32>
    %cst_66 = arith.constant dense<0xFF800000> : vector<9xf32>
    %114 = vector.multi_reduction <maximumf>, %113, %cst_66 [1] : vector<9x9xf32> to vector<9xf32>
    %115 = vector.shape_cast %114 : vector<9xf32> to vector<9x1xf32>
    %116 = vector.broadcast %115 : vector<9x1xf32> to vector<9x9xf32>
    %117 = arith.subf %113, %116 : vector<9x9xf32>
    %118 = math.exp %117 : vector<9x9xf32>
    %cst_67 = arith.constant dense<0.000000e+00> : vector<9xf32>
    %119 = vector.multi_reduction <add>, %118, %cst_67 [1] : vector<9x9xf32> to vector<9xf32>
    %120 = vector.shape_cast %119 : vector<9xf32> to vector<9x1xf32>
    %121 = tpu.reciprocal %120 {approx = true} : vector<9x1xf32> -> vector<9x1xf32>
    %122 = vector.broadcast %121 : vector<9x1xf32> to vector<9x9xf32>
    %123 = arith.mulf %118, %122 : vector<9x9xf32>
    %124 = arith.truncf %123 : vector<9x9xf32> to vector<9x9xbf16>
    %125 = arith.truncf %109 : vector<9x8xf32> to vector<9x8xbf16>
    %cst_68 = arith.constant dense<0.000000e+00> : vector<9x8xf32>
    %126 = tpu.matmul %124, %125, %cst_68 {dimension_numbers = #tpu.dot_dimension_numbers<[1], [0], [0], [1], [0, 0, 1, 1], [], []>} : vector<9x9xbf16>, vector<9x8xbf16>, vector<9x8xf32> -> vector<9x8xf32>
    %127 = arith.truncf %126 : vector<9x8xf32> to vector<9x8xbf16>
    %c1_69 = arith.constant 1 : index
    %c0_70 = arith.constant 0 : index
    %c0_71 = arith.constant 0 : index
    %128 = vector.load %arg10[%c1_69, %c0_70, %c0_71] : memref<4x8x32xf32, #tpu.memory_space<vmem>>, vector<1x8x32xf32>
    %129 = vector.shape_cast %128 : vector<1x8x32xf32> to vector<8x32xf32>
    %130 = arith.truncf %129 : vector<8x32xf32> to vector<8x32xbf16>
    %cst_72 = arith.constant dense<0.000000e+00> : vector<9x32xf32>
    %131 = tpu.matmul %127, %130, %cst_72 {dimension_numbers = #tpu.dot_dimension_numbers<[1], [0], [0], [1], [0, 0, 1, 1], [], []>} : vector<9x8xbf16>, vector<8x32xbf16>, vector<9x32xf32> -> vector<9x32xf32>
    %132 = arith.addf %83, %131 : vector<9x32xf32>
    %c2 = arith.constant 2 : index
    %c0_73 = arith.constant 0 : index
    %c0_74 = arith.constant 0 : index
    %133 = vector.load %arg4[%c2, %c0_73, %c0_74] : memref<4x32x8xf32, #tpu.memory_space<vmem>>, vector<1x32x8xf32>
    %134 = vector.shape_cast %133 : vector<1x32x8xf32> to vector<32x8xf32>
    %135 = arith.truncf %134 : vector<32x8xf32> to vector<32x8xbf16>
    %cst_75 = arith.constant dense<0.000000e+00> : vector<9x8xf32>
    %136 = tpu.matmul %32, %135, %cst_75 {dimension_numbers = #tpu.dot_dimension_numbers<[1], [0], [0], [1], [0, 0, 1, 1], [], []>} : vector<9x32xbf16>, vector<32x8xbf16>, vector<9x8xf32> -> vector<9x8xf32>
    %c2_76 = arith.constant 2 : index
    %c0_77 = arith.constant 0 : index
    %c0_78 = arith.constant 0 : index
    %137 = vector.load %arg5[%c2_76, %c0_77, %c0_78] : memref<4x1x8xf32, #tpu.memory_space<vmem>>, vector<1x1x8xf32>
    %138 = vector.shape_cast %137 : vector<1x1x8xf32> to vector<1x8xf32>
    %139 = vector.broadcast %138 : vector<1x8xf32> to vector<9x8xf32>
    %140 = arith.addf %136, %139 : vector<9x8xf32>
    %cst_79 = arith.constant 0.353553385 : f32
    %141 = vector.broadcast %cst_79 : f32 to vector<9x8xf32>
    %142 = arith.mulf %140, %141 : vector<9x8xf32>
    %c2_80 = arith.constant 2 : index
    %c0_81 = arith.constant 0 : index
    %c0_82 = arith.constant 0 : index
    %143 = vector.load %arg6[%c2_80, %c0_81, %c0_82] : memref<4x32x8xf32, #tpu.memory_space<vmem>>, vector<1x32x8xf32>
    %144 = vector.shape_cast %143 : vector<1x32x8xf32> to vector<32x8xf32>
    %145 = arith.truncf %144 : vector<32x8xf32> to vector<32x8xbf16>
    %cst_83 = arith.constant dense<0.000000e+00> : vector<9x8xf32>
    %146 = tpu.matmul %32, %145, %cst_83 {dimension_numbers = #tpu.dot_dimension_numbers<[1], [0], [0], [1], [0, 0, 1, 1], [], []>} : vector<9x32xbf16>, vector<32x8xbf16>, vector<9x8xf32> -> vector<9x8xf32>
    %c2_84 = arith.constant 2 : index
    %c0_85 = arith.constant 0 : index
    %c0_86 = arith.constant 0 : index
    %147 = vector.load %arg7[%c2_84, %c0_85, %c0_86] : memref<4x1x8xf32, #tpu.memory_space<vmem>>, vector<1x1x8xf32>
    %148 = vector.shape_cast %147 : vector<1x1x8xf32> to vector<1x8xf32>
    %149 = vector.broadcast %148 : vector<1x8xf32> to vector<9x8xf32>
    %150 = arith.addf %146, %149 : vector<9x8xf32>
    %c2_87 = arith.constant 2 : index
    %c0_88 = arith.constant 0 : index
    %c0_89 = arith.constant 0 : index
    %151 = vector.load %arg8[%c2_87, %c0_88, %c0_89] : memref<4x32x8xf32, #tpu.memory_space<vmem>>, vector<1x32x8xf32>
    %152 = vector.shape_cast %151 : vector<1x32x8xf32> to vector<32x8xf32>
    %153 = arith.truncf %152 : vector<32x8xf32> to vector<32x8xbf16>
    %cst_90 = arith.constant dense<0.000000e+00> : vector<9x8xf32>
    %154 = tpu.matmul %32, %153, %cst_90 {dimension_numbers = #tpu.dot_dimension_numbers<[1], [0], [0], [1], [0, 0, 1, 1], [], []>} : vector<9x32xbf16>, vector<32x8xbf16>, vector<9x8xf32> -> vector<9x8xf32>
    %c2_91 = arith.constant 2 : index
    %c0_92 = arith.constant 0 : index
    %c0_93 = arith.constant 0 : index
    %155 = vector.load %arg9[%c2_91, %c0_92, %c0_93] : memref<4x1x8xf32, #tpu.memory_space<vmem>>, vector<1x1x8xf32>
    %156 = vector.shape_cast %155 : vector<1x1x8xf32> to vector<1x8xf32>
    %157 = vector.broadcast %156 : vector<1x8xf32> to vector<9x8xf32>
    %158 = arith.addf %154, %157 : vector<9x8xf32>
    %159 = arith.truncf %142 : vector<9x8xf32> to vector<9x8xbf16>
    %160 = arith.truncf %150 : vector<9x8xf32> to vector<9x8xbf16>
    %cst_94 = arith.constant dense<0.000000e+00> : vector<9x9xf32>
    %161 = tpu.matmul %159, %160, %cst_94 {dimension_numbers = #tpu.dot_dimension_numbers<[1], [1], [0], [0], [0, 0, 1, 0], [], []>} : vector<9x8xbf16>, vector<9x8xbf16>, vector<9x9xf32> -> vector<9x9xf32>
    %162 = arith.addf %161, %5 : vector<9x9xf32>
    %cst_95 = arith.constant dense<0xFF800000> : vector<9xf32>
    %163 = vector.multi_reduction <maximumf>, %162, %cst_95 [1] : vector<9x9xf32> to vector<9xf32>
    %164 = vector.shape_cast %163 : vector<9xf32> to vector<9x1xf32>
    %165 = vector.broadcast %164 : vector<9x1xf32> to vector<9x9xf32>
    %166 = arith.subf %162, %165 : vector<9x9xf32>
    %167 = math.exp %166 : vector<9x9xf32>
    %cst_96 = arith.constant dense<0.000000e+00> : vector<9xf32>
    %168 = vector.multi_reduction <add>, %167, %cst_96 [1] : vector<9x9xf32> to vector<9xf32>
    %169 = vector.shape_cast %168 : vector<9xf32> to vector<9x1xf32>
    %170 = tpu.reciprocal %169 {approx = true} : vector<9x1xf32> -> vector<9x1xf32>
    %171 = vector.broadcast %170 : vector<9x1xf32> to vector<9x9xf32>
    %172 = arith.mulf %167, %171 : vector<9x9xf32>
    %173 = arith.truncf %172 : vector<9x9xf32> to vector<9x9xbf16>
    %174 = arith.truncf %158 : vector<9x8xf32> to vector<9x8xbf16>
    %cst_97 = arith.constant dense<0.000000e+00> : vector<9x8xf32>
    %175 = tpu.matmul %173, %174, %cst_97 {dimension_numbers = #tpu.dot_dimension_numbers<[1], [0], [0], [1], [0, 0, 1, 1], [], []>} : vector<9x9xbf16>, vector<9x8xbf16>, vector<9x8xf32> -> vector<9x8xf32>
    %176 = arith.truncf %175 : vector<9x8xf32> to vector<9x8xbf16>
    %c2_98 = arith.constant 2 : index
    %c0_99 = arith.constant 0 : index
    %c0_100 = arith.constant 0 : index
    %177 = vector.load %arg10[%c2_98, %c0_99, %c0_100] : memref<4x8x32xf32, #tpu.memory_space<vmem>>, vector<1x8x32xf32>
    %178 = vector.shape_cast %177 : vector<1x8x32xf32> to vector<8x32xf32>
    %179 = arith.truncf %178 : vector<8x32xf32> to vector<8x32xbf16>
    %cst_101 = arith.constant dense<0.000000e+00> : vector<9x32xf32>
    %180 = tpu.matmul %176, %179, %cst_101 {dimension_numbers = #tpu.dot_dimension_numbers<[1], [0], [0], [1], [0, 0, 1, 1], [], []>} : vector<9x8xbf16>, vector<8x32xbf16>, vector<9x32xf32> -> vector<9x32xf32>
    %181 = arith.addf %132, %180 : vector<9x32xf32>
    %c3 = arith.constant 3 : index
    %c0_102 = arith.constant 0 : index
    %c0_103 = arith.constant 0 : index
    %182 = vector.load %arg4[%c3, %c0_102, %c0_103] : memref<4x32x8xf32, #tpu.memory_space<vmem>>, vector<1x32x8xf32>
    %183 = vector.shape_cast %182 : vector<1x32x8xf32> to vector<32x8xf32>
    %184 = arith.truncf %183 : vector<32x8xf32> to vector<32x8xbf16>
    %cst_104 = arith.constant dense<0.000000e+00> : vector<9x8xf32>
    %185 = tpu.matmul %32, %184, %cst_104 {dimension_numbers = #tpu.dot_dimension_numbers<[1], [0], [0], [1], [0, 0, 1, 1], [], []>} : vector<9x32xbf16>, vector<32x8xbf16>, vector<9x8xf32> -> vector<9x8xf32>
    %c3_105 = arith.constant 3 : index
    %c0_106 = arith.constant 0 : index
    %c0_107 = arith.constant 0 : index
    %186 = vector.load %arg5[%c3_105, %c0_106, %c0_107] : memref<4x1x8xf32, #tpu.memory_space<vmem>>, vector<1x1x8xf32>
    %187 = vector.shape_cast %186 : vector<1x1x8xf32> to vector<1x8xf32>
    %188 = vector.broadcast %187 : vector<1x8xf32> to vector<9x8xf32>
    %189 = arith.addf %185, %188 : vector<9x8xf32>
    %cst_108 = arith.constant 0.353553385 : f32
    %190 = vector.broadcast %cst_108 : f32 to vector<9x8xf32>
    %191 = arith.mulf %189, %190 : vector<9x8xf32>
    %c3_109 = arith.constant 3 : index
    %c0_110 = arith.constant 0 : index
    %c0_111 = arith.constant 0 : index
    %192 = vector.load %arg6[%c3_109, %c0_110, %c0_111] : memref<4x32x8xf32, #tpu.memory_space<vmem>>, vector<1x32x8xf32>
    %193 = vector.shape_cast %192 : vector<1x32x8xf32> to vector<32x8xf32>
    %194 = arith.truncf %193 : vector<32x8xf32> to vector<32x8xbf16>
    %cst_112 = arith.constant dense<0.000000e+00> : vector<9x8xf32>
    %195 = tpu.matmul %32, %194, %cst_112 {dimension_numbers = #tpu.dot_dimension_numbers<[1], [0], [0], [1], [0, 0, 1, 1], [], []>} : vector<9x32xbf16>, vector<32x8xbf16>, vector<9x8xf32> -> vector<9x8xf32>
    %c3_113 = arith.constant 3 : index
    %c0_114 = arith.constant 0 : index
    %c0_115 = arith.constant 0 : index
    %196 = vector.load %arg7[%c3_113, %c0_114, %c0_115] : memref<4x1x8xf32, #tpu.memory_space<vmem>>, vector<1x1x8xf32>
    %197 = vector.shape_cast %196 : vector<1x1x8xf32> to vector<1x8xf32>
    %198 = vector.broadcast %197 : vector<1x8xf32> to vector<9x8xf32>
    %199 = arith.addf %195, %198 : vector<9x8xf32>
    %c3_116 = arith.constant 3 : index
    %c0_117 = arith.constant 0 : index
    %c0_118 = arith.constant 0 : index
    %200 = vector.load %arg8[%c3_116, %c0_117, %c0_118] : memref<4x32x8xf32, #tpu.memory_space<vmem>>, vector<1x32x8xf32>
    %201 = vector.shape_cast %200 : vector<1x32x8xf32> to vector<32x8xf32>
    %202 = arith.truncf %201 : vector<32x8xf32> to vector<32x8xbf16>
    %cst_119 = arith.constant dense<0.000000e+00> : vector<9x8xf32>
    %203 = tpu.matmul %32, %202, %cst_119 {dimension_numbers = #tpu.dot_dimension_numbers<[1], [0], [0], [1], [0, 0, 1, 1], [], []>} : vector<9x32xbf16>, vector<32x8xbf16>, vector<9x8xf32> -> vector<9x8xf32>
    %c3_120 = arith.constant 3 : index
    %c0_121 = arith.constant 0 : index
    %c0_122 = arith.constant 0 : index
    %204 = vector.load %arg9[%c3_120, %c0_121, %c0_122] : memref<4x1x8xf32, #tpu.memory_space<vmem>>, vector<1x1x8xf32>
    %205 = vector.shape_cast %204 : vector<1x1x8xf32> to vector<1x8xf32>
    %206 = vector.broadcast %205 : vector<1x8xf32> to vector<9x8xf32>
    %207 = arith.addf %203, %206 : vector<9x8xf32>
    %208 = arith.truncf %191 : vector<9x8xf32> to vector<9x8xbf16>
    %209 = arith.truncf %199 : vector<9x8xf32> to vector<9x8xbf16>
    %cst_123 = arith.constant dense<0.000000e+00> : vector<9x9xf32>
    %210 = tpu.matmul %208, %209, %cst_123 {dimension_numbers = #tpu.dot_dimension_numbers<[1], [1], [0], [0], [0, 0, 1, 0], [], []>} : vector<9x8xbf16>, vector<9x8xbf16>, vector<9x9xf32> -> vector<9x9xf32>
    %211 = arith.addf %210, %5 : vector<9x9xf32>
    %cst_124 = arith.constant dense<0xFF800000> : vector<9xf32>
    %212 = vector.multi_reduction <maximumf>, %211, %cst_124 [1] : vector<9x9xf32> to vector<9xf32>
    %213 = vector.shape_cast %212 : vector<9xf32> to vector<9x1xf32>
    %214 = vector.broadcast %213 : vector<9x1xf32> to vector<9x9xf32>
    %215 = arith.subf %211, %214 : vector<9x9xf32>
    %216 = math.exp %215 : vector<9x9xf32>
    %cst_125 = arith.constant dense<0.000000e+00> : vector<9xf32>
    %217 = vector.multi_reduction <add>, %216, %cst_125 [1] : vector<9x9xf32> to vector<9xf32>
    %218 = vector.shape_cast %217 : vector<9xf32> to vector<9x1xf32>
    %219 = tpu.reciprocal %218 {approx = true} : vector<9x1xf32> -> vector<9x1xf32>
    %220 = vector.broadcast %219 : vector<9x1xf32> to vector<9x9xf32>
    %221 = arith.mulf %216, %220 : vector<9x9xf32>
    %222 = arith.truncf %221 : vector<9x9xf32> to vector<9x9xbf16>
    %223 = arith.truncf %207 : vector<9x8xf32> to vector<9x8xbf16>
    %cst_126 = arith.constant dense<0.000000e+00> : vector<9x8xf32>
    %224 = tpu.matmul %222, %223, %cst_126 {dimension_numbers = #tpu.dot_dimension_numbers<[1], [0], [0], [1], [0, 0, 1, 1], [], []>} : vector<9x9xbf16>, vector<9x8xbf16>, vector<9x8xf32> -> vector<9x8xf32>
    %225 = arith.truncf %224 : vector<9x8xf32> to vector<9x8xbf16>
    %c3_127 = arith.constant 3 : index
    %c0_128 = arith.constant 0 : index
    %c0_129 = arith.constant 0 : index
    %226 = vector.load %arg10[%c3_127, %c0_128, %c0_129] : memref<4x8x32xf32, #tpu.memory_space<vmem>>, vector<1x8x32xf32>
    %227 = vector.shape_cast %226 : vector<1x8x32xf32> to vector<8x32xf32>
    %228 = arith.truncf %227 : vector<8x32xf32> to vector<8x32xbf16>
    %cst_130 = arith.constant dense<0.000000e+00> : vector<9x32xf32>
    %229 = tpu.matmul %225, %228, %cst_130 {dimension_numbers = #tpu.dot_dimension_numbers<[1], [0], [0], [1], [0, 0, 1, 1], [], []>} : vector<9x8xbf16>, vector<8x32xbf16>, vector<9x32xf32> -> vector<9x32xf32>
    %230 = arith.addf %181, %229 : vector<9x32xf32>
    %231 = arith.addf %7, %230 : vector<9x32xf32>
    %c0_131 = arith.constant 0 : index
    %c0_132 = arith.constant 0 : index
    %232 = vector.load %arg12[%c0_131, %c0_132] : memref<1x32xf32, #tpu.memory_space<vmem>>, vector<1x32xf32>
    %c0_133 = arith.constant 0 : index
    %c0_134 = arith.constant 0 : index
    %233 = vector.load %arg13[%c0_133, %c0_134] : memref<1x32xf32, #tpu.memory_space<vmem>>, vector<1x32xf32>
    %cst_135 = arith.constant dense<0.000000e+00> : vector<9xf32>
    %234 = vector.multi_reduction <add>, %231, %cst_135 [1] : vector<9x32xf32> to vector<9xf32>
    %235 = vector.shape_cast %234 : vector<9xf32> to vector<9x1xf32>
    %cst_136 = arith.constant 3.200000e+01 : f32
    %236 = vector.broadcast %cst_136 : f32 to vector<9x1xf32>
    %237 = arith.divf %235, %236 : vector<9x1xf32>
    %238 = vector.broadcast %237 : vector<9x1xf32> to vector<9x32xf32>
    %239 = arith.subf %231, %238 : vector<9x32xf32>
    %240 = arith.mulf %239, %239 : vector<9x32xf32>
    %cst_137 = arith.constant dense<0.000000e+00> : vector<9xf32>
    %241 = vector.multi_reduction <add>, %240, %cst_137 [1] : vector<9x32xf32> to vector<9xf32>
    %242 = vector.shape_cast %241 : vector<9xf32> to vector<9x1xf32>
    %cst_138 = arith.constant 3.200000e+01 : f32
    %243 = vector.broadcast %cst_138 : f32 to vector<9x1xf32>
    %244 = arith.divf %242, %243 : vector<9x1xf32>
    %245 = vector.broadcast %237 : vector<9x1xf32> to vector<9x32xf32>
    %246 = arith.subf %231, %245 : vector<9x32xf32>
    %cst_139 = arith.constant 9.99999974E-6 : f32
    %247 = vector.broadcast %cst_139 : f32 to vector<9x1xf32>
    %248 = arith.addf %244, %247 : vector<9x1xf32>
    %249 = math.rsqrt %248 : vector<9x1xf32>
    %250 = vector.broadcast %249 : vector<9x1xf32> to vector<9x32xf32>
    %251 = arith.mulf %246, %250 : vector<9x32xf32>
    %252 = vector.broadcast %232 : vector<1x32xf32> to vector<9x32xf32>
    %253 = arith.mulf %251, %252 : vector<9x32xf32>
    %254 = vector.broadcast %233 : vector<1x32xf32> to vector<9x32xf32>
    %255 = arith.addf %253, %254 : vector<9x32xf32>
    %256 = arith.truncf %255 : vector<9x32xf32> to vector<9x32xbf16>
    %c0_140 = arith.constant 0 : index
    %c0_141 = arith.constant 0 : index
    %257 = vector.load %arg14[%c0_140, %c0_141] : memref<32x128xf32, #tpu.memory_space<vmem>>, vector<32x128xf32>
    %258 = arith.truncf %257 : vector<32x128xf32> to vector<32x128xbf16>
    %cst_142 = arith.constant dense<0.000000e+00> : vector<9x128xf32>
    %259 = tpu.matmul %256, %258, %cst_142 {dimension_numbers = #tpu.dot_dimension_numbers<[1], [0], [0], [1], [0, 0, 1, 1], [], []>} : vector<9x32xbf16>, vector<32x128xbf16>, vector<9x128xf32> -> vector<9x128xf32>
    %c0_143 = arith.constant 0 : index
    %c0_144 = arith.constant 0 : index
    %260 = vector.load %arg15[%c0_143, %c0_144] : memref<1x128xf32, #tpu.memory_space<vmem>>, vector<1x128xf32>
    %261 = vector.broadcast %260 : vector<1x128xf32> to vector<9x128xf32>
    %262 = arith.addf %259, %261 : vector<9x128xf32>
    %263 = arith.mulf %262, %262 : vector<9x128xf32>
    %264 = arith.mulf %262, %263 : vector<9x128xf32>
    %cst_145 = arith.constant 4.471500e-02 : f32
    %265 = vector.broadcast %cst_145 : f32 to vector<9x128xf32>
    %266 = arith.mulf %265, %264 : vector<9x128xf32>
    %267 = arith.addf %262, %266 : vector<9x128xf32>
    %cst_146 = arith.constant 0.797884583 : f32
    %268 = vector.broadcast %cst_146 : f32 to vector<9x128xf32>
    %269 = arith.mulf %268, %267 : vector<9x128xf32>
    %270 = math.tanh %269 : vector<9x128xf32>
    %cst_147 = arith.constant 1.000000e+00 : f32
    %271 = vector.broadcast %cst_147 : f32 to vector<9x128xf32>
    %272 = arith.addf %271, %270 : vector<9x128xf32>
    %cst_148 = arith.constant 5.000000e-01 : f32
    %273 = vector.broadcast %cst_148 : f32 to vector<9x128xf32>
    %274 = arith.mulf %273, %272 : vector<9x128xf32>
    %275 = arith.mulf %262, %274 : vector<9x128xf32>
    %276 = arith.truncf %275 : vector<9x128xf32> to vector<9x128xbf16>
    %c0_149 = arith.constant 0 : index
    %c0_150 = arith.constant 0 : index
    %277 = vector.load %arg16[%c0_149, %c0_150] : memref<128x32xf32, #tpu.memory_space<vmem>>, vector<128x32xf32>
    %278 = arith.truncf %277 : vector<128x32xf32> to vector<128x32xbf16>
    %cst_151 = arith.constant dense<0.000000e+00> : vector<9x32xf32>
    %279 = tpu.matmul %276, %278, %cst_151 {dimension_numbers = #tpu.dot_dimension_numbers<[1], [0], [0], [1], [0, 0, 1, 1], [], []>} : vector<9x128xbf16>, vector<128x32xbf16>, vector<9x32xf32> -> vector<9x32xf32>
    %280 = arith.addf %231, %279 : vector<9x32xf32>
    %c0_152 = arith.constant 0 : index
    %c0_153 = arith.constant 0 : index
    %281 = vector.load %arg17[%c0_152, %c0_153] : memref<1x32xf32, #tpu.memory_space<vmem>>, vector<1x32xf32>
    %282 = vector.broadcast %281 : vector<1x32xf32> to vector<9x32xf32>
    %283 = arith.addf %280, %282 : vector<9x32xf32>
    %c0_154 = arith.constant 0 : index
    %c0_155 = arith.constant 0 : index
    %c0_156 = arith.constant 0 : index
    %284 = vector.load %arg18[%c0_154, %c0_155, %c0_156] : memref<1x9x32xf32, #tpu.memory_space<vmem>>, vector<1x9x32xf32>
    %285 = vector.shape_cast %284 : vector<1x9x32xf32> to vector<9x32xf32>
    %286 = vector.shape_cast %283 : vector<9x32xf32> to vector<1x9x32xf32>
    tpu.vector_store %arg18[%c0_154, %c0_155, %c0_156], %286 {strides = array<i32>} : memref<1x9x32xf32, #tpu.memory_space<vmem>>, vector<1x9x32xf32>,
    return
  }
  func.func @transform_0(%arg0: i32) -> (i32, i32, i32) {
    %c0_i32 = arith.constant 0 : i32
    %c0_i32_0 = arith.constant 0 : i32
    %c0_i32_1 = arith.constant 0 : i32
    return %arg0, %c0_i32, %c0_i32_0 : i32, i32, i32
  }
  func.func @transform_1(%arg0: i32) -> (i32, i32) {
    %c0_i32 = arith.constant 0 : i32
    %c0_i32_0 = arith.constant 0 : i32
    %c0_i32_1 = arith.constant 0 : i32
    return %c0_i32, %c0_i32_0 : i32, i32
  }
  func.func @transform_2(%arg0: i32) -> (i32, i32) {
    %c0_i32 = arith.constant 0 : i32
    %c0_i32_0 = arith.constant 0 : i32
    %c0_i32_1 = arith.constant 0 : i32
    return %c0_i32, %c0_i32_0 : i32, i32
  }
  func.func @transform_3(%arg0: i32) -> (i32, i32, i32) {
    %c0_i32 = arith.constant 0 : i32
    %c0_i32_0 = arith.constant 0 : i32
    %c0_i32_1 = arith.constant 0 : i32
    %c0_i32_2 = arith.constant 0 : i32
    return %c0_i32, %c0_i32_0, %c0_i32_1 : i32, i32, i32
  }
  func.func @transform_4(%arg0: i32) -> (i32, i32, i32) {
    %c0_i32 = arith.constant 0 : i32
    %c0_i32_0 = arith.constant 0 : i32
    %c0_i32_1 = arith.constant 0 : i32
    %c0_i32_2 = arith.constant 0 : i32
    return %c0_i32, %c0_i32_0, %c0_i32_1 : i32, i32, i32
  }
  func.func @transform_5(%arg0: i32) -> (i32, i32, i32) {
    %c0_i32 = arith.constant 0 : i32
    %c0_i32_0 = arith.constant 0 : i32
    %c0_i32_1 = arith.constant 0 : i32
    %c0_i32_2 = arith.constant 0 : i32
    return %c0_i32, %c0_i32_0, %c0_i32_1 : i32, i32, i32
  }
  func.func @transform_6(%arg0: i32) -> (i32, i32, i32) {
    %c0_i32 = arith.constant 0 : i32
    %c0_i32_0 = arith.constant 0 : i32
    %c0_i32_1 = arith.constant 0 : i32
    %c0_i32_2 = arith.constant 0 : i32
    return %c0_i32, %c0_i32_0, %c0_i32_1 : i32, i32, i32
  }
  func.func @transform_7(%arg0: i32) -> (i32, i32, i32) {
    %c0_i32 = arith.constant 0 : i32
    %c0_i32_0 = arith.constant 0 : i32
    %c0_i32_1 = arith.constant 0 : i32
    %c0_i32_2 = arith.constant 0 : i32
    return %c0_i32, %c0_i32_0, %c0_i32_1 : i32, i32, i32
  }
  func.func @transform_8(%arg0: i32) -> (i32, i32, i32) {
    %c0_i32 = arith.constant 0 : i32
    %c0_i32_0 = arith.constant 0 : i32
    %c0_i32_1 = arith.constant 0 : i32
    %c0_i32_2 = arith.constant 0 : i32
    return %c0_i32, %c0_i32_0, %c0_i32_1 : i32, i32, i32
  }
  func.func @transform_9(%arg0: i32) -> (i32, i32, i32) {
    %c0_i32 = arith.constant 0 : i32
    %c0_i32_0 = arith.constant 0 : i32
    %c0_i32_1 = arith.constant 0 : i32
    %c0_i32_2 = arith.constant 0 : i32
    return %c0_i32, %c0_i32_0, %c0_i32_1 : i32, i32, i32
  }
  func.func @transform_10(%arg0: i32) -> (i32, i32) {
    %c0_i32 = arith.constant 0 : i32
    %c0_i32_0 = arith.constant 0 : i32
    %c0_i32_1 = arith.constant 0 : i32
    return %c0_i32, %c0_i32_0 : i32, i32
  }
  func.func @transform_11(%arg0: i32) -> (i32, i32) {
    %c0_i32 = arith.constant 0 : i32
    %c0_i32_0 = arith.constant 0 : i32
    %c0_i32_1 = arith.constant 0 : i32
    return %c0_i32, %c0_i32_0 : i32, i32
  }
  func.func @transform_12(%arg0: i32) -> (i32, i32) {
    %c0_i32 = arith.constant 0 : i32
    %c0_i32_0 = arith.constant 0 : i32
    %c0_i32_1 = arith.constant 0 : i32
    return %c0_i32, %c0_i32_0 : i32, i32
  }
  func.func @transform_13(%arg0: i32) -> (i32, i32) {
    %c0_i32 = arith.constant 0 : i32
    %c0_i32_0 = arith.constant 0 : i32
    %c0_i32_1 = arith.constant 0 : i32
    return %c0_i32, %c0_i32_0 : i32, i32
  }
  func.func @transform_14(%arg0: i32) -> (i32, i32) {
    %c0_i32 = arith.constant 0 : i32
    %c0_i32_0 = arith.constant 0 : i32
    %c0_i32_1 = arith.constant 0 : i32
    return %c0_i32, %c0_i32_0 : i32, i32
  }
  func.func @transform_15(%arg0: i32) -> (i32, i32) {
    %c0_i32 = arith.constant 0 : i32
    %c0_i32_0 = arith.constant 0 : i32
    %c0_i32_1 = arith.constant 0 : i32
    return %c0_i32, %c0_i32_0 : i32, i32
  }
  func.func @transform_16(%arg0: i32) -> (i32, i32) {
    %c0_i32 = arith.constant 0 : i32
    %c0_i32_0 = arith.constant 0 : i32
    %c0_i32_1 = arith.constant 0 : i32
    return %c0_i32, %c0_i32_0 : i32, i32
  }
  func.func @transform_17(%arg0: i32) -> (i32, i32, i32) {
    %c0_i32 = arith.constant 0 : i32
    %c0_i32_0 = arith.constant 0 : i32
    %c0_i32_1 = arith.constant 0 : i32
    return %arg0, %c0_i32, %c0_i32_0 : i32, i32, i32
  }
}

module attributes {stable_mosaic.version = 11 : i64} {
  func.func @_decoder_head_xent_kernel(%arg0: i32, %arg1: memref<1x9x32xf32, #tpu.memory_space<vmem>>, %arg2: memref<1x8x1xi32, #tpu.memory_space<vmem>>, %arg3: memref<16x32xf32, #tpu.memory_space<vmem>>, %arg4: memref<1x32xf32, #tpu.memory_space<vmem>>, %arg5: memref<1x32xf32, #tpu.memory_space<vmem>>, %arg6: memref<1x1x1xf32, #tpu.memory_space<vmem>>, %arg7: memref<1x1x1xf32, #tpu.memory_space<vmem>>) attributes {dimension_semantics = [#tpu.dimension_semantics<parallel>], iteration_bounds = array<i64: 2>, scalar_prefetch = 0 : i64, scratch_operands = 0 : i64, tpu.core_type = #tpu.core_type<tc>, window_params = [{transform_indices = @transform_0, window_bounds = array<i64: 1, 9, 32>}, {transform_indices = @transform_1, window_bounds = array<i64: 1, 8, 1>}, {pipeline_mode = #tpu.pipeline_mode<synchronous>, transform_indices = @transform_2, window_bounds = array<i64: 16, 32>}, {pipeline_mode = #tpu.pipeline_mode<synchronous>, transform_indices = @transform_3, window_bounds = array<i64: 1, 32>}, {pipeline_mode = #tpu.pipeline_mode<synchronous>, transform_indices = @transform_4, window_bounds = array<i64: 1, 32>}, {transform_indices = @transform_5, window_bounds = array<i64: 1, 1, 1>}, {transform_indices = @transform_6, window_bounds = array<i64: 1, 1, 1>}]} {
    %c0 = arith.constant 0 : index
    %c0_0 = arith.constant 0 : index
    %c0_1 = arith.constant 0 : index
    %0 = vector.load %arg1[%c0, %c0_0, %c0_1] : memref<1x9x32xf32, #tpu.memory_space<vmem>>, vector<1x8x32xf32>
    %1 = vector.shape_cast %0 : vector<1x8x32xf32> to vector<8x32xf32>
    %c0_2 = arith.constant 0 : index
    %c0_3 = arith.constant 0 : index
    %2 = vector.load %arg4[%c0_2, %c0_3] : memref<1x32xf32, #tpu.memory_space<vmem>>, vector<1x32xf32>
    %c0_4 = arith.constant 0 : index
    %c0_5 = arith.constant 0 : index
    %3 = vector.load %arg5[%c0_4, %c0_5] : memref<1x32xf32, #tpu.memory_space<vmem>>, vector<1x32xf32>
    %cst = arith.constant dense<0.000000e+00> : vector<8xf32>
    %4 = vector.multi_reduction <add>, %1, %cst [1] : vector<8x32xf32> to vector<8xf32>
    %5 = vector.shape_cast %4 : vector<8xf32> to vector<8x1xf32>
    %cst_6 = arith.constant 3.200000e+01 : f32
    %6 = vector.broadcast %cst_6 : f32 to vector<8x1xf32>
    %7 = arith.divf %5, %6 : vector<8x1xf32>
    %8 = vector.broadcast %7 : vector<8x1xf32> to vector<8x32xf32>
    %9 = arith.subf %1, %8 : vector<8x32xf32>
    %10 = arith.mulf %9, %9 : vector<8x32xf32>
    %cst_7 = arith.constant dense<0.000000e+00> : vector<8xf32>
    %11 = vector.multi_reduction <add>, %10, %cst_7 [1] : vector<8x32xf32> to vector<8xf32>
    %12 = vector.shape_cast %11 : vector<8xf32> to vector<8x1xf32>
    %cst_8 = arith.constant 3.200000e+01 : f32
    %13 = vector.broadcast %cst_8 : f32 to vector<8x1xf32>
    %14 = arith.divf %12, %13 : vector<8x1xf32>
    %15 = vector.broadcast %7 : vector<8x1xf32> to vector<8x32xf32>
    %16 = arith.subf %1, %15 : vector<8x32xf32>
    %cst_9 = arith.constant 9.99999974E-6 : f32
    %17 = vector.broadcast %cst_9 : f32 to vector<8x1xf32>
    %18 = arith.addf %14, %17 : vector<8x1xf32>
    %19 = math.rsqrt %18 : vector<8x1xf32>
    %20 = vector.broadcast %19 : vector<8x1xf32> to vector<8x32xf32>
    %21 = arith.mulf %16, %20 : vector<8x32xf32>
    %22 = vector.broadcast %2 : vector<1x32xf32> to vector<8x32xf32>
    %23 = arith.mulf %21, %22 : vector<8x32xf32>
    %24 = vector.broadcast %3 : vector<1x32xf32> to vector<8x32xf32>
    %25 = arith.addf %23, %24 : vector<8x32xf32>
    %26 = arith.truncf %25 : vector<8x32xf32> to vector<8x32xbf16>
    %c0_10 = arith.constant 0 : index
    %c0_11 = arith.constant 0 : index
    %27 = vector.load %arg3[%c0_10, %c0_11] : memref<16x32xf32, #tpu.memory_space<vmem>>, vector<16x32xf32>
    %28 = arith.truncf %27 : vector<16x32xf32> to vector<16x32xbf16>
    %cst_12 = arith.constant dense<0.000000e+00> : vector<8x16xf32>
    %29 = tpu.matmul %26, %28, %cst_12 {dimension_numbers = #tpu.dot_dimension_numbers<[1], [1], [0], [0], [0, 0, 1, 0], [], []>} : vector<8x32xbf16>, vector<16x32xbf16>, vector<8x16xf32> -> vector<8x16xf32>
    %c0_13 = arith.constant 0 : index
    %c0_14 = arith.constant 0 : index
    %c0_15 = arith.constant 0 : index
    %30 = vector.load %arg2[%c0_13, %c0_14, %c0_15] : memref<1x8x1xi32, #tpu.memory_space<vmem>>, vector<1x8x1xi32>
    %31 = vector.shape_cast %30 : vector<1x8x1xi32> to vector<8x1xi32>
    %cst_16 = arith.constant dense<0xFF800000> : vector<8xf32>
    %32 = vector.multi_reduction <maximumf>, %29, %cst_16 [1] : vector<8x16xf32> to vector<8xf32>
    %33 = vector.shape_cast %32 : vector<8xf32> to vector<8x1xf32>
    %34 = vector.broadcast %33 : vector<8x1xf32> to vector<8x16xf32>
    %35 = arith.subf %29, %34 : vector<8x16xf32>
    %36 = math.exp %35 : vector<8x16xf32>
    %cst_17 = arith.constant dense<0.000000e+00> : vector<8xf32>
    %37 = vector.multi_reduction <add>, %36, %cst_17 [1] : vector<8x16xf32> to vector<8xf32>
    %38 = vector.shape_cast %37 : vector<8xf32> to vector<8x1xf32>
    %39 = math.log %38 : vector<8x1xf32>
    %40 = arith.addf %39, %33 : vector<8x1xf32>
    %41 = tpu.iota {dimensions = array<i32: 1>} : vector<8x16xi32>
    %42 = vector.broadcast %31 : vector<8x1xi32> to vector<8x16xi32>
    %43 = arith.cmpi eq, %41, %42 : vector<8x16xi32>
    %cst_18 = arith.constant 0.000000e+00 : f32
    %44 = vector.broadcast %cst_18 : f32 to vector<8x16xf32>
    %45 = arith.select %43, %29, %44 : vector<8x16xi1>, vector<8x16xf32>
    %cst_19 = arith.constant dense<0.000000e+00> : vector<8xf32>
    %46 = vector.multi_reduction <add>, %45, %cst_19 [1] : vector<8x16xf32> to vector<8xf32>
    %47 = vector.shape_cast %46 : vector<8xf32> to vector<8x1xf32>
    %48 = arith.subf %40, %47 : vector<8x1xf32>
    %c0_i32 = arith.constant 0 : i32
    %49 = vector.broadcast %c0_i32 : i32 to vector<8x1xi32>
    %50 = arith.cmpi ne, %31, %49 : vector<8x1xi32>
    %51 = arith.extui %50 : vector<8x1xi1> to vector<8x1xi32>
    %52 = arith.sitofp %51 : vector<8x1xi32> to vector<8x1xf32>
    %53 = arith.mulf %48, %52 : vector<8x1xf32>
    %cst_20 = arith.constant dense<0.000000e+00> : vector<1xf32>
    %54 = vector.multi_reduction <add>, %53, %cst_20 [0] : vector<8x1xf32> to vector<1xf32>
    %55 = vector.shape_cast %54 : vector<1xf32> to vector<1x1xf32>
    %c0_21 = arith.constant 0 : index
    %c0_22 = arith.constant 0 : index
    %c0_23 = arith.constant 0 : index
    %56 = vector.load %arg6[%c0_21, %c0_22, %c0_23] : memref<1x1x1xf32, #tpu.memory_space<vmem>>, vector<1x1x1xf32>
    %57 = vector.shape_cast %56 : vector<1x1x1xf32> to vector<1x1xf32>
    %58 = vector.shape_cast %55 : vector<1x1xf32> to vector<1x1x1xf32>
    tpu.vector_store %arg6[%c0_21, %c0_22, %c0_23], %58 {strides = array<i32>} : memref<1x1x1xf32, #tpu.memory_space<vmem>>, vector<1x1x1xf32>,
    %cst_24 = arith.constant dense<0.000000e+00> : vector<1xf32>
    %59 = vector.multi_reduction <add>, %52, %cst_24 [0] : vector<8x1xf32> to vector<1xf32>
    %60 = vector.shape_cast %59 : vector<1xf32> to vector<1x1xf32>
    %c0_25 = arith.constant 0 : index
    %c0_26 = arith.constant 0 : index
    %c0_27 = arith.constant 0 : index
    %61 = vector.load %arg7[%c0_25, %c0_26, %c0_27] : memref<1x1x1xf32, #tpu.memory_space<vmem>>, vector<1x1x1xf32>
    %62 = vector.shape_cast %61 : vector<1x1x1xf32> to vector<1x1xf32>
    %63 = vector.shape_cast %60 : vector<1x1xf32> to vector<1x1x1xf32>
    tpu.vector_store %arg7[%c0_25, %c0_26, %c0_27], %63 {strides = array<i32>} : memref<1x1x1xf32, #tpu.memory_space<vmem>>, vector<1x1x1xf32>,
    return
  }
  func.func @transform_0(%arg0: i32) -> (i32, i32, i32) {
    %c0_i32 = arith.constant 0 : i32
    %c0_i32_0 = arith.constant 0 : i32
    %c0_i32_1 = arith.constant 0 : i32
    return %arg0, %c0_i32, %c0_i32_0 : i32, i32, i32
  }
  func.func @transform_1(%arg0: i32) -> (i32, i32, i32) {
    %c0_i32 = arith.constant 0 : i32
    %c0_i32_0 = arith.constant 0 : i32
    %c0_i32_1 = arith.constant 0 : i32
    return %arg0, %c0_i32, %c0_i32_0 : i32, i32, i32
  }
  func.func @transform_2(%arg0: i32) -> (i32, i32) {
    %c0_i32 = arith.constant 0 : i32
    %c0_i32_0 = arith.constant 0 : i32
    %c0_i32_1 = arith.constant 0 : i32
    return %c0_i32, %c0_i32_0 : i32, i32
  }
  func.func @transform_3(%arg0: i32) -> (i32, i32) {
    %c0_i32 = arith.constant 0 : i32
    %c0_i32_0 = arith.constant 0 : i32
    %c0_i32_1 = arith.constant 0 : i32
    return %c0_i32, %c0_i32_0 : i32, i32
  }
  func.func @transform_4(%arg0: i32) -> (i32, i32) {
    %c0_i32 = arith.constant 0 : i32
    %c0_i32_0 = arith.constant 0 : i32
    %c0_i32_1 = arith.constant 0 : i32
    return %c0_i32, %c0_i32_0 : i32, i32
  }
  func.func @transform_5(%arg0: i32) -> (i32, i32, i32) {
    %c0_i32 = arith.constant 0 : i32
    %c0_i32_0 = arith.constant 0 : i32
    %c0_i32_1 = arith.constant 0 : i32
    return %arg0, %c0_i32, %c0_i32_0 : i32, i32, i32
  }
  func.func @transform_6(%arg0: i32) -> (i32, i32, i32) {
    %c0_i32 = arith.constant 0 : i32
    %c0_i32_0 = arith.constant 0 : i32
    %c0_i32_1 = arith.constant 0 : i32
    return %arg0, %c0_i32, %c0_i32_0 : i32, i32, i32
  }
}

</mosaic_0001>

<llo_original>
// kernel: smiles_transformer_forward.8
$region0: #{smiles_transformer_forward.8}
  #allocation0 [shape = 'u32[]', space=smem, size = 0x4, offset = 0x4, fixed_abs, tag = 'smem constant byte address 0x4 - core index']
  #allocation1 [shape = 'u32[72,128]{1,0:T(1,128)}', space=vmem, size = 0x9000, scoped, tag = 'internal scratch']
  %s0 = inlined_call_operand.vmem [shape: f32[2,8,32], index: 0, kind: input, shape index: {}]
  %s1 = inlined_call_operand.vmem [shape: f32[2,8,1], index: 1, kind: input, shape index: {}]
  %s2 = inlined_call_operand.vmem [shape: f32[1,32], index: 2, kind: input, shape index: {}]
  %s3 = inlined_call_operand.vmem [shape: f32[1,32], index: 3, kind: input, shape index: {}]
  %s4 = inlined_call_operand.vmem [shape: f32[2,1,32], index: 4, kind: output, shape index: {}]
  %s5 = sld [smem:[#allocation0]]
  $region49: #{smiles_transformer_forward.8} parent=0
    _
  %s7 = ssub.s32 1, %s5
  %s8 = scalar_select 0, %s7, %s5
  loop: start=0, step=1, limit=4
  $region2: #{smiles_transformer_forward.8} parent=0 // loop_pre_header
    _
  $region3: #{smiles_transformer_forward.8} parent=0 // loop_header
    %s10 = sphi 0, %s14
    %p11 = scmp.ge.s32.totalorder %s10, 4
    %s20 = sphi 0, %s22
    %s23 = sphi 0, %s20
    %s24 = sphi 0, %s23
    %s40 = sphi 0, %s24
    %s46 = sphi 0, %s48
    %s49 = sphi 0, %s46
    %s50 = sphi 0, %s49
    %s66 = sphi 0, %s50
    %s70 = sphi 0, %s70
    %s72 = sphi 0, %s70
    %s73 = sphi 0, %s72
    %s87 = sphi 0, %s73
    %s91 = sphi 0, %s91
    %s93 = sphi 0, %s91
    %s94 = sphi 0, %s93
    %s108 = sphi 0, %s94
    %s114 = sphi 0, %s116
    %s117 = sphi 0, %s114
    %s118 = sphi 0, %s117
    %s134 = sphi 0, %s118
  $region4: #{smiles_transformer_forward.8} parent=0 // loop_header_branch
    %13 = sbr.rel (%p11) target = $region8
  $region5: #{smiles_transformer_forward.8} parent=0 // loop_body
    %s15 = ssub.s32 %s10, 1
    %s16 = ssub.s32 %s10, 2
    %s17 = sadd.s32 %s10, 1
    %s18 = ssub.s32 %s10, %s17
    %p19 = scmp.eq.s32.totalorder %s18, 0
    %s21 = sadd.s32 %s20, 1
    %s22 = scalar_select %p19, %s20, %s21
    %p25 = pneg %p19
    %p26 = scmp.eq.s32.totalorder %s10, 1
    %p27 = por %p25, %p26
    %p28 = scmp.ne.s32.totalorder %s20, %s23
    %p29 = scmp.eq.s32.totalorder %s10, 0
    %p30 = por %p28, %p29
    %p31 = scmp.ne.s32.totalorder %s20, %s23
    %p32 = scmp.eq.s32.totalorder %s15, 1
    %p33 = por %p31, %p32
    %p34 = scmp.ne.s32.totalorder %s23, %s24
    %p35 = scmp.eq.s32.totalorder %s15, 0
    %p36 = por %p34, %p35
    %p37 = scmp.ne.s32.totalorder %s23, %s24
    %p38 = scmp.eq.s32.totalorder %s16, 1
    %p39 = por %p37, %p38
    %p41 = scmp.ne.s32.totalorder %s24, %s40
    %p42 = scmp.eq.s32.totalorder %s16, 0
    %p43 = por %p41, %p42
    %s44 = ssub.s32 %s10, %s17
    %p45 = scmp.eq.s32.totalorder %s44, 0
    %s47 = sadd.s32 %s46, 1
    %s48 = scalar_select %p45, %s46, %s47
    %p51 = pneg %p45
    %p52 = scmp.eq.s32.totalorder %s10, 1
    %p53 = por %p51, %p52
    %p54 = scmp.ne.s32.totalorder %s46, %s49
    %p55 = scmp.eq.s32.totalorder %s10, 0
    %p56 = por %p54, %p55
    %p57 = scmp.ne.s32.totalorder %s46, %s49
    %p58 = scmp.eq.s32.totalorder %s15, 1
    %p59 = por %p57, %p58
    %p60 = scmp.ne.s32.totalorder %s49, %s50
    %p61 = scmp.eq.s32.totalorder %s15, 0
    %p62 = por %p60, %p61
    %p63 = scmp.ne.s32.totalorder %s49, %s50
    %p64 = scmp.eq.s32.totalorder %s16, 1
    %p65 = por %p63, %p64
    %p67 = scmp.ne.s32.totalorder %s50, %s66
    %p68 = scmp.eq.s32.totalorder %s16, 0
    %p69 = por %p67, %p68
    %s71 = sadd.s32 %s70, 1
    %p74 = scmp.eq.s32.totalorder %s10, 1
    %p75 = scmp.ne.s32.totalorder %s70, %s72
    %p76 = scmp.eq.s32.totalorder %s10, 0
    %p77 = por %p75, %p76
    %p78 = scmp.ne.s32.totalorder %s70, %s72
    %p79 = scmp.eq.s32.totalorder %s15, 1
    %p80 = por %p78, %p79
    %p81 = scmp.ne.s32.totalorder %s72, %s73
    %p82 = scmp.eq.s32.totalorder %s15, 0
    %p83 = por %p81, %p82
    %p84 = scmp.ne.s32.totalorder %s72, %s73
    %p85 = scmp.eq.s32.totalorder %s16, 1
    %p86 = por %p84, %p85
    %p88 = scmp.ne.s32.totalorder %s73, %s87
    %p89 = scmp.eq.s32.totalorder %s16, 0
    %p90 = por %p88, %p89
    %s92 = sadd.s32 %s91, 1
    %p95 = scmp.eq.s32.totalorder %s10, 1
    %p96 = scmp.ne.s32.totalorder %s91, %s93
    %p97 = scmp.eq.s32.totalorder %s10, 0
    %p98 = por %p96, %p97
    %p99 = scmp.ne.s32.totalorder %s91, %s93
    %p100 = scmp.eq.s32.totalorder %s15, 1
    %p101 = por %p99, %p100
    %p102 = scmp.ne.s32.totalorder %s93, %s94
    %p103 = scmp.eq.s32.totalorder %s15, 0
    %p104 = por %p102, %p103
    %p105 = scmp.ne.s32.totalorder %s93, %s94
    %p106 = scmp.eq.s32.totalorder %s16, 1
    %p107 = por %p105, %p106
    %p109 = scmp.ne.s32.totalorder %s94, %s108
    %p110 = scmp.eq.s32.totalorder %s16, 0
    %p111 = por %p109, %p110
    %s112 = ssub.s32 %s10, %s17
    %p113 = scmp.eq.s32.totalorder %s112, 0
    %s115 = sadd.s32 %s114, 1
    %s116 = scalar_select %p113, %s114, %s115
    %p119 = pneg %p113
    %p120 = scmp.eq.s32.totalorder %s10, 1
    %p121 = por %p119, %p120
    %p122 = scmp.ne.s32.totalorder %s114, %s117
    %p123 = scmp.eq.s32.totalorder %s10, 0
    %p124 = por %p122, %p123
    %p125 = scmp.ne.s32.totalorder %s114, %s117
    %p126 = scmp.eq.s32.totalorder %s15, 1
    %p127 = por %p125, %p126
    %p128 = scmp.ne.s32.totalorder %s117, %s118
    %p129 = scmp.eq.s32.totalorder %s15, 0
    %p130 = por %p128, %p129
    %p131 = scmp.ne.s32.totalorder %s117, %s118
    %p132 = scmp.eq.s32.totalorder %s16, 1
    %p133 = por %p131, %p132
    %p135 = scmp.ne.s32.totalorder %s118, %s134
    %p136 = scmp.eq.s32.totalorder %s16, 0
    %p137 = por %p135, %p136
    %p138 = scmp.le.s32.totalorder 1, %s10
    %p139 = scmp.lt.s32.totalorder %s10, 3
    %p140 = pnand %p138, %p139
    %p141 = pneg %p140
    // Predicated region
    $region9: #{smiles_transformer_forward.8} parent=5 // pred_check
      _
    $region10: #{smiles_transformer_forward.8} parent=5 // pred_check_branch
      %143 = sbr.rel (%p140) target = $region12
    $region11: #{smiles_transformer_forward.8} parent=5 // pred_region
      %s144 = ssub.s32 %s10, 1
      // Predicated region
      $region13: #{smiles_transformer_forward.8} parent=11 // pred_check
        %p145 = pneg %p83
      $region14: #{smiles_transformer_forward.8} parent=11 // pred_check_branch
        %147 = sbr.rel (%p145) target = $region16
      $region15: #{smiles_transformer_forward.8} parent=11 // pred_region
        _
      $region16: #{smiles_transformer_forward.8} parent=11 // pred_fallthru
        _
      // Predicated region
      $region17: #{smiles_transformer_forward.8} parent=11 // pred_check
        %p148 = pneg %p104
      $region18: #{smiles_transformer_forward.8} parent=11 // pred_check_branch
        %150 = sbr.rel (%p148) target = $region20
      $region19: #{smiles_transformer_forward.8} parent=11 // pred_region
        _
      $region20: #{smiles_transformer_forward.8} parent=11 // pred_fallthru
        _
    $region12: #{smiles_transformer_forward.8} parent=5 // pred_fallthru
      _
    %p151 = scmp.lt.s32.totalorder %s10, 2
    // Predicated region
    $region21: #{smiles_transformer_forward.8} parent=5 // pred_check
      %p152 = pneg %p151
    $region22: #{smiles_transformer_forward.8} parent=5 // pred_check_branch
      %154 = sbr.rel (%p152) target = $region24
    $region23: #{smiles_transformer_forward.8} parent=5 // pred_region
      // Predicated region
      $region25: #{smiles_transformer_forward.8} parent=23 // pred_check
        %p155 = pneg %p30
      $region26: #{smiles_transformer_forward.8} parent=23 // pred_check_branch
        %157 = sbr.rel (%p155) target = $region28
      $region27: #{smiles_transformer_forward.8} parent=23 // pred_region
        %p158 = scmp.lt.s32.totalorder %s10, 1
        %s159 = scalar_select %p158, %s10, 1
        %s160 = smul.addr %s159, 8
        %s161 = scalar_lea.vmem %s0, %s160
      $region28: #{smiles_transformer_forward.8} parent=23 // pred_fallthru
        _
      // Predicated region
      $region29: #{smiles_transformer_forward.8} parent=23 // pred_check
        %p162 = pneg %p56
      $region30: #{smiles_transformer_forward.8} parent=23 // pred_check_branch
        %164 = sbr.rel (%p162) target = $region32
      $region31: #{smiles_transformer_forward.8} parent=23 // pred_region
        %p165 = scmp.lt.s32.totalorder %s10, 1
        %s166 = scalar_select %p165, %s10, 1
        %s167 = smul.addr %s166, 8
        %s168 = scalar_lea.vmem %s1, %s167
      $region32: #{smiles_transformer_forward.8} parent=23 // pred_fallthru
        _
    $region24: #{smiles_transformer_forward.8} parent=5 // pred_fallthru
      _
    %p169 = scmp.le.s32.totalorder 1, %s10
    %p170 = scmp.lt.s32.totalorder %s10, 3
    %p171 = pnand %p169, %p170
    %p172 = pneg %p171
    // Predicated region
    $region33: #{smiles_transformer_forward.8} parent=5 // pred_check
      _
    $region34: #{smiles_transformer_forward.8} parent=5 // pred_check_branch
      %174 = sbr.rel (%p171) target = $region36
    $region35: #{smiles_transformer_forward.8} parent=5 // pred_region
      %s175 = ssub.s32 %s10, 1
      %p176 = scmp.lt.s32.totalorder %s15, 1
      %s177 = scalar_select %p176, %s15, 1
      %s178 = smul.addr %s177, 8
      %s179 = scalar_lea.vmem %s0, %s178
      %p180 = pneg %p36
      %p181 = pneg %p33
      %p182 = scmp.lt.s32.totalorder %s15, 1
      %s183 = scalar_select %p182, %s15, 1
      %s184 = smul.addr %s183, 8
      %s185 = scalar_lea.vmem %s1, %s184
      %p186 = pneg %p62
      %p187 = pneg %p59
      %p188 = pneg %p83
      %p189 = pneg %p80
      %p190 = pneg %p104
      %p191 = pneg %p101
      %p192 = pneg %p130
      %p193 = pneg %p127
      %p194 = scmp.lt.s32.totalorder %s15, 1
      %s195 = scalar_select %p194, %s15, 1
      %s196 = scalar_lea.vmem %s4, %s195
      %p197 = scmp.lt.s32.totalorder %s15, 1
      %s198 = scalar_select %p197, %s15, 1
      %s199 = smul.addr %s198, 8
      %s200 = scalar_lea.vmem %s0, %s199
      %p201 = scmp.lt.s32.totalorder %s15, 1
      %s202 = scalar_select %p201, %s15, 1
      %s203 = smul.addr %s202, 8
      %s204 = scalar_lea.vmem %s1, %s203
      %p205 = scmp.lt.s32.totalorder %s15, 1
      %s206 = scalar_select %p205, %s15, 1
      %s207 = scalar_lea.vmem %s4, %s206
      %v208 = vld [vmem:[%s200] sm:$0xff]
      %v209 = vld [vmem:[%s2] sm:$0x1]
      %v210 = vld [vmem:[%s3] sm:$0x1]
      %vm211 = vcmask 261120
      %v212 = vsel %vm211, %v208, 0.0
      %213 = vadd.xlane.f32.xlu0 %v212
      %v214 = vpop.xlane.xlu0 %213
      %v215 = vrcp.pop 32.0
      %v216 = vmul.f32 32.0, %v215
      %v217 = vsub.f32 1.0, %v216
      %v218 = vmul.f32 %v215, %v217
      %v219 = vadd.f32 %v215, %v218
      %vm220 = vweird.f32 %v215
      %v221 = vsel %vm220, %v215, %v219
      %v222 = vmul.f32 %v214, %v221
      %v223 = vsub.f32 %v208, %v222
      %v224 = vmul.f32 %v223, %v223
      %v225 = vsel %vm211, %v224, 0.0
      %226 = vadd.xlane.f32.xlu0 %v225
      %v227 = vpop.xlane.xlu0 %226
      %v228 = vmul.f32 %v227, %v221
      %v229 = vadd.f32 %v228, 1e-05
      %v230 = vrsqrt.pop %v229
      %v231 = vmul.f32 %v230, %v229
      %v232 = vmul.f32 %v231, %v230
      %v233 = vmul.f32 0.5, %v232
      %v234 = vsub.f32 1.5, %v233
      %v235 = vmul.f32 %v230, %v234
      %vm236 = vweird.f32 %v229
      %vm237 = vweird.f32 %v230
      %vm238 = vmor %vm236, %vm237
      %v239 = vsel %vm238, %v230, %v235
      %v240 = vmul.f32 %v223, %v239
      %v242 = vperm.slane %v209, 0
      %v244 = vmul.f32 %v240, %v242
      %v246 = vperm.slane %v210, 0
      %v248 = vadd.f32 %v244, %v246
      %v249 = vld [vmem:[%s204] sm:$0xff]
      %vm250 = vcmask 7168
      %v251 = vsel %vm250, %v249, 0.0
      %v252 = vrot.slane %v251, 4
      %v253 = vadd.f32 %v251, %v252
      %v254 = vrot.slane %v253, 2
      %v255 = vadd.f32 %v253, %v254
      %v256 = vrot.slane %v255, 1
      %v257 = vadd.f32 %v255, %v256
      %v258 = vmax.f32 %v257, 1.0
      %260 = vset.pattern.permute.xlu0 0
      %261 = vperm.xlu0 %260, %v249
      %v262 = vpop.permute.xlu0 %261
      %v264 = vmul.f32 %v248, %v262
      %v265 = vsel %vm211, %v264, 0.0
      %v266 = vrot.slane %v265, 4
      %v267 = vadd.f32 %v265, %v266
      %v268 = vrot.slane %v267, 2
      %v269 = vadd.f32 %v267, %v268
      %v270 = vrot.slane %v269, 1
      %v271 = vadd.f32 %v269, %v270
      %v272 = vrcp.pop %v258
      %274 = vset.pattern.permute.xlu0 0
      %275 = vperm.xlu0 %274, %v272
      %v276 = vpop.permute.xlu0 %275
      %v278 = vmul.f32 %v271, %v276
      %vm279 = vcmask 253952
      %280 = vst.msk [vmem:[%s207] sm:$0x1] %vm279, %v278
      %p281 = scmp.lt.s32.totalorder %s15, 1
      %s282 = scalar_select %p281, %s15, 1
      %s283 = scalar_lea.vmem %s4, %s282
      // Predicated region
      $region37: #{smiles_transformer_forward.8} parent=35 // pred_check
        %p284 = pneg %p127
      $region38: #{smiles_transformer_forward.8} parent=35 // pred_check_branch
        %286 = sbr.rel (%p284) target = $region40
      $region39: #{smiles_transformer_forward.8} parent=35 // pred_region
        _
      $region40: #{smiles_transformer_forward.8} parent=35 // pred_fallthru
        _
    $region36: #{smiles_transformer_forward.8} parent=5 // pred_fallthru
      _
    %p287 = scmp.le.s32.totalorder 2, %s10
    // Predicated region
    $region41: #{smiles_transformer_forward.8} parent=5 // pred_check
      %p288 = pneg %p287
    $region42: #{smiles_transformer_forward.8} parent=5 // pred_check_branch
      %290 = sbr.rel (%p288) target = $region44
    $region43: #{smiles_transformer_forward.8} parent=5 // pred_region
      %s291 = ssub.s32 %s10, 2
      // Predicated region
      $region45: #{smiles_transformer_forward.8} parent=43 // pred_check
        %p292 = pneg %p133
      $region46: #{smiles_transformer_forward.8} parent=43 // pred_check_branch
        %294 = sbr.rel (%p292) target = $region48
      $region47: #{smiles_transformer_forward.8} parent=43 // pred_region
        %p295 = scmp.lt.s32.totalorder %s16, 1
        %s296 = scalar_select %p295, %s16, 1
        %s297 = scalar_lea.vmem %s4, %s296
      $region48: #{smiles_transformer_forward.8} parent=43 // pred_fallthru
        _
    $region44: #{smiles_transformer_forward.8} parent=5 // pred_fallthru
      _
  $region6: #{smiles_transformer_forward.8} parent=0 // loop_footer
    %s14 = sadd.s32 1, %s10
  $region7: #{smiles_transformer_forward.8} parent=0 // loop_footer_branch
    %9 = sbr.rel target = $region3
  $region8: #{smiles_transformer_forward.8} parent=0 // loop_exit
    _

// kernel: smiles_transformer_forward.11
$region0: #{smiles_transformer_forward.11}
  #allocation0 [shape = 'u32[]', space=smem, size = 0x4, offset = 0x4, fixed_abs, tag = 'smem constant byte address 0x4 - core index']
  #allocation1 [shape = 'u32[72,128]{1,0:T(1,128)}', space=vmem, size = 0x9000, scoped, tag = 'internal scratch']
  %s0 = inlined_call_operand.vmem [shape: f32[2,9,32], index: 0, kind: input, shape index: {}]
  %s1 = inlined_call_operand.vmem [shape: s32[2,8,1], index: 1, kind: input, shape index: {}]
  %s2 = inlined_call_operand.vmem [shape: f32[16,32], index: 2, kind: input, shape index: {}]
  %s3 = inlined_call_operand.vmem [shape: f32[1,32], index: 3, kind: input, shape index: {}]
  %s4 = inlined_call_operand.vmem [shape: f32[1,32], index: 4, kind: input, shape index: {}]
  %s5 = inlined_call_operand.vmem [shape: f32[2,1,1], index: 5, kind: output, shape index: {0}]
  %s6 = inlined_call_operand.vmem [shape: f32[2,1,1], index: 6, kind: output, shape index: {1}]
  %7 = xla_tuple %s5, %s6
  %s8 = sld [smem:[#allocation0]]
  $region61: #{smiles_transformer_forward.11} parent=0
    _
  %s10 = ssub.s32 1, %s8
  %s11 = scalar_select 0, %s10, %s8
  loop: start=0, step=1, limit=4
  $region2: #{smiles_transformer_forward.11} parent=0 // loop_pre_header
    _
  $region3: #{smiles_transformer_forward.11} parent=0 // loop_header
    %s13 = sphi 0, %s17
    %p14 = scmp.ge.s32.totalorder %s13, 4
    %s23 = sphi 0, %s25
    %s26 = sphi 0, %s23
    %s27 = sphi 0, %s26
    %s43 = sphi 0, %s27
    %s49 = sphi 0, %s51
    %s52 = sphi 0, %s49
    %s53 = sphi 0, %s52
    %s69 = sphi 0, %s53
    %s73 = sphi 0, %s73
    %s75 = sphi 0, %s73
    %s76 = sphi 0, %s75
    %s90 = sphi 0, %s76
    %s94 = sphi 0, %s94
    %s96 = sphi 0, %s94
    %s97 = sphi 0, %s96
    %s111 = sphi 0, %s97
    %s115 = sphi 0, %s115
    %s117 = sphi 0, %s115
    %s118 = sphi 0, %s117
    %s132 = sphi 0, %s118
    %s138 = sphi 0, %s140
    %s141 = sphi 0, %s138
    %s142 = sphi 0, %s141
    %s158 = sphi 0, %s142
    %s164 = sphi 0, %s166
    %s167 = sphi 0, %s164
    %s168 = sphi 0, %s167
    %s184 = sphi 0, %s168
  $region4: #{smiles_transformer_forward.11} parent=0 // loop_header_branch
    %16 = sbr.rel (%p14) target = $region8
  $region5: #{smiles_transformer_forward.11} parent=0 // loop_body
    %s18 = ssub.s32 %s13, 1
    %s19 = ssub.s32 %s13, 2
    %s20 = sadd.s32 %s13, 1
    %s21 = ssub.s32 %s13, %s20
    %p22 = scmp.eq.s32.totalorder %s21, 0
    %s24 = sadd.s32 %s23, 1
    %s25 = scalar_select %p22, %s23, %s24
    %p28 = pneg %p22
    %p29 = scmp.eq.s32.totalorder %s13, 1
    %p30 = por %p28, %p29
    %p31 = scmp.ne.s32.totalorder %s23, %s26
    %p32 = scmp.eq.s32.totalorder %s13, 0
    %p33 = por %p31, %p32
    %p34 = scmp.ne.s32.totalorder %s23, %s26
    %p35 = scmp.eq.s32.totalorder %s18, 1
    %p36 = por %p34, %p35
    %p37 = scmp.ne.s32.totalorder %s26, %s27
    %p38 = scmp.eq.s32.totalorder %s18, 0
    %p39 = por %p37, %p38
    %p40 = scmp.ne.s32.totalorder %s26, %s27
    %p41 = scmp.eq.s32.totalorder %s19, 1
    %p42 = por %p40, %p41
    %p44 = scmp.ne.s32.totalorder %s27, %s43
    %p45 = scmp.eq.s32.totalorder %s19, 0
    %p46 = por %p44, %p45
    %s47 = ssub.s32 %s13, %s20
    %p48 = scmp.eq.s32.totalorder %s47, 0
    %s50 = sadd.s32 %s49, 1
    %s51 = scalar_select %p48, %s49, %s50
    %p54 = pneg %p48
    %p55 = scmp.eq.s32.totalorder %s13, 1
    %p56 = por %p54, %p55
    %p57 = scmp.ne.s32.totalorder %s49, %s52
    %p58 = scmp.eq.s32.totalorder %s13, 0
    %p59 = por %p57, %p58
    %p60 = scmp.ne.s32.totalorder %s49, %s52
    %p61 = scmp.eq.s32.totalorder %s18, 1
    %p62 = por %p60, %p61
    %p63 = scmp.ne.s32.totalorder %s52, %s53
    %p64 = scmp.eq.s32.totalorder %s18, 0
    %p65 = por %p63, %p64
    %p66 = scmp.ne.s32.totalorder %s52, %s53
    %p67 = scmp.eq.s32.totalorder %s19, 1
    %p68 = por %p66, %p67
    %p70 = scmp.ne.s32.totalorder %s53, %s69
    %p71 = scmp.eq.s32.totalorder %s19, 0
    %p72 = por %p70, %p71
    %s74 = sadd.s32 %s73, 1
    %p77 = scmp.eq.s32.totalorder %s13, 1
    %p78 = scmp.ne.s32.totalorder %s73, %s75
    %p79 = scmp.eq.s32.totalorder %s13, 0
    %p80 = por %p78, %p79
    %p81 = scmp.ne.s32.totalorder %s73, %s75
    %p82 = scmp.eq.s32.totalorder %s18, 1
    %p83 = por %p81, %p82
    %p84 = scmp.ne.s32.totalorder %s75, %s76
    %p85 = scmp.eq.s32.totalorder %s18, 0
    %p86 = por %p84, %p85
    %p87 = scmp.ne.s32.totalorder %s75, %s76
    %p88 = scmp.eq.s32.totalorder %s19, 1
    %p89 = por %p87, %p88
    %p91 = scmp.ne.s32.totalorder %s76, %s90
    %p92 = scmp.eq.s32.totalorder %s19, 0
    %p93 = por %p91, %p92
    %s95 = sadd.s32 %s94, 1
    %p98 = scmp.eq.s32.totalorder %s13, 1
    %p99 = scmp.ne.s32.totalorder %s94, %s96
    %p100 = scmp.eq.s32.totalorder %s13, 0
    %p101 = por %p99, %p100
    %p102 = scmp.ne.s32.totalorder %s94, %s96
    %p103 = scmp.eq.s32.totalorder %s18, 1
    %p104 = por %p102, %p103
    %p105 = scmp.ne.s32.totalorder %s96, %s97
    %p106 = scmp.eq.s32.totalorder %s18, 0
    %p107 = por %p105, %p106
    %p108 = scmp.ne.s32.totalorder %s96, %s97
    %p109 = scmp.eq.s32.totalorder %s19, 1
    %p110 = por %p108, %p109
    %p112 = scmp.ne.s32.totalorder %s97, %s111
    %p113 = scmp.eq.s32.totalorder %s19, 0
    %p114 = por %p112, %p113
    %s116 = sadd.s32 %s115, 1
    %p119 = scmp.eq.s32.totalorder %s13, 1
    %p120 = scmp.ne.s32.totalorder %s115, %s117
    %p121 = scmp.eq.s32.totalorder %s13, 0
    %p122 = por %p120, %p121
    %p123 = scmp.ne.s32.totalorder %s115, %s117
    %p124 = scmp.eq.s32.totalorder %s18, 1
    %p125 = por %p123, %p124
    %p126 = scmp.ne.s32.totalorder %s117, %s118
    %p127 = scmp.eq.s32.totalorder %s18, 0
    %p128 = por %p126, %p127
    %p129 = scmp.ne.s32.totalorder %s117, %s118
    %p130 = scmp.eq.s32.totalorder %s19, 1
    %p131 = por %p129, %p130
    %p133 = scmp.ne.s32.totalorder %s118, %s132
    %p134 = scmp.eq.s32.totalorder %s19, 0
    %p135 = por %p133, %p134
    %s136 = ssub.s32 %s13, %s20
    %p137 = scmp.eq.s32.totalorder %s136, 0
    %s139 = sadd.s32 %s138, 1
    %s140 = scalar_select %p137, %s138, %s139
    %p143 = pneg %p137
    %p144 = scmp.eq.s32.totalorder %s13, 1
    %p145 = por %p143, %p144
    %p146 = scmp.ne.s32.totalorder %s138, %s141
    %p147 = scmp.eq.s32.totalorder %s13, 0
    %p148 = por %p146, %p147
    %p149 = scmp.ne.s32.totalorder %s138, %s141
    %p150 = scmp.eq.s32.totalorder %s18, 1
    %p151 = por %p149, %p150
    %p152 = scmp.ne.s32.totalorder %s141, %s142
    %p153 = scmp.eq.s32.totalorder %s18, 0
    %p154 = por %p152, %p153
    %p155 = scmp.ne.s32.totalorder %s141, %s142
    %p156 = scmp.eq.s32.totalorder %s19, 1
    %p157 = por %p155, %p156
    %p159 = scmp.ne.s32.totalorder %s142, %s158
    %p160 = scmp.eq.s32.totalorder %s19, 0
    %p161 = por %p159, %p160
    %s162 = ssub.s32 %s13, %s20
    %p163 = scmp.eq.s32.totalorder %s162, 0
    %s165 = sadd.s32 %s164, 1
    %s166 = scalar_select %p163, %s164, %s165
    %p169 = pneg %p163
    %p170 = scmp.eq.s32.totalorder %s13, 1
    %p171 = por %p169, %p170
    %p172 = scmp.ne.s32.totalorder %s164, %s167
    %p173 = scmp.eq.s32.totalorder %s13, 0
    %p174 = por %p172, %p173
    %p175 = scmp.ne.s32.totalorder %s164, %s167
    %p176 = scmp.eq.s32.totalorder %s18, 1
    %p177 = por %p175, %p176
    %p178 = scmp.ne.s32.totalorder %s167, %s168
    %p179 = scmp.eq.s32.totalorder %s18, 0
    %p180 = por %p178, %p179
    %p181 = scmp.ne.s32.totalorder %s167, %s168
    %p182 = scmp.eq.s32.totalorder %s19, 1
    %p183 = por %p181, %p182
    %p185 = scmp.ne.s32.totalorder %s168, %s184
    %p186 = scmp.eq.s32.totalorder %s19, 0
    %p187 = por %p185, %p186
    %p188 = scmp.le.s32.totalorder 1, %s13
    %p189 = scmp.lt.s32.totalorder %s13, 3
    %p190 = pnand %p188, %p189
    %p191 = pneg %p190
    // Predicated region
    $region9: #{smiles_transformer_forward.11} parent=5 // pred_check
      _
    $region10: #{smiles_transformer_forward.11} parent=5 // pred_check_branch
      %193 = sbr.rel (%p190) target = $region12
    $region11: #{smiles_transformer_forward.11} parent=5 // pred_region
      %s194 = ssub.s32 %s13, 1
      // Predicated region
      $region13: #{smiles_transformer_forward.11} parent=11 // pred_check
        %p195 = pneg %p86
      $region14: #{smiles_transformer_forward.11} parent=11 // pred_check_branch
        %197 = sbr.rel (%p195) target = $region16
      $region15: #{smiles_transformer_forward.11} parent=11 // pred_region
        _
      $region16: #{smiles_transformer_forward.11} parent=11 // pred_fallthru
        _
      // Predicated region
      $region17: #{smiles_transformer_forward.11} parent=11 // pred_check
        %p198 = pneg %p107
      $region18: #{smiles_transformer_forward.11} parent=11 // pred_check_branch
        %200 = sbr.rel (%p198) target = $region20
      $region19: #{smiles_transformer_forward.11} parent=11 // pred_region
        _
      $region20: #{smiles_transformer_forward.11} parent=11 // pred_fallthru
        _
      // Predicated region
      $region21: #{smiles_transformer_forward.11} parent=11 // pred_check
        %p201 = pneg %p128
      $region22: #{smiles_transformer_forward.11} parent=11 // pred_check_branch
        %203 = sbr.rel (%p201) target = $region24
      $region23: #{smiles_transformer_forward.11} parent=11 // pred_region
        _
      $region24: #{smiles_transformer_forward.11} parent=11 // pred_fallthru
        _
    $region12: #{smiles_transformer_forward.11} parent=5 // pred_fallthru
      _
    %p204 = scmp.lt.s32.totalorder %s13, 2
    // Predicated region
    $region25: #{smiles_transformer_forward.11} parent=5 // pred_check
      %p205 = pneg %p204
    $region26: #{smiles_transformer_forward.11} parent=5 // pred_check_branch
      %207 = sbr.rel (%p205) target = $region28
    $region27: #{smiles_transformer_forward.11} parent=5 // pred_region
      // Predicated region
      $region29: #{smiles_transformer_forward.11} parent=27 // pred_check
        %p208 = pneg %p33
      $region30: #{smiles_transformer_forward.11} parent=27 // pred_check_branch
        %210 = sbr.rel (%p208) target = $region32
      $region31: #{smiles_transformer_forward.11} parent=27 // pred_region
        %p211 = scmp.lt.s32.totalorder %s13, 1
        %s212 = scalar_select %p211, %s13, 1
        %s213 = smul.addr %s212, 2
        %s214 = smul.addr %s213, 8
        %s215 = scalar_lea.vmem %s0, %s214
      $region32: #{smiles_transformer_forward.11} parent=27 // pred_fallthru
        _
      // Predicated region
      $region33: #{smiles_transformer_forward.11} parent=27 // pred_check
        %p216 = pneg %p59
      $region34: #{smiles_transformer_forward.11} parent=27 // pred_check_branch
        %218 = sbr.rel (%p216) target = $region36
      $region35: #{smiles_transformer_forward.11} parent=27 // pred_region
        %p219 = scmp.lt.s32.totalorder %s13, 1
        %s220 = scalar_select %p219, %s13, 1
        %s221 = smul.addr %s220, 8
        %s222 = scalar_lea.vmem %s1, %s221
      $region36: #{smiles_transformer_forward.11} parent=27 // pred_fallthru
        _
    $region28: #{smiles_transformer_forward.11} parent=5 // pred_fallthru
      _
    %p223 = scmp.le.s32.totalorder 1, %s13
    %p224 = scmp.lt.s32.totalorder %s13, 3
    %p225 = pnand %p223, %p224
    %p226 = pneg %p225
    // Predicated region
    $region37: #{smiles_transformer_forward.11} parent=5 // pred_check
      _
    $region38: #{smiles_transformer_forward.11} parent=5 // pred_check_branch
      %228 = sbr.rel (%p225) target = $region40
    $region39: #{smiles_transformer_forward.11} parent=5 // pred_region
      %s229 = ssub.s32 %s13, 1
      %p230 = scmp.lt.s32.totalorder %s18, 1
      %s231 = scalar_select %p230, %s18, 1
      %s232 = smul.addr %s231, 2
      %s233 = smul.addr %s232, 8
      %s234 = scalar_lea.vmem %s0, %s233
      %p235 = pneg %p39
      %p236 = pneg %p36
      %p237 = scmp.lt.s32.totalorder %s18, 1
      %s238 = scalar_select %p237, %s18, 1
      %s239 = smul.addr %s238, 8
      %s240 = scalar_lea.vmem %s1, %s239
      %p241 = pneg %p65
      %p242 = pneg %p62
      %p243 = pneg %p86
      %p244 = pneg %p83
      %p245 = pneg %p107
      %p246 = pneg %p104
      %p247 = pneg %p128
      %p248 = pneg %p125
      %p249 = pneg %p154
      %p250 = pneg %p151
      %p251 = scmp.lt.s32.totalorder %s18, 1
      %s252 = scalar_select %p251, %s18, 1
      %s253 = scalar_lea.vmem %s5, %s252
      %p254 = pneg %p180
      %p255 = pneg %p177
      %p256 = scmp.lt.s32.totalorder %s18, 1
      %s257 = scalar_select %p256, %s18, 1
      %s258 = scalar_lea.vmem %s6, %s257
      %p259 = scmp.lt.s32.totalorder %s18, 1
      %s260 = scalar_select %p259, %s18, 1
      %s261 = smul.addr %s260, 2
      %s262 = smul.addr %s261, 8
      %s263 = scalar_lea.vmem %s0, %s262
      %p264 = scmp.lt.s32.totalorder %s18, 1
      %s265 = scalar_select %p264, %s18, 1
      %s266 = smul.addr %s265, 8
      %s267 = scalar_lea.vmem %s1, %s266
      %p268 = scmp.lt.s32.totalorder %s18, 1
      %s269 = scalar_select %p268, %s18, 1
      %s270 = scalar_lea.vmem %s5, %s269
      %p271 = scmp.lt.s32.totalorder %s18, 1
      %s272 = scalar_select %p271, %s18, 1
      %s273 = scalar_lea.vmem %s6, %s272
      %v275 = vld [vmem:[%s263] sm:$0xff]
      %v276 = vld [vmem:[%s3] sm:$0x1]
      %v277 = vld [vmem:[%s4] sm:$0x1]
      %vm278 = vcmask 261120
      %v279 = vsel %vm278, %v275, 0.0
      %280 = vadd.xlane.f32.xlu0 %v279
      %v281 = vpop.xlane.xlu0 %280
      %v282 = vrcp.pop 32.0
      %v283 = vmul.f32 32.0, %v282
      %v284 = vsub.f32 1.0, %v283
      %v285 = vmul.f32 %v282, %v284
      %v286 = vadd.f32 %v282, %v285
      %vm287 = vweird.f32 %v282
      %v288 = vsel %vm287, %v282, %v286
      %v289 = vmul.f32 %v281, %v288
      %v290 = vsub.f32 %v275, %v289
      %v291 = vmul.f32 %v290, %v290
      %v292 = vsel %vm278, %v291, 0.0
      %293 = vadd.xlane.f32.xlu0 %v292
      %v294 = vpop.xlane.xlu0 %293
      %v295 = vmul.f32 %v294, %v288
      %v296 = vadd.f32 %v295, 1e-05
      %v297 = vrsqrt.pop %v296
      %v298 = vmul.f32 %v297, %v296
      %v299 = vmul.f32 %v298, %v297
      %v300 = vmul.f32 0.5, %v299
      %v301 = vsub.f32 1.5, %v300
      %v302 = vmul.f32 %v297, %v301
      %vm303 = vweird.f32 %v296
      %vm304 = vweird.f32 %v297
      %vm305 = vmor %vm303, %vm304
      %v306 = vsel %vm305, %v297, %v302
      %v307 = vmul.f32 %v290, %v306
      %v309 = vperm.slane %v276, 0
      %v311 = vmul.f32 %v307, %v309
      %v313 = vperm.slane %v277, 0
      %v315 = vadd.f32 %v311, %v313
      %v316 = vpack.c.bf16 %v315, %v315
      %v317 = vld [vmem:[%s2] sm:$0xff]
      %v318 = vld [vmem:[%s2 + $0x8] sm:$0xff]
      %v319 = vpack.c.bf16 %v318, %v317
      %v321 = vsel %vm278, %v316, 0
      %v324 = vsel %vm278, %v319, 0
      %326 = vmatpush.bf16.xpose.msra.mxu0 0
      %327 = vmatpush.bf16.xpose.msra.mxu0 0
      %328 = vmatpush.bf16.xpose.msra.mxu0 0
      %329 = vmatpush.bf16.xpose.msra.mxu0 0
      %330 = vmatpush.bf16.xpose.msra.mxu0 0
      %331 = vmatpush.bf16.xpose.msra.mxu0 0
      %332 = vmatpush.bf16.xpose.msra.mxu0 0
      %333 = vmatpush.bf16.xpose.msra.mxu0 %v324
      %334 = vmatmul.bf16.gmra.mxu0 %v321
      %v335 = vpop.f32.mrf.mxu0
      %v336 = vadd.f32 0.0, %v335
      %v337 = vpop.f32.mrf.mxu0
      %338 = vdwg.mxu0
      %v339 = vld [vmem:[%s267] sm:$0xff]
      %vm340 = vcmask 130048
      %v341 = vsel %vm340, %v336, -inf
      %342 = vmax.xlane.f32.xlu0 %v341
      %v343 = vpop.xlane.xlu0 %342
      %v344 = vsub.f32 %v336, %v343
      %v345 = vmul.f32 %v344, 1.442695
      %v346 = vpow.pop %v345
      %v347 = vsel %vm340, %v346, 0.0
      %348 = vadd.xlane.f32.xlu0 %v347
      %v349 = vpop.xlane.xlu0 %348
      %v350 = vlog2.pop %v349
      %v351 = vmul.f32 %v350, 0.6931472
      %v352 = vadd.f32 %v351, %v343
      %v353 = vlaneseq
      %v354 = vand.u32 %v353, 127
      %355 = vset.pattern.permute.xlu0 0
      %356 = vperm.xlu0 %355, %v339
      %v357 = vpop.permute.xlu0 %356
      %vm358 = vcmp.eq.s32.totalorder %v354, %v357
      %v359 = vsel %vm358, %v336, 0.0
      %v360 = vsel %vm340, %v359, 0.0
      %361 = vadd.xlane.f32.xlu0 %v360
      %v362 = vpop.xlane.xlu0 %361
      %v363 = vsub.f32 %v352, %v362
      %vm364 = vcmp.ne.s32.totalorder %v339, 0
      %v365 = vsel %vm364, 1, 0
      %v366 = vcvt.s32.f32 %v365
      %v367 = vmul.f32 %v363, %v366
      %vm368 = vcmask 7168
      %v369 = vsel %vm368, %v367, 0.0
      %v370 = vrot.slane %v369, 4
      %v371 = vadd.f32 %v369, %v370
      %v372 = vrot.slane %v371, 2
      %v373 = vadd.f32 %v371, %v372
      %v374 = vrot.slane %v373, 1
      %v375 = vadd.f32 %v373, %v374
      %vm376 = vcmask 0
      %377 = vst.msk [vmem:[%s270] sm:$0x1] %vm376, %v375
      %v378 = vsel %vm368, %v366, 0.0
      %v379 = vrot.slane %v378, 4
      %v380 = vadd.f32 %v378, %v379
      %v381 = vrot.slane %v380, 2
      %v382 = vadd.f32 %v380, %v381
      %v383 = vrot.slane %v382, 1
      %v384 = vadd.f32 %v382, %v383
      %385 = vst.msk [vmem:[%s273] sm:$0x1] %vm376, %v384
      %p386 = scmp.lt.s32.totalorder %s18, 1
      %s387 = scalar_select %p386, %s18, 1
      %s388 = scalar_lea.vmem %s5, %s387
      %p389 = scmp.lt.s32.totalorder %s18, 1
      %s390 = scalar_select %p389, %s18, 1
      %s391 = scalar_lea.vmem %s6, %s390
      // Predicated region
      $region41: #{smiles_transformer_forward.11} parent=39 // pred_check
        %p392 = pneg %p151
      $region42: #{smiles_transformer_forward.11} parent=39 // pred_check_branch
        %394 = sbr.rel (%p392) target = $region44
      $region43: #{smiles_transformer_forward.11} parent=39 // pred_region
        _
      $region44: #{smiles_transformer_forward.11} parent=39 // pred_fallthru
        _
      // Predicated region
      $region45: #{smiles_transformer_forward.11} parent=39 // pred_check
        %p395 = pneg %p177
      $region46: #{smiles_transformer_forward.11} parent=39 // pred_check_branch
        %397 = sbr.rel (%p395) target = $region48
      $region47: #{smiles_transformer_forward.11} parent=39 // pred_region
        _
      $region48: #{smiles_transformer_forward.11} parent=39 // pred_fallthru
        _
    $region40: #{smiles_transformer_forward.11} parent=5 // pred_fallthru
      _
    %p398 = scmp.le.s32.totalorder 2, %s13
    // Predicated region
    $region49: #{smiles_transformer_forward.11} parent=5 // pred_check
      %p399 = pneg %p398
    $region50: #{smiles_transformer_forward.11} parent=5 // pred_check_branch
      %401 = sbr.rel (%p399) target = $region52
    $region51: #{smiles_transformer_forward.11} parent=5 // pred_region
      %s402 = ssub.s32 %s13, 2
      // Predicated region
      $region53: #{smiles_transformer_forward.11} parent=51 // pred_check
        %p403 = pneg %p157
      $region54: #{smiles_transformer_forward.11} parent=51 // pred_check_branch
        %405 = sbr.rel (%p403) target = $region56
      $region55: #{smiles_transformer_forward.11} parent=51 // pred_region
        %p406 = scmp.lt.s32.totalorder %s19, 1
        %s407 = scalar_select %p406, %s19, 1
        %s408 = scalar_lea.vmem %s5, %s407
      $region56: #{smiles_transformer_forward.11} parent=51 // pred_fallthru
        _
      // Predicated region
      $region57: #{smiles_transformer_forward.11} parent=51 // pred_check
        %p409 = pneg %p183
      $region58: #{smiles_transformer_forward.11} parent=51 // pred_check_branch
        %411 = sbr.rel (%p409) target = $region60
      $region59: #{smiles_transformer_forward.11} parent=51 // pred_region
        %p412 = scmp.lt.s32.totalorder %s19, 1
        %s413 = scalar_select %p412, %s19, 1
        %s414 = scalar_lea.vmem %s6, %s413
      $region60: #{smiles_transformer_forward.11} parent=51 // pred_fallthru
        _
    $region52: #{smiles_transformer_forward.11} parent=5 // pred_fallthru
      _
  $region6: #{smiles_transformer_forward.11} parent=0 // loop_footer
    %s17 = sadd.s32 1, %s13
  $region7: #{smiles_transformer_forward.11} parent=0 // loop_footer_branch
    %12 = sbr.rel target = $region3
  $region8: #{smiles_transformer_forward.11} parent=0 // loop_exit
    _

// kernel: smiles_transformer_forward.6
$region0: #{smiles_transformer_forward.6}
  #allocation0 [shape = 'u32[]', space=smem, size = 0x4, offset = 0x4, fixed_abs, tag = 'smem constant byte address 0x4 - core index']
  #allocation1 [shape = 'u32[72,128]{1,0:T(1,128)}', space=vmem, size = 0x9000, scoped, tag = 'internal scratch']
  %s0 = inlined_call_operand.vmem [shape: f32[4], index: 0, kind: input, shape index: {}]
  %s1 = inlined_call_operand.vmem [shape: f32[2,8,32], index: 1, kind: input, shape index: {}]
  %s2 = inlined_call_operand.vmem [shape: f32[2,8,8], index: 2, kind: input, shape index: {}]
  %s3 = inlined_call_operand.vmem [shape: f32[2,8,1], index: 3, kind: input, shape index: {}]
  %s4 = inlined_call_operand.vmem [shape: f32[1,32], index: 4, kind: input, shape index: {}]
  %s5 = inlined_call_operand.vmem [shape: f32[1,32], index: 5, kind: input, shape index: {}]
  %s6 = inlined_call_operand.vmem [shape: f32[4,32,8], index: 6, kind: input, shape index: {}]
  %s7 = inlined_call_operand.vmem [shape: f32[4,1,8], index: 7, kind: input, shape index: {}]
  %s8 = inlined_call_operand.vmem [shape: f32[4,32,8], index: 8, kind: input, shape index: {}]
  %s9 = inlined_call_operand.vmem [shape: f32[4,1,8], index: 9, kind: input, shape index: {}]
  %s10 = inlined_call_operand.vmem [shape: f32[4,32,8], index: 10, kind: input, shape index: {}]
  %s11 = inlined_call_operand.vmem [shape: f32[4,1,8], index: 11, kind: input, shape index: {}]
  %s12 = inlined_call_operand.vmem [shape: f32[4,8,32], index: 12, kind: input, shape index: {}]
  %s13 = inlined_call_operand.vmem [shape: f32[1,32], index: 13, kind: input, shape index: {}]
  %s14 = inlined_call_operand.vmem [shape: f32[1,32], index: 14, kind: input, shape index: {}]
  %s15 = inlined_call_operand.vmem [shape: f32[1,32], index: 15, kind: input, shape index: {}]
  %s16 = inlined_call_operand.vmem [shape: f32[32,128], index: 16, kind: input, shape index: {}]
  %s17 = inlined_call_operand.vmem [shape: f32[1,128], index: 17, kind: input, shape index: {}]
  %s18 = inlined_call_operand.vmem [shape: f32[128,32], index: 18, kind: input, shape index: {}]
  %s19 = inlined_call_operand.vmem [shape: f32[1,32], index: 19, kind: input, shape index: {}]
  %s20 = inlined_call_operand.vmem [shape: f32[2,8,32], index: 20, kind: output, shape index: {}]
  %s21 = sld [smem:[#allocation0]]
  $region117: #{smiles_transformer_forward.6} parent=0
    _
  %s23 = ssub.s32 1, %s21
  %s24 = scalar_select 0, %s23, %s21
  $region1: #{smiles_transformer_forward.6} parent=0
    #allocation2 [shape = 'u8[512]{0}', space=smem, size = 0x200, scoped, tag = 'input window, operand 0, single buffered']
    #allocation3 [shape = 's32[2]{0}', space=sflag, size = 0x8, scoped, tag = 'scoped memory for smiles_transformer_forward.6']
    %25 = vsyncpa [#allocation3], 0
    loop: start=0, step=1, limit=4
    $region2: #{smiles_transformer_forward.6} parent=1 // loop_pre_header
      _
    $region3: #{smiles_transformer_forward.6} parent=1 // loop_header
      %s27 = sphi 0, %s31
      %p28 = scmp.ge.s32.totalorder %s27, 4
      %s35 = sphi 0, %s35
      %s37 = sphi 0, %s35
      %s38 = sphi 0, %s37
      %s52 = sphi 0, %s38
      %s58 = sphi 0, %s60
      %s61 = sphi 0, %s58
      %s62 = sphi 0, %s61
      %s78 = sphi 0, %s62
      %s84 = sphi 0, %s86
      %s87 = sphi 0, %s84
      %s88 = sphi 0, %s87
      %s104 = sphi 0, %s88
      %s110 = sphi 0, %s112
      %s113 = sphi 0, %s110
      %s114 = sphi 0, %s113
      %s130 = sphi 0, %s114
      %s134 = sphi 0, %s134
      %s136 = sphi 0, %s134
      %s137 = sphi 0, %s136
      %s151 = sphi 0, %s137
      %s155 = sphi 0, %s155
      %s157 = sphi 0, %s155
      %s158 = sphi 0, %s157
      %s172 = sphi 0, %s158
      %s176 = sphi 0, %s176
      %s178 = sphi 0, %s176
      %s179 = sphi 0, %s178
      %s193 = sphi 0, %s179
      %s197 = sphi 0, %s197
      %s199 = sphi 0, %s197
      %s200 = sphi 0, %s199
      %s214 = sphi 0, %s200
      %s218 = sphi 0, %s218
      %s220 = sphi 0, %s218
      %s221 = sphi 0, %s220
      %s235 = sphi 0, %s221
      %s239 = sphi 0, %s239
      %s241 = sphi 0, %s239
      %s242 = sphi 0, %s241
      %s256 = sphi 0, %s242
      %s260 = sphi 0, %s260
      %s262 = sphi 0, %s260
      %s263 = sphi 0, %s262
      %s277 = sphi 0, %s263
      %s281 = sphi 0, %s281
      %s283 = sphi 0, %s281
      %s284 = sphi 0, %s283
      %s298 = sphi 0, %s284
      %s302 = sphi 0, %s302
      %s304 = sphi 0, %s302
      %s305 = sphi 0, %s304
      %s319 = sphi 0, %s305
      %s323 = sphi 0, %s323
      %s325 = sphi 0, %s323
      %s326 = sphi 0, %s325
      %s340 = sphi 0, %s326
      %s344 = sphi 0, %s344
      %s346 = sphi 0, %s344
      %s347 = sphi 0, %s346
      %s361 = sphi 0, %s347
      %s365 = sphi 0, %s365
      %s367 = sphi 0, %s365
      %s368 = sphi 0, %s367
      %s382 = sphi 0, %s368
      %s386 = sphi 0, %s386
      %s388 = sphi 0, %s386
      %s389 = sphi 0, %s388
      %s403 = sphi 0, %s389
      %s407 = sphi 0, %s407
      %s409 = sphi 0, %s407
      %s410 = sphi 0, %s409
      %s424 = sphi 0, %s410
      %s428 = sphi 0, %s428
      %s430 = sphi 0, %s428
      %s431 = sphi 0, %s430
      %s445 = sphi 0, %s431
      %s449 = sphi 0, %s449
      %s451 = sphi 0, %s449
      %s452 = sphi 0, %s451
      %s466 = sphi 0, %s452
      %s472 = sphi 0, %s474
      %s475 = sphi 0, %s472
      %s476 = sphi 0, %s475
      %s492 = sphi 0, %s476
    $region4: #{smiles_transformer_forward.6} parent=1 // loop_header_branch
      %30 = sbr.rel (%p28) target = $region8
    $region5: #{smiles_transformer_forward.6} parent=1 // loop_body
      %s32 = ssub.s32 %s27, 1
      %s33 = ssub.s32 %s27, 2
      %s34 = sadd.s32 %s27, 1
      %s36 = sadd.s32 %s35, 1
      %p39 = scmp.eq.s32.totalorder %s27, 1
      %p40 = scmp.ne.s32.totalorder %s35, %s37
      %p41 = scmp.eq.s32.totalorder %s27, 0
      %p42 = por %p40, %p41
      %p43 = scmp.ne.s32.totalorder %s35, %s37
      %p44 = scmp.eq.s32.totalorder %s32, 1
      %p45 = por %p43, %p44
      %p46 = scmp.ne.s32.totalorder %s37, %s38
      %p47 = scmp.eq.s32.totalorder %s32, 0
      %p48 = por %p46, %p47
      %p49 = scmp.ne.s32.totalorder %s37, %s38
      %p50 = scmp.eq.s32.totalorder %s33, 1
      %p51 = por %p49, %p50
      %p53 = scmp.ne.s32.totalorder %s38, %s52
      %p54 = scmp.eq.s32.totalorder %s33, 0
      %p55 = por %p53, %p54
      %s56 = ssub.s32 %s27, %s34
      %p57 = scmp.eq.s32.totalorder %s56, 0
      %s59 = sadd.s32 %s58, 1
      %s60 = scalar_select %p57, %s58, %s59
      %p63 = pneg %p57
      %p64 = scmp.eq.s32.totalorder %s27, 1
      %p65 = por %p63, %p64
      %p66 = scmp.ne.s32.totalorder %s58, %s61
      %p67 = scmp.eq.s32.totalorder %s27, 0
      %p68 = por %p66, %p67
      %p69 = scmp.ne.s32.totalorder %s58, %s61
      %p70 = scmp.eq.s32.totalorder %s32, 1
      %p71 = por %p69, %p70
      %p72 = scmp.ne.s32.totalorder %s61, %s62
      %p73 = scmp.eq.s32.totalorder %s32, 0
      %p74 = por %p72, %p73
      %p75 = scmp.ne.s32.totalorder %s61, %s62
      %p76 = scmp.eq.s32.totalorder %s33, 1
      %p77 = por %p75, %p76
      %p79 = scmp.ne.s32.totalorder %s62, %s78
      %p80 = scmp.eq.s32.totalorder %s33, 0
      %p81 = por %p79, %p80
      %s82 = ssub.s32 %s27, %s34
      %p83 = scmp.eq.s32.totalorder %s82, 0
      %s85 = sadd.s32 %s84, 1
      %s86 = scalar_select %p83, %s84, %s85
      %p89 = pneg %p83
      %p90 = scmp.eq.s32.totalorder %s27, 1
      %p91 = por %p89, %p90
      %p92 = scmp.ne.s32.totalorder %s84, %s87
      %p93 = scmp.eq.s32.totalorder %s27, 0
      %p94 = por %p92, %p93
      %p95 = scmp.ne.s32.totalorder %s84, %s87
      %p96 = scmp.eq.s32.totalorder %s32, 1
      %p97 = por %p95, %p96
      %p98 = scmp.ne.s32.totalorder %s87, %s88
      %p99 = scmp.eq.s32.totalorder %s32, 0
      %p100 = por %p98, %p99
      %p101 = scmp.ne.s32.totalorder %s87, %s88
      %p102 = scmp.eq.s32.totalorder %s33, 1
      %p103 = por %p101, %p102
      %p105 = scmp.ne.s32.totalorder %s88, %s104
      %p106 = scmp.eq.s32.totalorder %s33, 0
      %p107 = por %p105, %p106
      %s108 = ssub.s32 %s27, %s34
      %p109 = scmp.eq.s32.totalorder %s108, 0
      %s111 = sadd.s32 %s110, 1
      %s112 = scalar_select %p109, %s110, %s111
      %p115 = pneg %p109
      %p116 = scmp.eq.s32.totalorder %s27, 1
      %p117 = por %p115, %p116
      %p118 = scmp.ne.s32.totalorder %s110, %s113
      %p119 = scmp.eq.s32.totalorder %s27, 0
      %p120 = por %p118, %p119
      %p121 = scmp.ne.s32.totalorder %s110, %s113
      %p122 = scmp.eq.s32.totalorder %s32, 1
      %p123 = por %p121, %p122
      %p124 = scmp.ne.s32.totalorder %s113, %s114
      %p125 = scmp.eq.s32.totalorder %s32, 0
      %p126 = por %p124, %p125
      %p127 = scmp.ne.s32.totalorder %s113, %s114
      %p128 = scmp.eq.s32.totalorder %s33, 1
      %p129 = por %p127, %p128
      %p131 = scmp.ne.s32.totalorder %s114, %s130
      %p132 = scmp.eq.s32.totalorder %s33, 0
      %p133 = por %p131, %p132
      %s135 = sadd.s32 %s134, 1
      %p138 = scmp.eq.s32.totalorder %s27, 1
      %p139 = scmp.ne.s32.totalorder %s134, %s136
      %p140 = scmp.eq.s32.totalorder %s27, 0
      %p141 = por %p139, %p140
      %p142 = scmp.ne.s32.totalorder %s134, %s136
      %p143 = scmp.eq.s32.totalorder %s32, 1
      %p144 = por %p142, %p143
      %p145 = scmp.ne.s32.totalorder %s136, %s137
      %p146 = scmp.eq.s32.totalorder %s32, 0
      %p147 = por %p145, %p146
      %p148 = scmp.ne.s32.totalorder %s136, %s137
      %p149 = scmp.eq.s32.totalorder %s33, 1
      %p150 = por %p148, %p149
      %p152 = scmp.ne.s32.totalorder %s137, %s151
      %p153 = scmp.eq.s32.totalorder %s33, 0
      %p154 = por %p152, %p153
      %s156 = sadd.s32 %s155, 1
      %p159 = scmp.eq.s32.totalorder %s27, 1
      %p160 = scmp.ne.s32.totalorder %s155, %s157
      %p161 = scmp.eq.s32.totalorder %s27, 0
      %p162 = por %p160, %p161
      %p163 = scmp.ne.s32.totalorder %s155, %s157
      %p164 = scmp.eq.s32.totalorder %s32, 1
      %p165 = por %p163, %p164
      %p166 = scmp.ne.s32.totalorder %s157, %s158
      %p167 = scmp.eq.s32.totalorder %s32, 0
      %p168 = por %p166, %p167
      %p169 = scmp.ne.s32.totalorder %s157, %s158
      %p170 = scmp.eq.s32.totalorder %s33, 1
      %p171 = por %p169, %p170
      %p173 = scmp.ne.s32.totalorder %s158, %s172
      %p174 = scmp.eq.s32.totalorder %s33, 0
      %p175 = por %p173, %p174
      %s177 = sadd.s32 %s176, 1
      %p180 = scmp.eq.s32.totalorder %s27, 1
      %p181 = scmp.ne.s32.totalorder %s176, %s178
      %p182 = scmp.eq.s32.totalorder %s27, 0
      %p183 = por %p181, %p182
      %p184 = scmp.ne.s32.totalorder %s176, %s178
      %p185 = scmp.eq.s32.totalorder %s32, 1
      %p186 = por %p184, %p185
      %p187 = scmp.ne.s32.totalorder %s178, %s179
      %p188 = scmp.eq.s32.totalorder %s32, 0
      %p189 = por %p187, %p188
      %p190 = scmp.ne.s32.totalorder %s178, %s179
      %p191 = scmp.eq.s32.totalorder %s33, 1
      %p192 = por %p190, %p191
      %p194 = scmp.ne.s32.totalorder %s179, %s193
      %p195 = scmp.eq.s32.totalorder %s33, 0
      %p196 = por %p194, %p195
      %s198 = sadd.s32 %s197, 1
      %p201 = scmp.eq.s32.totalorder %s27, 1
      %p202 = scmp.ne.s32.totalorder %s197, %s199
      %p203 = scmp.eq.s32.totalorder %s27, 0
      %p204 = por %p202, %p203
      %p205 = scmp.ne.s32.totalorder %s197, %s199
      %p206 = scmp.eq.s32.totalorder %s32, 1
      %p207 = por %p205, %p206
      %p208 = scmp.ne.s32.totalorder %s199, %s200
      %p209 = scmp.eq.s32.totalorder %s32, 0
      %p210 = por %p208, %p209
      %p211 = scmp.ne.s32.totalorder %s199, %s200
      %p212 = scmp.eq.s32.totalorder %s33, 1
      %p213 = por %p211, %p212
      %p215 = scmp.ne.s32.totalorder %s200, %s214
      %p216 = scmp.eq.s32.totalorder %s33, 0
      %p217 = por %p215, %p216
      %s219 = sadd.s32 %s218, 1
      %p222 = scmp.eq.s32.totalorder %s27, 1
      %p223 = scmp.ne.s32.totalorder %s218, %s220
      %p224 = scmp.eq.s32.totalorder %s27, 0
      %p225 = por %p223, %p224
      %p226 = scmp.ne.s32.totalorder %s218, %s220
      %p227 = scmp.eq.s32.totalorder %s32, 1
      %p228 = por %p226, %p227
      %p229 = scmp.ne.s32.totalorder %s220, %s221
      %p230 = scmp.eq.s32.totalorder %s32, 0
      %p231 = por %p229, %p230
      %p232 = scmp.ne.s32.totalorder %s220, %s221
      %p233 = scmp.eq.s32.totalorder %s33, 1
      %p234 = por %p232, %p233
      %p236 = scmp.ne.s32.totalorder %s221, %s235
      %p237 = scmp.eq.s32.totalorder %s33, 0
      %p238 = por %p236, %p237
      %s240 = sadd.s32 %s239, 1
      %p243 = scmp.eq.s32.totalorder %s27, 1
      %p244 = scmp.ne.s32.totalorder %s239, %s241
      %p245 = scmp.eq.s32.totalorder %s27, 0
      %p246 = por %p244, %p245
      %p247 = scmp.ne.s32.totalorder %s239, %s241
      %p248 = scmp.eq.s32.totalorder %s32, 1
      %p249 = por %p247, %p248
      %p250 = scmp.ne.s32.totalorder %s241, %s242
      %p251 = scmp.eq.s32.totalorder %s32, 0
      %p252 = por %p250, %p251
      %p253 = scmp.ne.s32.totalorder %s241, %s242
      %p254 = scmp.eq.s32.totalorder %s33, 1
      %p255 = por %p253, %p254
      %p257 = scmp.ne.s32.totalorder %s242, %s256
      %p258 = scmp.eq.s32.totalorder %s33, 0
      %p259 = por %p257, %p258
      %s261 = sadd.s32 %s260, 1
      %p264 = scmp.eq.s32.totalorder %s27, 1
      %p265 = scmp.ne.s32.totalorder %s260, %s262
      %p266 = scmp.eq.s32.totalorder %s27, 0
      %p267 = por %p265, %p266
      %p268 = scmp.ne.s32.totalorder %s260, %s262
      %p269 = scmp.eq.s32.totalorder %s32, 1
      %p270 = por %p268, %p269
      %p271 = scmp.ne.s32.totalorder %s262, %s263
      %p272 = scmp.eq.s32.totalorder %s32, 0
      %p273 = por %p271, %p272
      %p274 = scmp.ne.s32.totalorder %s262, %s263
      %p275 = scmp.eq.s32.totalorder %s33, 1
      %p276 = por %p274, %p275
      %p278 = scmp.ne.s32.totalorder %s263, %s277
      %p279 = scmp.eq.s32.totalorder %s33, 0
      %p280 = por %p278, %p279
      %s282 = sadd.s32 %s281, 1
      %p285 = scmp.eq.s32.totalorder %s27, 1
      %p286 = scmp.ne.s32.totalorder %s281, %s283
      %p287 = scmp.eq.s32.totalorder %s27, 0
      %p288 = por %p286, %p287
      %p289 = scmp.ne.s32.totalorder %s281, %s283
      %p290 = scmp.eq.s32.totalorder %s32, 1
      %p291 = por %p289, %p290
      %p292 = scmp.ne.s32.totalorder %s283, %s284
      %p293 = scmp.eq.s32.totalorder %s32, 0
      %p294 = por %p292, %p293
      %p295 = scmp.ne.s32.totalorder %s283, %s284
      %p296 = scmp.eq.s32.totalorder %s33, 1
      %p297 = por %p295, %p296
      %p299 = scmp.ne.s32.totalorder %s284, %s298
      %p300 = scmp.eq.s32.totalorder %s33, 0
      %p301 = por %p299, %p300
      %s303 = sadd.s32 %s302, 1
      %p306 = scmp.eq.s32.totalorder %s27, 1
      %p307 = scmp.ne.s32.totalorder %s302, %s304
      %p308 = scmp.eq.s32.totalorder %s27, 0
      %p309 = por %p307, %p308
      %p310 = scmp.ne.s32.totalorder %s302, %s304
      %p311 = scmp.eq.s32.totalorder %s32, 1
      %p312 = por %p310, %p311
      %p313 = scmp.ne.s32.totalorder %s304, %s305
      %p314 = scmp.eq.s32.totalorder %s32, 0
      %p315 = por %p313, %p314
      %p316 = scmp.ne.s32.totalorder %s304, %s305
      %p317 = scmp.eq.s32.totalorder %s33, 1
      %p318 = por %p316, %p317
      %p320 = scmp.ne.s32.totalorder %s305, %s319
      %p321 = scmp.eq.s32.totalorder %s33, 0
      %p322 = por %p320, %p321
      %s324 = sadd.s32 %s323, 1
      %p327 = scmp.eq.s32.totalorder %s27, 1
      %p328 = scmp.ne.s32.totalorder %s323, %s325
      %p329 = scmp.eq.s32.totalorder %s27, 0
      %p330 = por %p328, %p329
      %p331 = scmp.ne.s32.totalorder %s323, %s325
      %p332 = scmp.eq.s32.totalorder %s32, 1
      %p333 = por %p331, %p332
      %p334 = scmp.ne.s32.totalorder %s325, %s326
      %p335 = scmp.eq.s32.totalorder %s32, 0
      %p336 = por %p334, %p335
      %p337 = scmp.ne.s32.totalorder %s325, %s326
      %p338 = scmp.eq.s32.totalorder %s33, 1
      %p339 = por %p337, %p338
      %p341 = scmp.ne.s32.totalorder %s326, %s340
      %p342 = scmp.eq.s32.totalorder %s33, 0
      %p343 = por %p341, %p342
      %s345 = sadd.s32 %s344, 1
      %p348 = scmp.eq.s32.totalorder %s27, 1
      %p349 = scmp.ne.s32.totalorder %s344, %s346
      %p350 = scmp.eq.s32.totalorder %s27, 0
      %p351 = por %p349, %p350
      %p352 = scmp.ne.s32.totalorder %s344, %s346
      %p353 = scmp.eq.s32.totalorder %s32, 1
      %p354 = por %p352, %p353
      %p355 = scmp.ne.s32.totalorder %s346, %s347
      %p356 = scmp.eq.s32.totalorder %s32, 0
      %p357 = por %p355, %p356
      %p358 = scmp.ne.s32.totalorder %s346, %s347
      %p359 = scmp.eq.s32.totalorder %s33, 1
      %p360 = por %p358, %p359
      %p362 = scmp.ne.s32.totalorder %s347, %s361
      %p363 = scmp.eq.s32.totalorder %s33, 0
      %p364 = por %p362, %p363
      %s366 = sadd.s32 %s365, 1
      %p369 = scmp.eq.s32.totalorder %s27, 1
      %p370 = scmp.ne.s32.totalorder %s365, %s367
      %p371 = scmp.eq.s32.totalorder %s27, 0
      %p372 = por %p370, %p371
      %p373 = scmp.ne.s32.totalorder %s365, %s367
      %p374 = scmp.eq.s32.totalorder %s32, 1
      %p375 = por %p373, %p374
      %p376 = scmp.ne.s32.totalorder %s367, %s368
      %p377 = scmp.eq.s32.totalorder %s32, 0
      %p378 = por %p376, %p377
      %p379 = scmp.ne.s32.totalorder %s367, %s368
      %p380 = scmp.eq.s32.totalorder %s33, 1
      %p381 = por %p379, %p380
      %p383 = scmp.ne.s32.totalorder %s368, %s382
      %p384 = scmp.eq.s32.totalorder %s33, 0
      %p385 = por %p383, %p384
      %s387 = sadd.s32 %s386, 1
      %p390 = scmp.eq.s32.totalorder %s27, 1
      %p391 = scmp.ne.s32.totalorder %s386, %s388
      %p392 = scmp.eq.s32.totalorder %s27, 0
      %p393 = por %p391, %p392
      %p394 = scmp.ne.s32.totalorder %s386, %s388
      %p395 = scmp.eq.s32.totalorder %s32, 1
      %p396 = por %p394, %p395
      %p397 = scmp.ne.s32.totalorder %s388, %s389
      %p398 = scmp.eq.s32.totalorder %s32, 0
      %p399 = por %p397, %p398
      %p400 = scmp.ne.s32.totalorder %s388, %s389
      %p401 = scmp.eq.s32.totalorder %s33, 1
      %p402 = por %p400, %p401
      %p404 = scmp.ne.s32.totalorder %s389, %s403
      %p405 = scmp.eq.s32.totalorder %s33, 0
      %p406 = por %p404, %p405
      %s408 = sadd.s32 %s407, 1
      %p411 = scmp.eq.s32.totalorder %s27, 1
      %p412 = scmp.ne.s32.totalorder %s407, %s409
      %p413 = scmp.eq.s32.totalorder %s27, 0
      %p414 = por %p412, %p413
      %p415 = scmp.ne.s32.totalorder %s407, %s409
      %p416 = scmp.eq.s32.totalorder %s32, 1
      %p417 = por %p415, %p416
      %p418 = scmp.ne.s32.totalorder %s409, %s410
      %p419 = scmp.eq.s32.totalorder %s32, 0
      %p420 = por %p418, %p419
      %p421 = scmp.ne.s32.totalorder %s409, %s410
      %p422 = scmp.eq.s32.totalorder %s33, 1
      %p423 = por %p421, %p422
      %p425 = scmp.ne.s32.totalorder %s410, %s424
      %p426 = scmp.eq.s32.totalorder %s33, 0
      %p427 = por %p425, %p426
      %s429 = sadd.s32 %s428, 1
      %p432 = scmp.eq.s32.totalorder %s27, 1
      %p433 = scmp.ne.s32.totalorder %s428, %s430
      %p434 = scmp.eq.s32.totalorder %s27, 0
      %p435 = por %p433, %p434
      %p436 = scmp.ne.s32.totalorder %s428, %s430
      %p437 = scmp.eq.s32.totalorder %s32, 1
      %p438 = por %p436, %p437
      %p439 = scmp.ne.s32.totalorder %s430, %s431
      %p440 = scmp.eq.s32.totalorder %s32, 0
      %p441 = por %p439, %p440
      %p442 = scmp.ne.s32.totalorder %s430, %s431
      %p443 = scmp.eq.s32.totalorder %s33, 1
      %p444 = por %p442, %p443
      %p446 = scmp.ne.s32.totalorder %s431, %s445
      %p447 = scmp.eq.s32.totalorder %s33, 0
      %p448 = por %p446, %p447
      %s450 = sadd.s32 %s449, 1
      %p453 = scmp.eq.s32.totalorder %s27, 1
      %p454 = scmp.ne.s32.totalorder %s449, %s451
      %p455 = scmp.eq.s32.totalorder %s27, 0
      %p456 = por %p454, %p455
      %p457 = scmp.ne.s32.totalorder %s449, %s451
      %p458 = scmp.eq.s32.totalorder %s32, 1
      %p459 = por %p457, %p458
      %p460 = scmp.ne.s32.totalorder %s451, %s452
      %p461 = scmp.eq.s32.totalorder %s32, 0
      %p462 = por %p460, %p461
      %p463 = scmp.ne.s32.totalorder %s451, %s452
      %p464 = scmp.eq.s32.totalorder %s33, 1
      %p465 = por %p463, %p464
      %p467 = scmp.ne.s32.totalorder %s452, %s466
      %p468 = scmp.eq.s32.totalorder %s33, 0
      %p469 = por %p467, %p468
      %s470 = ssub.s32 %s27, %s34
      %p471 = scmp.eq.s32.totalorder %s470, 0
      %s473 = sadd.s32 %s472, 1
      %s474 = scalar_select %p471, %s472, %s473
      %p477 = pneg %p471
      %p478 = scmp.eq.s32.totalorder %s27, 1
      %p479 = por %p477, %p478
      %p480 = scmp.ne.s32.totalorder %s472, %s475
      %p481 = scmp.eq.s32.totalorder %s27, 0
      %p482 = por %p480, %p481
      %p483 = scmp.ne.s32.totalorder %s472, %s475
      %p484 = scmp.eq.s32.totalorder %s32, 1
      %p485 = por %p483, %p484
      %p486 = scmp.ne.s32.totalorder %s475, %s476
      %p487 = scmp.eq.s32.totalorder %s32, 0
      %p488 = por %p486, %p487
      %p489 = scmp.ne.s32.totalorder %s475, %s476
      %p490 = scmp.eq.s32.totalorder %s33, 1
      %p491 = por %p489, %p490
      %p493 = scmp.ne.s32.totalorder %s476, %s492
      %p494 = scmp.eq.s32.totalorder %s33, 0
      %p495 = por %p493, %p494
      %p496 = scmp.le.s32.totalorder 1, %s27
      %p497 = scmp.lt.s32.totalorder %s27, 3
      %p498 = pnand %p496, %p497
      %p499 = pneg %p498
      // Predicated region
      $region9: #{smiles_transformer_forward.6} parent=5 // pred_check
        _
      $region10: #{smiles_transformer_forward.6} parent=5 // pred_check_branch
        %501 = sbr.rel (%p498) target = $region12
      $region11: #{smiles_transformer_forward.6} parent=5 // pred_region
        %s502 = ssub.s32 %s27, 1
        // Predicated region
        $region13: #{smiles_transformer_forward.6} parent=11 // pred_check
          %p503 = pneg %p48
        $region14: #{smiles_transformer_forward.6} parent=11 // pred_check_branch
          %505 = sbr.rel (%p503) target = $region16
        $region15: #{smiles_transformer_forward.6} parent=11 // pred_region
          %507 = vsyncadd [#allocation3], 0
          %s509 = sshll.u32 %s0, 4
          %s510 = int_to_ptr.vmem [resolvable:$true] %s509
          %512 = dma.vmem_to_smem %s510, 16, [#allocation2], [#allocation3]
        $region16: #{smiles_transformer_forward.6} parent=11 // pred_fallthru
          _
        // Predicated region
        $region17: #{smiles_transformer_forward.6} parent=11 // pred_check
          %p513 = pneg %p147
        $region18: #{smiles_transformer_forward.6} parent=11 // pred_check_branch
          %515 = sbr.rel (%p513) target = $region20
        $region19: #{smiles_transformer_forward.6} parent=11 // pred_region
          _
        $region20: #{smiles_transformer_forward.6} parent=11 // pred_fallthru
          _
        // Predicated region
        $region21: #{smiles_transformer_forward.6} parent=11 // pred_check
          %p516 = pneg %p168
        $region22: #{smiles_transformer_forward.6} parent=11 // pred_check_branch
          %518 = sbr.rel (%p516) target = $region24
        $region23: #{smiles_transformer_forward.6} parent=11 // pred_region
          _
        $region24: #{smiles_transformer_forward.6} parent=11 // pred_fallthru
          _
        // Predicated region
        $region25: #{smiles_transformer_forward.6} parent=11 // pred_check
          %p519 = pneg %p189
        $region26: #{smiles_transformer_forward.6} parent=11 // pred_check_branch
          %521 = sbr.rel (%p519) target = $region28
        $region27: #{smiles_transformer_forward.6} parent=11 // pred_region
          _
        $region28: #{smiles_transformer_forward.6} parent=11 // pred_fallthru
          _
        // Predicated region
        $region29: #{smiles_transformer_forward.6} parent=11 // pred_check
          %p522 = pneg %p210
        $region30: #{smiles_transformer_forward.6} parent=11 // pred_check_branch
          %524 = sbr.rel (%p522) target = $region32
        $region31: #{smiles_transformer_forward.6} parent=11 // pred_region
          _
        $region32: #{smiles_transformer_forward.6} parent=11 // pred_fallthru
          _
        // Predicated region
        $region33: #{smiles_transformer_forward.6} parent=11 // pred_check
          %p525 = pneg %p231
        $region34: #{smiles_transformer_forward.6} parent=11 // pred_check_branch
          %527 = sbr.rel (%p525) target = $region36
        $region35: #{smiles_transformer_forward.6} parent=11 // pred_region
          _
        $region36: #{smiles_transformer_forward.6} parent=11 // pred_fallthru
          _
        // Predicated region
        $region37: #{smiles_transformer_forward.6} parent=11 // pred_check
          %p528 = pneg %p252
        $region38: #{smiles_transformer_forward.6} parent=11 // pred_check_branch
          %530 = sbr.rel (%p528) target = $region40
        $region39: #{smiles_transformer_forward.6} parent=11 // pred_region
          _
        $region40: #{smiles_transformer_forward.6} parent=11 // pred_fallthru
          _
        // Predicated region
        $region41: #{smiles_transformer_forward.6} parent=11 // pred_check
          %p531 = pneg %p273
        $region42: #{smiles_transformer_forward.6} parent=11 // pred_check_branch
          %533 = sbr.rel (%p531) target = $region44
        $region43: #{smiles_transformer_forward.6} parent=11 // pred_region
          _
        $region44: #{smiles_transformer_forward.6} parent=11 // pred_fallthru
          _
        // Predicated region
        $region45: #{smiles_transformer_forward.6} parent=11 // pred_check
          %p534 = pneg %p294
        $region46: #{smiles_transformer_forward.6} parent=11 // pred_check_branch
          %536 = sbr.rel (%p534) target = $region48
        $region47: #{smiles_transformer_forward.6} parent=11 // pred_region
          _
        $region48: #{smiles_transformer_forward.6} parent=11 // pred_fallthru
          _
        // Predicated region
        $region49: #{smiles_transformer_forward.6} parent=11 // pred_check
          %p537 = pneg %p315
        $region50: #{smiles_transformer_forward.6} parent=11 // pred_check_branch
          %539 = sbr.rel (%p537) target = $region52
        $region51: #{smiles_transformer_forward.6} parent=11 // pred_region
          _
        $region52: #{smiles_transformer_forward.6} parent=11 // pred_fallthru
          _
        // Predicated region
        $region53: #{smiles_transformer_forward.6} parent=11 // pred_check
          %p540 = pneg %p336
        $region54: #{smiles_transformer_forward.6} parent=11 // pred_check_branch
          %542 = sbr.rel (%p540) target = $region56
        $region55: #{smiles_transformer_forward.6} parent=11 // pred_region
          _
        $region56: #{smiles_transformer_forward.6} parent=11 // pred_fallthru
          _
        // Predicated region
        $region57: #{smiles_transformer_forward.6} parent=11 // pred_check
          %p543 = pneg %p357
        $region58: #{smiles_transformer_forward.6} parent=11 // pred_check_branch
          %545 = sbr.rel (%p543) target = $region60
        $region59: #{smiles_transformer_forward.6} parent=11 // pred_region
          _
        $region60: #{smiles_transformer_forward.6} parent=11 // pred_fallthru
          _
        // Predicated region
        $region61: #{smiles_transformer_forward.6} parent=11 // pred_check
          %p546 = pneg %p378
        $region62: #{smiles_transformer_forward.6} parent=11 // pred_check_branch
          %548 = sbr.rel (%p546) target = $region64
        $region63: #{smiles_transformer_forward.6} parent=11 // pred_region
          _
        $region64: #{smiles_transformer_forward.6} parent=11 // pred_fallthru
          _
        // Predicated region
        $region65: #{smiles_transformer_forward.6} parent=11 // pred_check
          %p549 = pneg %p399
        $region66: #{smiles_transformer_forward.6} parent=11 // pred_check_branch
          %551 = sbr.rel (%p549) target = $region68
        $region67: #{smiles_transformer_forward.6} parent=11 // pred_region
          _
        $region68: #{smiles_transformer_forward.6} parent=11 // pred_fallthru
          _
        // Predicated region
        $region69: #{smiles_transformer_forward.6} parent=11 // pred_check
          %p552 = pneg %p420
        $region70: #{smiles_transformer_forward.6} parent=11 // pred_check_branch
          %554 = sbr.rel (%p552) target = $region72
        $region71: #{smiles_transformer_forward.6} parent=11 // pred_region
          _
        $region72: #{smiles_transformer_forward.6} parent=11 // pred_fallthru
          _
        // Predicated region
        $region73: #{smiles_transformer_forward.6} parent=11 // pred_check
          %p555 = pneg %p441
        $region74: #{smiles_transformer_forward.6} parent=11 // pred_check_branch
          %557 = sbr.rel (%p555) target = $region76
        $region75: #{smiles_transformer_forward.6} parent=11 // pred_region
          _
        $region76: #{smiles_transformer_forward.6} parent=11 // pred_fallthru
          _
        // Predicated region
        $region77: #{smiles_transformer_forward.6} parent=11 // pred_check
          %p558 = pneg %p462
        $region78: #{smiles_transformer_forward.6} parent=11 // pred_check_branch
          %560 = sbr.rel (%p558) target = $region80
        $region79: #{smiles_transformer_forward.6} parent=11 // pred_region
          _
        $region80: #{smiles_transformer_forward.6} parent=11 // pred_fallthru
          _
      $region12: #{smiles_transformer_forward.6} parent=5 // pred_fallthru
        _
      %p561 = scmp.lt.s32.totalorder %s27, 2
      // Predicated region
      $region81: #{smiles_transformer_forward.6} parent=5 // pred_check
        %p562 = pneg %p561
      $region82: #{smiles_transformer_forward.6} parent=5 // pred_check_branch
        %564 = sbr.rel (%p562) target = $region84
      $region83: #{smiles_transformer_forward.6} parent=5 // pred_region
        // Predicated region
        $region85: #{smiles_transformer_forward.6} parent=83 // pred_check
          %p565 = pneg %p68
        $region86: #{smiles_transformer_forward.6} parent=83 // pred_check_branch
          %567 = sbr.rel (%p565) target = $region88
        $region87: #{smiles_transformer_forward.6} parent=83 // pred_region
          %p568 = scmp.lt.s32.totalorder %s27, 1
          %s569 = scalar_select %p568, %s27, 1
          %s570 = smul.addr %s569, 8
          %s571 = scalar_lea.vmem %s1, %s570
        $region88: #{smiles_transformer_forward.6} parent=83 // pred_fallthru
          _
        // Predicated region
        $region89: #{smiles_transformer_forward.6} parent=83 // pred_check
          %p572 = pneg %p94
        $region90: #{smiles_transformer_forward.6} parent=83 // pred_check_branch
          %574 = sbr.rel (%p572) target = $region92
        $region91: #{smiles_transformer_forward.6} parent=83 // pred_region
          %p575 = scmp.lt.s32.totalorder %s27, 1
          %s576 = scalar_select %p575, %s27, 1
          %s577 = smul.addr %s576, 8
          %s578 = scalar_lea.vmem %s2, %s577
        $region92: #{smiles_transformer_forward.6} parent=83 // pred_fallthru
          _
        // Predicated region
        $region93: #{smiles_transformer_forward.6} parent=83 // pred_check
          %p579 = pneg %p120
        $region94: #{smiles_transformer_forward.6} parent=83 // pred_check_branch
          %581 = sbr.rel (%p579) target = $region96
        $region95: #{smiles_transformer_forward.6} parent=83 // pred_region
          %p582 = scmp.lt.s32.totalorder %s27, 1
          %s583 = scalar_select %p582, %s27, 1
          %s584 = smul.addr %s583, 8
          %s585 = scalar_lea.vmem %s3, %s584
        $region96: #{smiles_transformer_forward.6} parent=83 // pred_fallthru
          _
      $region84: #{smiles_transformer_forward.6} parent=5 // pred_fallthru
        _
      %p586 = scmp.le.s32.totalorder 1, %s27
      %p587 = scmp.lt.s32.totalorder %s27, 3
      %p588 = pnand %p586, %p587
      %p589 = pneg %p588
      // Predicated region
      $region97: #{smiles_transformer_forward.6} parent=5 // pred_check
        _
      $region98: #{smiles_transformer_forward.6} parent=5 // pred_check_branch
        %591 = sbr.rel (%p588) target = $region100
      $region99: #{smiles_transformer_forward.6} parent=5 // pred_region
        %s592 = ssub.s32 %s27, 1
        // Predicated region
        $region101: #{smiles_transformer_forward.6} parent=99 // pred_check
          %p593 = pneg %p48
        $region102: #{smiles_transformer_forward.6} parent=99 // pred_check_branch
          %595 = sbr.rel (%p593) target = $region104
        $region103: #{smiles_transformer_forward.6} parent=99 // pred_region
          %597 = dma.done [#allocation3], 16
        $region104: #{smiles_transformer_forward.6} parent=99 // pred_fallthru
          _
        %598 = sfence
        %p599 = pneg %p48
        %p600 = pneg %p45
        %p601 = scmp.lt.s32.totalorder %s32, 1
        %s602 = scalar_select %p601, %s32, 1
        %s603 = smul.addr %s602, 8
        %s604 = scalar_lea.vmem %s1, %s603
        %p605 = pneg %p74
        %p606 = pneg %p71
        %p607 = scmp.lt.s32.totalorder %s32, 1
        %s608 = scalar_select %p607, %s32, 1
        %s609 = smul.addr %s608, 8
        %s610 = scalar_lea.vmem %s2, %s609
        %p611 = pneg %p100
        %p612 = pneg %p97
        %p613 = scmp.lt.s32.totalorder %s32, 1
        %s614 = scalar_select %p613, %s32, 1
        %s615 = smul.addr %s614, 8
        %s616 = scalar_lea.vmem %s3, %s615
        %p617 = pneg %p126
        %p618 = pneg %p123
        %p619 = pneg %p147
        %p620 = pneg %p144
        %p621 = pneg %p168
        %p622 = pneg %p165
        %p623 = pneg %p189
        %p624 = pneg %p186
        %p625 = pneg %p210
        %p626 = pneg %p207
        %p627 = pneg %p231
        %p628 = pneg %p228
        %p629 = pneg %p252
        %p630 = pneg %p249
        %p631 = pneg %p273
        %p632 = pneg %p270
        %p633 = pneg %p294
        %p634 = pneg %p291
        %p635 = pneg %p315
        %p636 = pneg %p312
        %p637 = pneg %p336
        %p638 = pneg %p333
        %p639 = pneg %p357
        %p640 = pneg %p354
        %p641 = pneg %p378
        %p642 = pneg %p375
        %p643 = pneg %p399
        %p644 = pneg %p396
        %p645 = pneg %p420
        %p646 = pneg %p417
        %p647 = pneg %p441
        %p648 = pneg %p438
        %p649 = pneg %p462
        %p650 = pneg %p459
        %p651 = pneg %p488
        %p652 = pneg %p485
        %p653 = scmp.lt.s32.totalorder %s32, 1
        %s654 = scalar_select %p653, %s32, 1
        %s655 = smul.addr %s654, 8
        %s656 = scalar_lea.vmem %s20, %s655
        %p657 = scmp.lt.s32.totalorder %s32, 1
        %s658 = scalar_select %p657, %s32, 1
        %s659 = smul.addr %s658, 8
        %s660 = scalar_lea.vmem %s1, %s659
        %p661 = scmp.lt.s32.totalorder %s32, 1
        %s662 = scalar_select %p661, %s32, 1
        %s663 = smul.addr %s662, 8
        %s664 = scalar_lea.vmem %s2, %s663
        %p665 = scmp.lt.s32.totalorder %s32, 1
        %s666 = scalar_select %p665, %s32, 1
        %s667 = smul.addr %s666, 8
        %s668 = scalar_lea.vmem %s3, %s667
        %p669 = scmp.lt.s32.totalorder %s32, 1
        %s670 = scalar_select %p669, %s32, 1
        %s671 = smul.addr %s670, 8
        %s672 = scalar_lea.vmem %s20, %s671
        %v674 = vld [vmem:[%s664] sm:$0xff]
        %v675 = vld [vmem:[%s668] sm:$0xff]
        %v676 = vld [vmem:[%s660] sm:$0xff]
        %v677 = vld [vmem:[%s4] sm:$0x1]
        %v678 = vld [vmem:[%s5] sm:$0x1]
        %vm679 = vcmask 261120
        %v680 = vsel %vm679, %v676, 0.0
        %681 = vadd.xlane.f32.xlu0 %v680
        %v682 = vpop.xlane.xlu0 %681
        %v683 = vrcp.pop 32.0
        %v684 = vmul.f32 32.0, %v683
        %v685 = vsub.f32 1.0, %v684
        %v686 = vmul.f32 %v683, %v685
        %v687 = vadd.f32 %v683, %v686
        %vm688 = vweird.f32 %v683
        %v689 = vsel %vm688, %v683, %v687
        %v690 = vmul.f32 %v682, %v689
        %v691 = vsub.f32 %v676, %v690
        %v692 = vmul.f32 %v691, %v691
        %v693 = vsel %vm679, %v692, 0.0
        %694 = vadd.xlane.f32.xlu0 %v693
        %v695 = vpop.xlane.xlu0 %694
        %v696 = vmul.f32 %v695, %v689
        %v697 = vadd.f32 %v696, 1e-05
        %v698 = vrsqrt.pop %v697
        %v699 = vmul.f32 %v698, %v697
        %v700 = vmul.f32 %v699, %v698
        %v701 = vmul.f32 0.5, %v700
        %v702 = vsub.f32 1.5, %v701
        %v703 = vmul.f32 %v698, %v702
        %vm704 = vweird.f32 %v697
        %vm705 = vweird.f32 %v698
        %vm706 = vmor %vm704, %vm705
        %v707 = vsel %vm706, %v698, %v703
        %v708 = vmul.f32 %v691, %v707
        %v710 = vperm.slane %v677, 0
        %v712 = vmul.f32 %v708, %v710
        %v714 = vperm.slane %v678, 0
        %v716 = vadd.f32 %v712, %v714
        %v717 = vpack.c.bf16 %v716, %v716
        %v718 = vld [vmem:[%s13] sm:$0x1]
        %v719 = vld [vmem:[%s6] sm:$0xff]
        %v720 = vld [vmem:[%s6 + $0x8] sm:$0xff]
        %v721 = vld [vmem:[%s6 + $0x10] sm:$0xff]
        %v722 = vld [vmem:[%s6 + $0x18] sm:$0xff]
        %v723 = vpack.c.bf16 %v720, %v719
        %v724 = vpack.c.bf16 %v722, %v721
        %v725 = vld [vmem:[%s7] sm:$0x1]
        %v727 = vperm.slane %v725, 0
        %v730 = vsel %vm679, %v717, 0
        %732 = vmatpush.bf16.msra.mxu0 0
        %733 = vmatpush.bf16.msra.mxu0 0
        %734 = vmatpush.bf16.msra.mxu0 0
        %735 = vmatpush.bf16.msra.mxu0 0
        %736 = vmatpush.bf16.msra.mxu0 0
        %737 = vmatpush.bf16.msra.mxu0 0
        %738 = vmatpush.bf16.msra.mxu0 %v724
        %739 = vmatpush.bf16.msra.mxu0 %v723
        %740 = vmatmul.bf16.gmra.mxu0 %v730
        %v741 = vpop.f32.mrf.mxu0
        %v742 = vadd.f32 %v727, %v741
        %v743 = vpop.f32.mrf.mxu0
        %744 = vdwg.mxu0
        %v745 = vmul.f32 %v742, 0.35355338
        %v746 = vld [vmem:[%s8] sm:$0xff]
        %v747 = vld [vmem:[%s8 + $0x8] sm:$0xff]
        %v748 = vld [vmem:[%s8 + $0x10] sm:$0xff]
        %v749 = vld [vmem:[%s8 + $0x18] sm:$0xff]
        %v750 = vpack.c.bf16 %v747, %v746
        %v751 = vpack.c.bf16 %v749, %v748
        %v752 = vld [vmem:[%s9] sm:$0x1]
        %v754 = vperm.slane %v752, 0
        %756 = vmatpush.bf16.msra.mxu0 0
        %757 = vmatpush.bf16.msra.mxu0 0
        %758 = vmatpush.bf16.msra.mxu0 0
        %759 = vmatpush.bf16.msra.mxu0 0
        %760 = vmatpush.bf16.msra.mxu0 0
        %761 = vmatpush.bf16.msra.mxu0 0
        %762 = vmatpush.bf16.msra.mxu0 %v751
        %763 = vmatpush.bf16.msra.mxu0 %v750
        %764 = vmatmul.bf16.gmra.mxu0 %v730
        %v765 = vpop.f32.mrf.mxu0
        %v766 = vadd.f32 %v754, %v765
        %v767 = vpop.f32.mrf.mxu0
        %768 = vdwg.mxu0
        %v769 = vld [vmem:[%s10] sm:$0xff]
        %v770 = vld [vmem:[%s10 + $0x8] sm:$0xff]
        %v771 = vld [vmem:[%s10 + $0x10] sm:$0xff]
        %v772 = vld [vmem:[%s10 + $0x18] sm:$0xff]
        %v773 = vpack.c.bf16 %v770, %v769
        %v774 = vpack.c.bf16 %v772, %v771
        %v775 = vld [vmem:[%s11] sm:$0x1]
        %v777 = vperm.slane %v775, 0
        %779 = vmatpush.bf16.msra.mxu0 0
        %780 = vmatpush.bf16.msra.mxu0 0
        %781 = vmatpush.bf16.msra.mxu0 0
        %782 = vmatpush.bf16.msra.mxu0 0
        %783 = vmatpush.bf16.msra.mxu0 0
        %784 = vmatpush.bf16.msra.mxu0 0
        %785 = vmatpush.bf16.msra.mxu0 %v774
        %786 = vmatpush.bf16.msra.mxu0 %v773
        %787 = vmatmul.bf16.gmra.mxu0 %v730
        %v788 = vpop.f32.mrf.mxu0
        %v789 = vadd.f32 %v777, %v788
        %v790 = vpop.f32.mrf.mxu0
        %791 = vdwg.mxu0
        %v792 = vpack.c.bf16 %v745, %v745
        %v793 = vpack.c.bf16 %v766, %v766
        %s794 = sld [smem:[#allocation2]]
        %v795 = vstv %s794
        %v796 = vmul.f32 %v795, %v674
        %798 = vset.pattern.permute.xlu0 0
        %799 = vperm.xlu0 %798, %v675
        %v800 = vpop.permute.xlu0 %799
        %v802 = vadd.f32 %v796, %v800
        %vm803 = vcmask 64512
        %v805 = vsel %vm803, %v792, 0
        %v808 = vsel %vm803, %v793, 0
        %810 = vmatpush.bf16.xpose.msra.mxu0 0
        %811 = vmatpush.bf16.xpose.msra.mxu0 0
        %812 = vmatpush.bf16.xpose.msra.mxu0 0
        %813 = vmatpush.bf16.xpose.msra.mxu0 0
        %814 = vmatpush.bf16.xpose.msra.mxu0 0
        %815 = vmatpush.bf16.xpose.msra.mxu0 0
        %816 = vmatpush.bf16.xpose.msra.mxu0 0
        %817 = vmatpush.bf16.xpose.msra.mxu0 %v808
        %818 = vmatmul.bf16.gmra.mxu0 %v805
        %v819 = vpop.f32.mrf.mxu0
        %v820 = vadd.f32 %v802, %v819
        %v821 = vpop.f32.mrf.mxu0
        %822 = vdwg.mxu0
        %v823 = vsel %vm803, %v820, -inf
        %824 = vmax.xlane.f32.xlu0 %v823
        %v825 = vpop.xlane.xlu0 %824
        %v826 = vsub.f32 %v820, %v825
        %v827 = vmul.f32 %v826, 1.442695
        %v828 = vpow.pop %v827
        %v829 = vsel %vm803, %v828, 0.0
        %830 = vadd.xlane.f32.xlu0 %v829
        %v831 = vpop.xlane.xlu0 %830
        %v832 = vrcp.pop %v831
        %v833 = vmul.f32 %v828, %v832
        %v834 = vpack.c.bf16 %v833, %v833
        %v835 = vpack.c.bf16 %v789, %v789
        %v837 = vsel %vm803, %v834, 0
        %vm839 = vcmask 1043456
        %v841 = vsel %vm839, %v835, 0
        %843 = vmatpush.bf16.msra.mxu0 0
        %844 = vmatpush.bf16.msra.mxu0 0
        %845 = vmatpush.bf16.msra.mxu0 0
        %846 = vmatpush.bf16.msra.mxu0 0
        %847 = vmatpush.bf16.msra.mxu0 0
        %848 = vmatpush.bf16.msra.mxu0 0
        %849 = vmatpush.bf16.msra.mxu0 0
        %850 = vmatpush.bf16.msra.mxu0 %v841
        %851 = vmatmul.bf16.gmra.mxu0 %v837
        %v852 = vpop.f32.mrf.mxu0
        %v853 = vadd.f32 0.0, %v852
        %v854 = vpop.f32.mrf.mxu0
        %855 = vdwg.mxu0
        %v856 = vpack.c.bf16 %v853, %v853
        %v857 = vld [vmem:[%s12] sm:$0xff]
        %v858 = vpack.c.bf16 %v857, %v857
        %v860 = vsel %vm803, %v856, 0
        %v863 = vsel %vm839, %v858, 0
        %865 = vmatpush.bf16.msra.mxu0 0
        %866 = vmatpush.bf16.msra.mxu0 0
        %867 = vmatpush.bf16.msra.mxu0 0
        %868 = vmatpush.bf16.msra.mxu0 0
        %869 = vmatpush.bf16.msra.mxu0 0
        %870 = vmatpush.bf16.msra.mxu0 0
        %871 = vmatpush.bf16.msra.mxu0 0
        %872 = vmatpush.bf16.msra.mxu0 %v863
        %873 = vmatmul.bf16.gmra.mxu0 %v860
        %v874 = vpop.f32.mrf.mxu0
        %v875 = vadd.f32 0.0, %v874
        %v876 = vpop.f32.mrf.mxu0
        %877 = vdwg.mxu0
        %v879 = vperm.slane %v718, 0
        %v881 = vadd.f32 %v879, %v875
        %s882 = scalar_lea.vmem %s6, 32
        %v883 = vld [vmem:[%s882] sm:$0xff]
        %v884 = vld [vmem:[%s882 + $0x8] sm:$0xff]
        %v885 = vld [vmem:[%s882 + $0x10] sm:$0xff]
        %v886 = vld [vmem:[%s882 + $0x18] sm:$0xff]
        %v887 = vpack.c.bf16 %v884, %v883
        %v888 = vpack.c.bf16 %v886, %v885
        %s889 = scalar_lea.vmem %s7, 1
        %v890 = vld [vmem:[%s889] sm:$0x1]
        %v892 = vperm.slane %v890, 0
        %894 = vmatpush.bf16.msra.mxu0 0
        %895 = vmatpush.bf16.msra.mxu0 0
        %896 = vmatpush.bf16.msra.mxu0 0
        %897 = vmatpush.bf16.msra.mxu0 0
        %898 = vmatpush.bf16.msra.mxu0 0
        %899 = vmatpush.bf16.msra.mxu0 0
        %900 = vmatpush.bf16.msra.mxu0 %v888
        %901 = vmatpush.bf16.msra.mxu0 %v887
        %902 = vmatmul.bf16.gmra.mxu0 %v730
        %v903 = vpop.f32.mrf.mxu0
        %v904 = vadd.f32 %v892, %v903
        %v905 = vpop.f32.mrf.mxu0
        %906 = vdwg.mxu0
        %v907 = vmul.f32 %v904, 0.35355338
        %s908 = scalar_lea.vmem %s8, 32
        %v909 = vld [vmem:[%s908] sm:$0xff]
        %v910 = vld [vmem:[%s908 + $0x8] sm:$0xff]
        %v911 = vld [vmem:[%s908 + $0x10] sm:$0xff]
        %v912 = vld [vmem:[%s908 + $0x18] sm:$0xff]
        %v913 = vpack.c.bf16 %v910, %v909
        %v914 = vpack.c.bf16 %v912, %v911
        %s915 = scalar_lea.vmem %s9, 1
        %v916 = vld [vmem:[%s915] sm:$0x1]
        %v918 = vperm.slane %v916, 0
        %920 = vmatpush.bf16.msra.mxu0 0
        %921 = vmatpush.bf16.msra.mxu0 0
        %922 = vmatpush.bf16.msra.mxu0 0
        %923 = vmatpush.bf16.msra.mxu0 0
        %924 = vmatpush.bf16.msra.mxu0 0
        %925 = vmatpush.bf16.msra.mxu0 0
        %926 = vmatpush.bf16.msra.mxu0 %v914
        %927 = vmatpush.bf16.msra.mxu0 %v913
        %928 = vmatmul.bf16.gmra.mxu0 %v730
        %v929 = vpop.f32.mrf.mxu0
        %v930 = vadd.f32 %v918, %v929
        %v931 = vpop.f32.mrf.mxu0
        %932 = vdwg.mxu0
        %s933 = scalar_lea.vmem %s10, 32
        %v934 = vld [vmem:[%s933] sm:$0xff]
        %v935 = vld [vmem:[%s933 + $0x8] sm:$0xff]
        %v936 = vld [vmem:[%s933 + $0x10] sm:$0xff]
        %v937 = vld [vmem:[%s933 + $0x18] sm:$0xff]
        %v938 = vpack.c.bf16 %v935, %v934
        %v939 = vpack.c.bf16 %v937, %v936
        %s940 = scalar_lea.vmem %s11, 1
        %v941 = vld [vmem:[%s940] sm:$0x1]
        %v943 = vperm.slane %v941, 0
        %945 = vmatpush.bf16.msra.mxu0 0
        %946 = vmatpush.bf16.msra.mxu0 0
        %947 = vmatpush.bf16.msra.mxu0 0
        %948 = vmatpush.bf16.msra.mxu0 0
        %949 = vmatpush.bf16.msra.mxu0 0
        %950 = vmatpush.bf16.msra.mxu0 0
        %951 = vmatpush.bf16.msra.mxu0 %v939
        %952 = vmatpush.bf16.msra.mxu0 %v938
        %953 = vmatmul.bf16.gmra.mxu0 %v730
        %v954 = vpop.f32.mrf.mxu0
        %v955 = vadd.f32 %v943, %v954
        %v956 = vpop.f32.mrf.mxu0
        %957 = vdwg.mxu0
        %v958 = vpack.c.bf16 %v907, %v907
        %v959 = vpack.c.bf16 %v930, %v930
        %s960 = sld [smem:[#allocation2 + $0x1]]
        %v961 = vstv %s960
        %v962 = vmul.f32 %v961, %v674
        %v963 = vadd.f32 %v962, %v800
        %v965 = vsel %vm803, %v958, 0
        %v968 = vsel %vm803, %v959, 0
        %970 = vmatpush.bf16.xpose.msra.mxu0 0
        %971 = vmatpush.bf16.xpose.msra.mxu0 0
        %972 = vmatpush.bf16.xpose.msra.mxu0 0
        %973 = vmatpush.bf16.xpose.msra.mxu0 0
        %974 = vmatpush.bf16.xpose.msra.mxu0 0
        %975 = vmatpush.bf16.xpose.msra.mxu0 0
        %976 = vmatpush.bf16.xpose.msra.mxu0 0
        %977 = vmatpush.bf16.xpose.msra.mxu0 %v968
        %978 = vmatmul.bf16.gmra.mxu0 %v965
        %v979 = vpop.f32.mrf.mxu0
        %v980 = vadd.f32 %v963, %v979
        %v981 = vpop.f32.mrf.mxu0
        %982 = vdwg.mxu0
        %v983 = vsel %vm803, %v980, -inf
        %984 = vmax.xlane.f32.xlu0 %v983
        %v985 = vpop.xlane.xlu0 %984
        %v986 = vsub.f32 %v980, %v985
        %v987 = vmul.f32 %v986, 1.442695
        %v988 = vpow.pop %v987
        %v989 = vsel %vm803, %v988, 0.0
        %990 = vadd.xlane.f32.xlu0 %v989
        %v991 = vpop.xlane.xlu0 %990
        %v992 = vrcp.pop %v991
        %v993 = vmul.f32 %v988, %v992
        %v994 = vpack.c.bf16 %v993, %v993
        %v995 = vpack.c.bf16 %v955, %v955
        %v997 = vsel %vm803, %v994, 0
        %v1000 = vsel %vm839, %v995, 0
        %1002 = vmatpush.bf16.msra.mxu0 0
        %1003 = vmatpush.bf16.msra.mxu0 0
        %1004 = vmatpush.bf16.msra.mxu0 0
        %1005 = vmatpush.bf16.msra.mxu0 0
        %1006 = vmatpush.bf16.msra.mxu0 0
        %1007 = vmatpush.bf16.msra.mxu0 0
        %1008 = vmatpush.bf16.msra.mxu0 0
        %1009 = vmatpush.bf16.msra.mxu0 %v1000
        %1010 = vmatmul.bf16.gmra.mxu0 %v997
        %v1011 = vpop.f32.mrf.mxu0
        %v1012 = vadd.f32 0.0, %v1011
        %v1013 = vpop.f32.mrf.mxu0
        %1014 = vdwg.mxu0
        %v1015 = vpack.c.bf16 %v1012, %v1012
        %s1016 = scalar_lea.vmem %s12, 8
        %v1017 = vld [vmem:[%s1016] sm:$0xff]
        %v1018 = vpack.c.bf16 %v1017, %v1017
        %v1020 = vsel %vm803, %v1015, 0
        %v1023 = vsel %vm839, %v1018, 0
        %1025 = vmatpush.bf16.msra.mxu0 0
        %1026 = vmatpush.bf16.msra.mxu0 0
        %1027 = vmatpush.bf16.msra.mxu0 0
        %1028 = vmatpush.bf16.msra.mxu0 0
        %1029 = vmatpush.bf16.msra.mxu0 0
        %1030 = vmatpush.bf16.msra.mxu0 0
        %1031 = vmatpush.bf16.msra.mxu0 0
        %1032 = vmatpush.bf16.msra.mxu0 %v1023
        %1033 = vmatmul.bf16.gmra.mxu0 %v1020
        %v1034 = vpop.f32.mrf.mxu0
        %v1035 = vadd.f32 0.0, %v1034
        %v1036 = vpop.f32.mrf.mxu0
        %1037 = vdwg.mxu0
        %v1038 = vadd.f32 %v881, %v1035
        %s1039 = scalar_lea.vmem %s6, 64
        %v1040 = vld [vmem:[%s1039] sm:$0xff]
        %v1041 = vld [vmem:[%s1039 + $0x8] sm:$0xff]
        %v1042 = vld [vmem:[%s1039 + $0x10] sm:$0xff]
        %v1043 = vld [vmem:[%s1039 + $0x18] sm:$0xff]
        %v1044 = vpack.c.bf16 %v1041, %v1040
        %v1045 = vpack.c.bf16 %v1043, %v1042
        %s1046 = scalar_lea.vmem %s7, 2
        %v1047 = vld [vmem:[%s1046] sm:$0x1]
        %v1049 = vperm.slane %v1047, 0
        %1051 = vmatpush.bf16.msra.mxu0 0
        %1052 = vmatpush.bf16.msra.mxu0 0
        %1053 = vmatpush.bf16.msra.mxu0 0
        %1054 = vmatpush.bf16.msra.mxu0 0
        %1055 = vmatpush.bf16.msra.mxu0 0
        %1056 = vmatpush.bf16.msra.mxu0 0
        %1057 = vmatpush.bf16.msra.mxu0 %v1045
        %1058 = vmatpush.bf16.msra.mxu0 %v1044
        %1059 = vmatmul.bf16.gmra.mxu0 %v730
        %v1060 = vpop.f32.mrf.mxu0
        %v1061 = vadd.f32 %v1049, %v1060
        %v1062 = vpop.f32.mrf.mxu0
        %1063 = vdwg.mxu0
        %v1064 = vmul.f32 %v1061, 0.35355338
        %s1065 = scalar_lea.vmem %s8, 64
        %v1066 = vld [vmem:[%s1065] sm:$0xff]
        %v1067 = vld [vmem:[%s1065 + $0x8] sm:$0xff]
        %v1068 = vld [vmem:[%s1065 + $0x10] sm:$0xff]
        %v1069 = vld [vmem:[%s1065 + $0x18] sm:$0xff]
        %v1070 = vpack.c.bf16 %v1067, %v1066
        %v1071 = vpack.c.bf16 %v1069, %v1068
        %s1072 = scalar_lea.vmem %s9, 2
        %v1073 = vld [vmem:[%s1072] sm:$0x1]
        %v1075 = vperm.slane %v1073, 0
        %1077 = vmatpush.bf16.msra.mxu0 0
        %1078 = vmatpush.bf16.msra.mxu0 0
        %1079 = vmatpush.bf16.msra.mxu0 0
        %1080 = vmatpush.bf16.msra.mxu0 0
        %1081 = vmatpush.bf16.msra.mxu0 0
        %1082 = vmatpush.bf16.msra.mxu0 0
        %1083 = vmatpush.bf16.msra.mxu0 %v1071
        %1084 = vmatpush.bf16.msra.mxu0 %v1070
        %1085 = vmatmul.bf16.gmra.mxu0 %v730
        %v1086 = vpop.f32.mrf.mxu0
        %v1087 = vadd.f32 %v1075, %v1086
        %v1088 = vpop.f32.mrf.mxu0
        %1089 = vdwg.mxu0
        %s1090 = scalar_lea.vmem %s10, 64
        %v1091 = vld [vmem:[%s1090] sm:$0xff]
        %v1092 = vld [vmem:[%s1090 + $0x8] sm:$0xff]
        %v1093 = vld [vmem:[%s1090 + $0x10] sm:$0xff]
        %v1094 = vld [vmem:[%s1090 + $0x18] sm:$0xff]
        %v1095 = vpack.c.bf16 %v1092, %v1091
        %v1096 = vpack.c.bf16 %v1094, %v1093
        %s1097 = scalar_lea.vmem %s11, 2
        %v1098 = vld [vmem:[%s1097] sm:$0x1]
        %v1100 = vperm.slane %v1098, 0
        %1102 = vmatpush.bf16.msra.mxu0 0
        %1103 = vmatpush.bf16.msra.mxu0 0
        %1104 = vmatpush.bf16.msra.mxu0 0
        %1105 = vmatpush.bf16.msra.mxu0 0
        %1106 = vmatpush.bf16.msra.mxu0 0
        %1107 = vmatpush.bf16.msra.mxu0 0
        %1108 = vmatpush.bf16.msra.mxu0 %v1096
        %1109 = vmatpush.bf16.msra.mxu0 %v1095
        %1110 = vmatmul.bf16.gmra.mxu0 %v730
        %v1111 = vpop.f32.mrf.mxu0
        %v1112 = vadd.f32 %v1100, %v1111
        %v1113 = vpop.f32.mrf.mxu0
        %1114 = vdwg.mxu0
        %v1115 = vpack.c.bf16 %v1064, %v1064
        %v1116 = vpack.c.bf16 %v1087, %v1087
        %s1117 = sld [smem:[#allocation2 + $0x2]]
        %v1118 = vstv %s1117
        %v1119 = vmul.f32 %v1118, %v674
        %v1120 = vadd.f32 %v1119, %v800
        %v1122 = vsel %vm803, %v1115, 0
        %v1125 = vsel %vm803, %v1116, 0
        %1127 = vmatpush.bf16.xpose.msra.mxu0 0
        %1128 = vmatpush.bf16.xpose.msra.mxu0 0
        %1129 = vmatpush.bf16.xpose.msra.mxu0 0
        %1130 = vmatpush.bf16.xpose.msra.mxu0 0
        %1131 = vmatpush.bf16.xpose.msra.mxu0 0
        %1132 = vmatpush.bf16.xpose.msra.mxu0 0
        %1133 = vmatpush.bf16.xpose.msra.mxu0 0
        %1134 = vmatpush.bf16.xpose.msra.mxu0 %v1125
        %1135 = vmatmul.bf16.gmra.mxu0 %v1122
        %v1136 = vpop.f32.mrf.mxu0
        %v1137 = vadd.f32 %v1120, %v1136
        %v1138 = vpop.f32.mrf.mxu0
        %1139 = vdwg.mxu0
        %v1140 = vsel %vm803, %v1137, -inf
        %1141 = vmax.xlane.f32.xlu0 %v1140
        %v1142 = vpop.xlane.xlu0 %1141
        %v1143 = vsub.f32 %v1137, %v1142
        %v1144 = vmul.f32 %v1143, 1.442695
        %v1145 = vpow.pop %v1144
        %v1146 = vsel %vm803, %v1145, 0.0
        %1147 = vadd.xlane.f32.xlu0 %v1146
        %v1148 = vpop.xlane.xlu0 %1147
        %v1149 = vrcp.pop %v1148
        %v1150 = vmul.f32 %v1145, %v1149
        %v1151 = vpack.c.bf16 %v1150, %v1150
        %v1152 = vpack.c.bf16 %v1112, %v1112
        %v1154 = vsel %vm803, %v1151, 0
        %v1157 = vsel %vm839, %v1152, 0
        %1159 = vmatpush.bf16.msra.mxu0 0
        %1160 = vmatpush.bf16.msra.mxu0 0
        %1161 = vmatpush.bf16.msra.mxu0 0
        %1162 = vmatpush.bf16.msra.mxu0 0
        %1163 = vmatpush.bf16.msra.mxu0 0
        %1164 = vmatpush.bf16.msra.mxu0 0
        %1165 = vmatpush.bf16.msra.mxu0 0
        %1166 = vmatpush.bf16.msra.mxu0 %v1157
        %1167 = vmatmul.bf16.gmra.mxu0 %v1154
        %v1168 = vpop.f32.mrf.mxu0
        %v1169 = vadd.f32 0.0, %v1168
        %v1170 = vpop.f32.mrf.mxu0
        %1171 = vdwg.mxu0
        %v1172 = vpack.c.bf16 %v1169, %v1169
        %s1173 = scalar_lea.vmem %s12, 16
        %v1174 = vld [vmem:[%s1173] sm:$0xff]
        %v1175 = vpack.c.bf16 %v1174, %v1174
        %v1177 = vsel %vm803, %v1172, 0
        %v1180 = vsel %vm839, %v1175, 0
        %1182 = vmatpush.bf16.msra.mxu0 0
        %1183 = vmatpush.bf16.msra.mxu0 0
        %1184 = vmatpush.bf16.msra.mxu0 0
        %1185 = vmatpush.bf16.msra.mxu0 0
        %1186 = vmatpush.bf16.msra.mxu0 0
        %1187 = vmatpush.bf16.msra.mxu0 0
        %1188 = vmatpush.bf16.msra.mxu0 0
        %1189 = vmatpush.bf16.msra.mxu0 %v1180
        %1190 = vmatmul.bf16.gmra.mxu0 %v1177
        %v1191 = vpop.f32.mrf.mxu0
        %v1192 = vadd.f32 0.0, %v1191
        %v1193 = vpop.f32.mrf.mxu0
        %1194 = vdwg.mxu0
        %v1195 = vadd.f32 %v1038, %v1192
        %s1196 = scalar_lea.vmem %s6, 96
        %v1197 = vld [vmem:[%s1196] sm:$0xff]
        %v1198 = vld [vmem:[%s1196 + $0x8] sm:$0xff]
        %v1199 = vld [vmem:[%s1196 + $0x10] sm:$0xff]
        %v1200 = vld [vmem:[%s1196 + $0x18] sm:$0xff]
        %v1201 = vpack.c.bf16 %v1198, %v1197
        %v1202 = vpack.c.bf16 %v1200, %v1199
        %s1203 = scalar_lea.vmem %s7, 3
        %v1204 = vld [vmem:[%s1203] sm:$0x1]
        %v1206 = vperm.slane %v1204, 0
        %1208 = vmatpush.bf16.msra.mxu0 0
        %1209 = vmatpush.bf16.msra.mxu0 0
        %1210 = vmatpush.bf16.msra.mxu0 0
        %1211 = vmatpush.bf16.msra.mxu0 0
        %1212 = vmatpush.bf16.msra.mxu0 0
        %1213 = vmatpush.bf16.msra.mxu0 0
        %1214 = vmatpush.bf16.msra.mxu0 %v1202
        %1215 = vmatpush.bf16.msra.mxu0 %v1201
        %1216 = vmatmul.bf16.gmra.mxu0 %v730
        %v1217 = vpop.f32.mrf.mxu0
        %v1218 = vadd.f32 %v1206, %v1217
        %v1219 = vpop.f32.mrf.mxu0
        %1220 = vdwg.mxu0
        %v1221 = vmul.f32 %v1218, 0.35355338
        %s1222 = scalar_lea.vmem %s8, 96
        %v1223 = vld [vmem:[%s1222] sm:$0xff]
        %v1224 = vld [vmem:[%s1222 + $0x8] sm:$0xff]
        %v1225 = vld [vmem:[%s1222 + $0x10] sm:$0xff]
        %v1226 = vld [vmem:[%s1222 + $0x18] sm:$0xff]
        %v1227 = vpack.c.bf16 %v1224, %v1223
        %v1228 = vpack.c.bf16 %v1226, %v1225
        %s1229 = scalar_lea.vmem %s9, 3
        %v1230 = vld [vmem:[%s1229] sm:$0x1]
        %v1232 = vperm.slane %v1230, 0
        %1234 = vmatpush.bf16.msra.mxu0 0
        %1235 = vmatpush.bf16.msra.mxu0 0
        %1236 = vmatpush.bf16.msra.mxu0 0
        %1237 = vmatpush.bf16.msra.mxu0 0
        %1238 = vmatpush.bf16.msra.mxu0 0
        %1239 = vmatpush.bf16.msra.mxu0 0
        %1240 = vmatpush.bf16.msra.mxu0 %v1228
        %1241 = vmatpush.bf16.msra.mxu0 %v1227
        %1242 = vmatmul.bf16.gmra.mxu0 %v730
        %v1243 = vpop.f32.mrf.mxu0
        %v1244 = vadd.f32 %v1232, %v1243
        %v1245 = vpop.f32.mrf.mxu0
        %1246 = vdwg.mxu0
        %s1247 = scalar_lea.vmem %s10, 96
        %v1248 = vld [vmem:[%s1247] sm:$0xff]
        %v1249 = vld [vmem:[%s1247 + $0x8] sm:$0xff]
        %v1250 = vld [vmem:[%s1247 + $0x10] sm:$0xff]
        %v1251 = vld [vmem:[%s1247 + $0x18] sm:$0xff]
        %v1252 = vpack.c.bf16 %v1249, %v1248
        %v1253 = vpack.c.bf16 %v1251, %v1250
        %s1254 = scalar_lea.vmem %s11, 3
        %v1255 = vld [vmem:[%s1254] sm:$0x1]
        %v1257 = vperm.slane %v1255, 0
        %1259 = vmatpush.bf16.msra.mxu0 0
        %1260 = vmatpush.bf16.msra.mxu0 0
        %1261 = vmatpush.bf16.msra.mxu0 0
        %1262 = vmatpush.bf16.msra.mxu0 0
        %1263 = vmatpush.bf16.msra.mxu0 0
        %1264 = vmatpush.bf16.msra.mxu0 0
        %1265 = vmatpush.bf16.msra.mxu0 %v1253
        %1266 = vmatpush.bf16.msra.mxu0 %v1252
        %1267 = vmatmul.bf16.gmra.mxu0 %v730
        %v1268 = vpop.f32.mrf.mxu0
        %v1269 = vadd.f32 %v1257, %v1268
        %v1270 = vpop.f32.mrf.mxu0
        %1271 = vdwg.mxu0
        %v1272 = vpack.c.bf16 %v1221, %v1221
        %v1273 = vpack.c.bf16 %v1244, %v1244
        %s1274 = sld [smem:[#allocation2 + $0x3]]
        %v1275 = vstv %s1274
        %v1276 = vmul.f32 %v1275, %v674
        %v1277 = vadd.f32 %v1276, %v800
        %v1279 = vsel %vm803, %v1272, 0
        %v1282 = vsel %vm803, %v1273, 0
        %1284 = vmatpush.bf16.xpose.msra.mxu0 0
        %1285 = vmatpush.bf16.xpose.msra.mxu0 0
        %1286 = vmatpush.bf16.xpose.msra.mxu0 0
        %1287 = vmatpush.bf16.xpose.msra.mxu0 0
        %1288 = vmatpush.bf16.xpose.msra.mxu0 0
        %1289 = vmatpush.bf16.xpose.msra.mxu0 0
        %1290 = vmatpush.bf16.xpose.msra.mxu0 0
        %1291 = vmatpush.bf16.xpose.msra.mxu0 %v1282
        %1292 = vmatmul.bf16.gmra.mxu0 %v1279
        %v1293 = vpop.f32.mrf.mxu0
        %v1294 = vadd.f32 %v1277, %v1293
        %v1295 = vpop.f32.mrf.mxu0
        %1296 = vdwg.mxu0
        %v1297 = vsel %vm803, %v1294, -inf
        %1298 = vmax.xlane.f32.xlu0 %v1297
        %v1299 = vpop.xlane.xlu0 %1298
        %v1300 = vsub.f32 %v1294, %v1299
        %v1301 = vmul.f32 %v1300, 1.442695
        %v1302 = vpow.pop %v1301
        %v1303 = vsel %vm803, %v1302, 0.0
        %1304 = vadd.xlane.f32.xlu0 %v1303
        %v1305 = vpop.xlane.xlu0 %1304
        %v1306 = vrcp.pop %v1305
        %v1307 = vmul.f32 %v1302, %v1306
        %v1308 = vpack.c.bf16 %v1307, %v1307
        %v1309 = vpack.c.bf16 %v1269, %v1269
        %v1311 = vsel %vm803, %v1308, 0
        %v1314 = vsel %vm839, %v1309, 0
        %1316 = vmatpush.bf16.msra.mxu0 0
        %1317 = vmatpush.bf16.msra.mxu0 0
        %1318 = vmatpush.bf16.msra.mxu0 0
        %1319 = vmatpush.bf16.msra.mxu0 0
        %1320 = vmatpush.bf16.msra.mxu0 0
        %1321 = vmatpush.bf16.msra.mxu0 0
        %1322 = vmatpush.bf16.msra.mxu0 0
        %1323 = vmatpush.bf16.msra.mxu0 %v1314
        %1324 = vmatmul.bf16.gmra.mxu0 %v1311
        %v1325 = vpop.f32.mrf.mxu0
        %v1326 = vadd.f32 0.0, %v1325
        %v1327 = vpop.f32.mrf.mxu0
        %1328 = vdwg.mxu0
        %v1329 = vpack.c.bf16 %v1326, %v1326
        %s1330 = scalar_lea.vmem %s12, 24
        %v1331 = vld [vmem:[%s1330] sm:$0xff]
        %v1332 = vpack.c.bf16 %v1331, %v1331
        %v1334 = vsel %vm803, %v1329, 0
        %v1337 = vsel %vm839, %v1332, 0
        %1339 = vmatpush.bf16.msra.mxu0 0
        %1340 = vmatpush.bf16.msra.mxu0 0
        %1341 = vmatpush.bf16.msra.mxu0 0
        %1342 = vmatpush.bf16.msra.mxu0 0
        %1343 = vmatpush.bf16.msra.mxu0 0
        %1344 = vmatpush.bf16.msra.mxu0 0
        %1345 = vmatpush.bf16.msra.mxu0 0
        %1346 = vmatpush.bf16.msra.mxu0 %v1337
        %1347 = vmatmul.bf16.gmra.mxu0 %v1334
        %v1348 = vpop.f32.mrf.mxu0
        %v1349 = vadd.f32 0.0, %v1348
        %v1350 = vpop.f32.mrf.mxu0
        %1351 = vdwg.mxu0
        %v1352 = vadd.f32 %v1195, %v1349
        %v1353 = vadd.f32 %v676, %v1352
        %v1354 = vld [vmem:[%s14] sm:$0x1]
        %v1355 = vld [vmem:[%s15] sm:$0x1]
        %v1356 = vsel %vm679, %v1353, 0.0
        %1357 = vadd.xlane.f32.xlu0 %v1356
        %v1358 = vpop.xlane.xlu0 %1357
        %v1359 = vmul.f32 %v1358, %v689
        %v1360 = vsub.f32 %v1353, %v1359
        %v1361 = vmul.f32 %v1360, %v1360
        %v1362 = vsel %vm679, %v1361, 0.0
        %1363 = vadd.xlane.f32.xlu0 %v1362
        %v1364 = vpop.xlane.xlu0 %1363
        %v1365 = vmul.f32 %v1364, %v689
        %v1366 = vadd.f32 %v1365, 1e-05
        %v1367 = vrsqrt.pop %v1366
        %v1368 = vmul.f32 %v1367, %v1366
        %v1369 = vmul.f32 %v1368, %v1367
        %v1370 = vmul.f32 0.5, %v1369
        %v1371 = vsub.f32 1.5, %v1370
        %v1372 = vmul.f32 %v1367, %v1371
        %vm1373 = vweird.f32 %v1366
        %vm1374 = vweird.f32 %v1367
        %vm1375 = vmor %vm1373, %vm1374
        %v1376 = vsel %vm1375, %v1367, %v1372
        %v1377 = vmul.f32 %v1360, %v1376
        %v1379 = vperm.slane %v1354, 0
        %v1381 = vmul.f32 %v1377, %v1379
        %v1383 = vperm.slane %v1355, 0
        %v1385 = vadd.f32 %v1381, %v1383
        %v1386 = vpack.c.bf16 %v1385, %v1385
        %v1387 = vld [vmem:[%s16] sm:$0xff]
        %v1388 = vld [vmem:[%s16 + $0x8] sm:$0xff]
        %v1389 = vld [vmem:[%s16 + $0x10] sm:$0xff]
        %v1390 = vld [vmem:[%s16 + $0x18] sm:$0xff]
        %v1391 = vpack.c.bf16 %v1388, %v1387
        %v1392 = vpack.c.bf16 %v1390, %v1389
        %v1393 = vld [vmem:[%s17] sm:$0x1]
        %v1395 = vperm.slane %v1393, 0
        %v1398 = vsel %vm679, %v1386, 0
        %1400 = vmatpush.bf16.msra.mxu0 0
        %1401 = vmatpush.bf16.msra.mxu0 0
        %1402 = vmatpush.bf16.msra.mxu0 0
        %1403 = vmatpush.bf16.msra.mxu0 0
        %1404 = vmatpush.bf16.msra.mxu0 0
        %1405 = vmatpush.bf16.msra.mxu0 0
        %1406 = vmatpush.bf16.msra.mxu0 %v1392
        %1407 = vmatpush.bf16.msra.mxu0 %v1391
        %1408 = vmatmul.bf16.gmra.mxu0 %v1398
        %v1409 = vpop.f32.mrf.mxu0
        %v1410 = vadd.f32 %v1395, %v1409
        %v1411 = vpop.f32.mrf.mxu0
        %1412 = vdwg.mxu0
        %v1413 = vmul.f32 %v1410, %v1410
        %v1414 = vmul.f32 %v1410, %v1413
        %v1415 = vmul.f32 %v1414, 0.044715
        %v1416 = vadd.f32 %v1410, %v1415
        %v1417 = vmul.f32 %v1416, 0.7978846
        %v1418 = vtanh.pop %v1417
        %v1419 = vadd.f32 %v1418, 1.0
        %v1420 = vmul.f32 %v1419, 0.5
        %v1421 = vmul.f32 %v1410, %v1420
        %v1422 = vpack.c.bf16 %v1421, %v1421
        %v1423 = vld [vmem:[%s18] sm:$0xff]
        %v1424 = vld [vmem:[%s18 + $0x8] sm:$0xff]
        %v1425 = vld [vmem:[%s18 + $0x10] sm:$0xff]
        %v1426 = vld [vmem:[%s18 + $0x18] sm:$0xff]
        %v1427 = vld [vmem:[%s18 + $0x20] sm:$0xff]
        %v1428 = vld [vmem:[%s18 + $0x28] sm:$0xff]
        %v1429 = vld [vmem:[%s18 + $0x30] sm:$0xff]
        %v1430 = vld [vmem:[%s18 + $0x38] sm:$0xff]
        %v1431 = vld [vmem:[%s18 + $0x40] sm:$0xff]
        %v1432 = vld [vmem:[%s18 + $0x48] sm:$0xff]
        %v1433 = vld [vmem:[%s18 + $0x50] sm:$0xff]
        %v1434 = vld [vmem:[%s18 + $0x58] sm:$0xff]
        %v1435 = vld [vmem:[%s18 + $0x60] sm:$0xff]
        %v1436 = vld [vmem:[%s18 + $0x68] sm:$0xff]
        %v1437 = vld [vmem:[%s18 + $0x70] sm:$0xff]
        %v1438 = vld [vmem:[%s18 + $0x78] sm:$0xff]
        %v1439 = vpack.c.bf16 %v1424, %v1423
        %v1440 = vpack.c.bf16 %v1426, %v1425
        %v1441 = vpack.c.bf16 %v1428, %v1427
        %v1442 = vpack.c.bf16 %v1430, %v1429
        %v1443 = vpack.c.bf16 %v1432, %v1431
        %v1444 = vpack.c.bf16 %v1434, %v1433
        %v1445 = vpack.c.bf16 %v1436, %v1435
        %v1446 = vpack.c.bf16 %v1438, %v1437
        %1447 = vmatpush.bf16.msra.mxu0 %v1446
        %1448 = vmatpush.bf16.msra.mxu0 %v1445
        %1449 = vmatpush.bf16.msra.mxu0 %v1444
        %1450 = vmatpush.bf16.msra.mxu0 %v1443
        %1451 = vmatpush.bf16.msra.mxu0 %v1442
        %1452 = vmatpush.bf16.msra.mxu0 %v1441
        %1453 = vmatpush.bf16.msra.mxu0 %v1440
        %1454 = vmatpush.bf16.msra.mxu0 %v1439
        %1455 = vmatmul.bf16.gmra.mxu0 %v1422
        %v1456 = vpop.f32.mrf.mxu0
        %v1457 = vadd.f32 0.0, %v1456
        %v1458 = vpop.f32.mrf.mxu0
        %1459 = vdwg.mxu0
        %v1460 = vadd.f32 %v1353, %v1457
        %v1461 = vld [vmem:[%s19] sm:$0x1]
        %v1463 = vperm.slane %v1461, 0
        %v1465 = vadd.f32 %v1460, %v1463
        %1466 = vst.msk [vmem:[%s672] sm:$0xff] %vm679, %v1465
        %p1467 = scmp.lt.s32.totalorder %s32, 1
        %s1468 = scalar_select %p1467, %s32, 1
        %s1469 = smul.addr %s1468, 8
        %s1470 = scalar_lea.vmem %s20, %s1469
        // Predicated region
        $region105: #{smiles_transformer_forward.6} parent=99 // pred_check
          %p1471 = pneg %p485
        $region106: #{smiles_transformer_forward.6} parent=99 // pred_check_branch
          %1473 = sbr.rel (%p1471) target = $region108
        $region107: #{smiles_transformer_forward.6} parent=99 // pred_region
          _
        $region108: #{smiles_transformer_forward.6} parent=99 // pred_fallthru
          _
      $region100: #{smiles_transformer_forward.6} parent=5 // pred_fallthru
        _
      %p1474 = scmp.le.s32.totalorder 2, %s27
      // Predicated region
      $region109: #{smiles_transformer_forward.6} parent=5 // pred_check
        %p1475 = pneg %p1474
      $region110: #{smiles_transformer_forward.6} parent=5 // pred_check_branch
        %1477 = sbr.rel (%p1475) target = $region112
      $region111: #{smiles_transformer_forward.6} parent=5 // pred_region
        %s1478 = ssub.s32 %s27, 2
        // Predicated region
        $region113: #{smiles_transformer_forward.6} parent=111 // pred_check
          %p1479 = pneg %p491
        $region114: #{smiles_transformer_forward.6} parent=111 // pred_check_branch
          %1481 = sbr.rel (%p1479) target = $region116
        $region115: #{smiles_transformer_forward.6} parent=111 // pred_region
          %p1482 = scmp.lt.s32.totalorder %s33, 1
          %s1483 = scalar_select %p1482, %s33, 1
          %s1484 = smul.addr %s1483, 8
          %s1485 = scalar_lea.vmem %s20, %s1484
        $region116: #{smiles_transformer_forward.6} parent=111 // pred_fallthru
          _
      $region112: #{smiles_transformer_forward.6} parent=5 // pred_fallthru
        _
    $region6: #{smiles_transformer_forward.6} parent=1 // loop_footer
      %s31 = sadd.s32 1, %s27
    $region7: #{smiles_transformer_forward.6} parent=1 // loop_footer_branch
      %26 = sbr.rel target = $region3
    $region8: #{smiles_transformer_forward.6} parent=1 // loop_exit
      _
    %1486 = vsyncpa [#allocation3], 1
    %s1487 = scalar_lea.sflag [#allocation3], 1
    %1488 = vsyncpa %s1487, 1

// kernel: smiles_transformer_forward.9
$region0: #{smiles_transformer_forward.9}
  #allocation0 [shape = 'u32[]', space=smem, size = 0x4, offset = 0x4, fixed_abs, tag = 'smem constant byte address 0x4 - core index']
  #allocation1 [shape = 'u32[72,128]{1,0:T(1,128)}', space=vmem, size = 0x9000, scoped, tag = 'internal scratch']
  %s0 = inlined_call_operand.vmem [shape: f32[2,9,32], index: 0, kind: input, shape index: {}]
  %s1 = inlined_call_operand.vmem [shape: f32[1,32], index: 1, kind: input, shape index: {}]
  %s2 = inlined_call_operand.vmem [shape: f32[1,32], index: 2, kind: input, shape index: {}]
  %s3 = inlined_call_operand.vmem [shape: f32[4,32,8], index: 3, kind: input, shape index: {}]
  %s4 = inlined_call_operand.vmem [shape: f32[4,1,8], index: 4, kind: input, shape index: {}]
  %s5 = inlined_call_operand.vmem [shape: f32[4,32,8], index: 5, kind: input, shape index: {}]
  %s6 = inlined_call_operand.vmem [shape: f32[4,1,8], index: 6, kind: input, shape index: {}]
  %s7 = inlined_call_operand.vmem [shape: f32[4,32,8], index: 7, kind: input, shape index: {}]
  %s8 = inlined_call_operand.vmem [shape: f32[4,1,8], index: 8, kind: input, shape index: {}]
  %s9 = inlined_call_operand.vmem [shape: f32[4,8,32], index: 9, kind: input, shape index: {}]
  %s10 = inlined_call_operand.vmem [shape: f32[1,32], index: 10, kind: input, shape index: {}]
  %s11 = inlined_call_operand.vmem [shape: f32[1,32], index: 11, kind: input, shape index: {}]
  %s12 = inlined_call_operand.vmem [shape: f32[1,32], index: 12, kind: input, shape index: {}]
  %s13 = inlined_call_operand.vmem [shape: f32[32,128], index: 13, kind: input, shape index: {}]
  %s14 = inlined_call_operand.vmem [shape: f32[1,128], index: 14, kind: input, shape index: {}]
  %s15 = inlined_call_operand.vmem [shape: f32[128,32], index: 15, kind: input, shape index: {}]
  %s16 = inlined_call_operand.vmem [shape: f32[1,32], index: 16, kind: input, shape index: {}]
  %s17 = inlined_call_operand.vmem [shape: f32[2,9,32], index: 17, kind: output, shape index: {}]
  %s18 = sld [smem:[#allocation0]]
  $region101: #{smiles_transformer_forward.9} parent=0
    _
  %s20 = ssub.s32 1, %s18
  %s21 = scalar_select 0, %s20, %s18
  loop: start=0, step=1, limit=4
  $region2: #{smiles_transformer_forward.9} parent=0 // loop_pre_header
    _
  $region3: #{smiles_transformer_forward.9} parent=0 // loop_header
    %s23 = sphi 0, %s27
    %p24 = scmp.ge.s32.totalorder %s23, 4
    %s33 = sphi 0, %s35
    %s36 = sphi 0, %s33
    %s37 = sphi 0, %s36
    %s53 = sphi 0, %s37
    %s57 = sphi 0, %s57
    %s59 = sphi 0, %s57
    %s60 = sphi 0, %s59
    %s74 = sphi 0, %s60
    %s78 = sphi 0, %s78
    %s80 = sphi 0, %s78
    %s81 = sphi 0, %s80
    %s95 = sphi 0, %s81
    %s99 = sphi 0, %s99
    %s101 = sphi 0, %s99
    %s102 = sphi 0, %s101
    %s116 = sphi 0, %s102
    %s120 = sphi 0, %s120
    %s122 = sphi 0, %s120
    %s123 = sphi 0, %s122
    %s137 = sphi 0, %s123
    %s141 = sphi 0, %s141
    %s143 = sphi 0, %s141
    %s144 = sphi 0, %s143
    %s158 = sphi 0, %s144
    %s162 = sphi 0, %s162
    %s164 = sphi 0, %s162
    %s165 = sphi 0, %s164
    %s179 = sphi 0, %s165
    %s183 = sphi 0, %s183
    %s185 = sphi 0, %s183
    %s186 = sphi 0, %s185
    %s200 = sphi 0, %s186
    %s204 = sphi 0, %s204
    %s206 = sphi 0, %s204
    %s207 = sphi 0, %s206
    %s221 = sphi 0, %s207
    %s225 = sphi 0, %s225
    %s227 = sphi 0, %s225
    %s228 = sphi 0, %s227
    %s242 = sphi 0, %s228
    %s246 = sphi 0, %s246
    %s248 = sphi 0, %s246
    %s249 = sphi 0, %s248
    %s263 = sphi 0, %s249
    %s267 = sphi 0, %s267
    %s269 = sphi 0, %s267
    %s270 = sphi 0, %s269
    %s284 = sphi 0, %s270
    %s288 = sphi 0, %s288
    %s290 = sphi 0, %s288
    %s291 = sphi 0, %s290
    %s305 = sphi 0, %s291
    %s309 = sphi 0, %s309
    %s311 = sphi 0, %s309
    %s312 = sphi 0, %s311
    %s326 = sphi 0, %s312
    %s330 = sphi 0, %s330
    %s332 = sphi 0, %s330
    %s333 = sphi 0, %s332
    %s347 = sphi 0, %s333
    %s351 = sphi 0, %s351
    %s353 = sphi 0, %s351
    %s354 = sphi 0, %s353
    %s368 = sphi 0, %s354
    %s372 = sphi 0, %s372
    %s374 = sphi 0, %s372
    %s375 = sphi 0, %s374
    %s389 = sphi 0, %s375
    %s395 = sphi 0, %s397
    %s398 = sphi 0, %s395
    %s399 = sphi 0, %s398
    %s415 = sphi 0, %s399
  $region4: #{smiles_transformer_forward.9} parent=0 // loop_header_branch
    %26 = sbr.rel (%p24) target = $region8
  $region5: #{smiles_transformer_forward.9} parent=0 // loop_body
    %s28 = ssub.s32 %s23, 1
    %s29 = ssub.s32 %s23, 2
    %s30 = sadd.s32 %s23, 1
    %s31 = ssub.s32 %s23, %s30
    %p32 = scmp.eq.s32.totalorder %s31, 0
    %s34 = sadd.s32 %s33, 1
    %s35 = scalar_select %p32, %s33, %s34
    %p38 = pneg %p32
    %p39 = scmp.eq.s32.totalorder %s23, 1
    %p40 = por %p38, %p39
    %p41 = scmp.ne.s32.totalorder %s33, %s36
    %p42 = scmp.eq.s32.totalorder %s23, 0
    %p43 = por %p41, %p42
    %p44 = scmp.ne.s32.totalorder %s33, %s36
    %p45 = scmp.eq.s32.totalorder %s28, 1
    %p46 = por %p44, %p45
    %p47 = scmp.ne.s32.totalorder %s36, %s37
    %p48 = scmp.eq.s32.totalorder %s28, 0
    %p49 = por %p47, %p48
    %p50 = scmp.ne.s32.totalorder %s36, %s37
    %p51 = scmp.eq.s32.totalorder %s29, 1
    %p52 = por %p50, %p51
    %p54 = scmp.ne.s32.totalorder %s37, %s53
    %p55 = scmp.eq.s32.totalorder %s29, 0
    %p56 = por %p54, %p55
    %s58 = sadd.s32 %s57, 1
    %p61 = scmp.eq.s32.totalorder %s23, 1
    %p62 = scmp.ne.s32.totalorder %s57, %s59
    %p63 = scmp.eq.s32.totalorder %s23, 0
    %p64 = por %p62, %p63
    %p65 = scmp.ne.s32.totalorder %s57, %s59
    %p66 = scmp.eq.s32.totalorder %s28, 1
    %p67 = por %p65, %p66
    %p68 = scmp.ne.s32.totalorder %s59, %s60
    %p69 = scmp.eq.s32.totalorder %s28, 0
    %p70 = por %p68, %p69
    %p71 = scmp.ne.s32.totalorder %s59, %s60
    %p72 = scmp.eq.s32.totalorder %s29, 1
    %p73 = por %p71, %p72
    %p75 = scmp.ne.s32.totalorder %s60, %s74
    %p76 = scmp.eq.s32.totalorder %s29, 0
    %p77 = por %p75, %p76
    %s79 = sadd.s32 %s78, 1
    %p82 = scmp.eq.s32.totalorder %s23, 1
    %p83 = scmp.ne.s32.totalorder %s78, %s80
    %p84 = scmp.eq.s32.totalorder %s23, 0
    %p85 = por %p83, %p84
    %p86 = scmp.ne.s32.totalorder %s78, %s80
    %p87 = scmp.eq.s32.totalorder %s28, 1
    %p88 = por %p86, %p87
    %p89 = scmp.ne.s32.totalorder %s80, %s81
    %p90 = scmp.eq.s32.totalorder %s28, 0
    %p91 = por %p89, %p90
    %p92 = scmp.ne.s32.totalorder %s80, %s81
    %p93 = scmp.eq.s32.totalorder %s29, 1
    %p94 = por %p92, %p93
    %p96 = scmp.ne.s32.totalorder %s81, %s95
    %p97 = scmp.eq.s32.totalorder %s29, 0
    %p98 = por %p96, %p97
    %s100 = sadd.s32 %s99, 1
    %p103 = scmp.eq.s32.totalorder %s23, 1
    %p104 = scmp.ne.s32.totalorder %s99, %s101
    %p105 = scmp.eq.s32.totalorder %s23, 0
    %p106 = por %p104, %p105
    %p107 = scmp.ne.s32.totalorder %s99, %s101
    %p108 = scmp.eq.s32.totalorder %s28, 1
    %p109 = por %p107, %p108
    %p110 = scmp.ne.s32.totalorder %s101, %s102
    %p111 = scmp.eq.s32.totalorder %s28, 0
    %p112 = por %p110, %p111
    %p113 = scmp.ne.s32.totalorder %s101, %s102
    %p114 = scmp.eq.s32.totalorder %s29, 1
    %p115 = por %p113, %p114
    %p117 = scmp.ne.s32.totalorder %s102, %s116
    %p118 = scmp.eq.s32.totalorder %s29, 0
    %p119 = por %p117, %p118
    %s121 = sadd.s32 %s120, 1
    %p124 = scmp.eq.s32.totalorder %s23, 1
    %p125 = scmp.ne.s32.totalorder %s120, %s122
    %p126 = scmp.eq.s32.totalorder %s23, 0
    %p127 = por %p125, %p126
    %p128 = scmp.ne.s32.totalorder %s120, %s122
    %p129 = scmp.eq.s32.totalorder %s28, 1
    %p130 = por %p128, %p129
    %p131 = scmp.ne.s32.totalorder %s122, %s123
    %p132 = scmp.eq.s32.totalorder %s28, 0
    %p133 = por %p131, %p132
    %p134 = scmp.ne.s32.totalorder %s122, %s123
    %p135 = scmp.eq.s32.totalorder %s29, 1
    %p136 = por %p134, %p135
    %p138 = scmp.ne.s32.totalorder %s123, %s137
    %p139 = scmp.eq.s32.totalorder %s29, 0
    %p140 = por %p138, %p139
    %s142 = sadd.s32 %s141, 1
    %p145 = scmp.eq.s32.totalorder %s23, 1
    %p146 = scmp.ne.s32.totalorder %s141, %s143
    %p147 = scmp.eq.s32.totalorder %s23, 0
    %p148 = por %p146, %p147
    %p149 = scmp.ne.s32.totalorder %s141, %s143
    %p150 = scmp.eq.s32.totalorder %s28, 1
    %p151 = por %p149, %p150
    %p152 = scmp.ne.s32.totalorder %s143, %s144
    %p153 = scmp.eq.s32.totalorder %s28, 0
    %p154 = por %p152, %p153
    %p155 = scmp.ne.s32.totalorder %s143, %s144
    %p156 = scmp.eq.s32.totalorder %s29, 1
    %p157 = por %p155, %p156
    %p159 = scmp.ne.s32.totalorder %s144, %s158
    %p160 = scmp.eq.s32.totalorder %s29, 0
    %p161 = por %p159, %p160
    %s163 = sadd.s32 %s162, 1
    %p166 = scmp.eq.s32.totalorder %s23, 1
    %p167 = scmp.ne.s32.totalorder %s162, %s164
    %p168 = scmp.eq.s32.totalorder %s23, 0
    %p169 = por %p167, %p168
    %p170 = scmp.ne.s32.totalorder %s162, %s164
    %p171 = scmp.eq.s32.totalorder %s28, 1
    %p172 = por %p170, %p171
    %p173 = scmp.ne.s32.totalorder %s164, %s165
    %p174 = scmp.eq.s32.totalorder %s28, 0
    %p175 = por %p173, %p174
    %p176 = scmp.ne.s32.totalorder %s164, %s165
    %p177 = scmp.eq.s32.totalorder %s29, 1
    %p178 = por %p176, %p177
    %p180 = scmp.ne.s32.totalorder %s165, %s179
    %p181 = scmp.eq.s32.totalorder %s29, 0
    %p182 = por %p180, %p181
    %s184 = sadd.s32 %s183, 1
    %p187 = scmp.eq.s32.totalorder %s23, 1
    %p188 = scmp.ne.s32.totalorder %s183, %s185
    %p189 = scmp.eq.s32.totalorder %s23, 0
    %p190 = por %p188, %p189
    %p191 = scmp.ne.s32.totalorder %s183, %s185
    %p192 = scmp.eq.s32.totalorder %s28, 1
    %p193 = por %p191, %p192
    %p194 = scmp.ne.s32.totalorder %s185, %s186
    %p195 = scmp.eq.s32.totalorder %s28, 0
    %p196 = por %p194, %p195
    %p197 = scmp.ne.s32.totalorder %s185, %s186
    %p198 = scmp.eq.s32.totalorder %s29, 1
    %p199 = por %p197, %p198
    %p201 = scmp.ne.s32.totalorder %s186, %s200
    %p202 = scmp.eq.s32.totalorder %s29, 0
    %p203 = por %p201, %p202
    %s205 = sadd.s32 %s204, 1
    %p208 = scmp.eq.s32.totalorder %s23, 1
    %p209 = scmp.ne.s32.totalorder %s204, %s206
    %p210 = scmp.eq.s32.totalorder %s23, 0
    %p211 = por %p209, %p210
    %p212 = scmp.ne.s32.totalorder %s204, %s206
    %p213 = scmp.eq.s32.totalorder %s28, 1
    %p214 = por %p212, %p213
    %p215 = scmp.ne.s32.totalorder %s206, %s207
    %p216 = scmp.eq.s32.totalorder %s28, 0
    %p217 = por %p215, %p216
    %p218 = scmp.ne.s32.totalorder %s206, %s207
    %p219 = scmp.eq.s32.totalorder %s29, 1
    %p220 = por %p218, %p219
    %p222 = scmp.ne.s32.totalorder %s207, %s221
    %p223 = scmp.eq.s32.totalorder %s29, 0
    %p224 = por %p222, %p223
    %s226 = sadd.s32 %s225, 1
    %p229 = scmp.eq.s32.totalorder %s23, 1
    %p230 = scmp.ne.s32.totalorder %s225, %s227
    %p231 = scmp.eq.s32.totalorder %s23, 0
    %p232 = por %p230, %p231
    %p233 = scmp.ne.s32.totalorder %s225, %s227
    %p234 = scmp.eq.s32.totalorder %s28, 1
    %p235 = por %p233, %p234
    %p236 = scmp.ne.s32.totalorder %s227, %s228
    %p237 = scmp.eq.s32.totalorder %s28, 0
    %p238 = por %p236, %p237
    %p239 = scmp.ne.s32.totalorder %s227, %s228
    %p240 = scmp.eq.s32.totalorder %s29, 1
    %p241 = por %p239, %p240
    %p243 = scmp.ne.s32.totalorder %s228, %s242
    %p244 = scmp.eq.s32.totalorder %s29, 0
    %p245 = por %p243, %p244
    %s247 = sadd.s32 %s246, 1
    %p250 = scmp.eq.s32.totalorder %s23, 1
    %p251 = scmp.ne.s32.totalorder %s246, %s248
    %p252 = scmp.eq.s32.totalorder %s23, 0
    %p253 = por %p251, %p252
    %p254 = scmp.ne.s32.totalorder %s246, %s248
    %p255 = scmp.eq.s32.totalorder %s28, 1
    %p256 = por %p254, %p255
    %p257 = scmp.ne.s32.totalorder %s248, %s249
    %p258 = scmp.eq.s32.totalorder %s28, 0
    %p259 = por %p257, %p258
    %p260 = scmp.ne.s32.totalorder %s248, %s249
    %p261 = scmp.eq.s32.totalorder %s29, 1
    %p262 = por %p260, %p261
    %p264 = scmp.ne.s32.totalorder %s249, %s263
    %p265 = scmp.eq.s32.totalorder %s29, 0
    %p266 = por %p264, %p265
    %s268 = sadd.s32 %s267, 1
    %p271 = scmp.eq.s32.totalorder %s23, 1
    %p272 = scmp.ne.s32.totalorder %s267, %s269
    %p273 = scmp.eq.s32.totalorder %s23, 0
    %p274 = por %p272, %p273
    %p275 = scmp.ne.s32.totalorder %s267, %s269
    %p276 = scmp.eq.s32.totalorder %s28, 1
    %p277 = por %p275, %p276
    %p278 = scmp.ne.s32.totalorder %s269, %s270
    %p279 = scmp.eq.s32.totalorder %s28, 0
    %p280 = por %p278, %p279
    %p281 = scmp.ne.s32.totalorder %s269, %s270
    %p282 = scmp.eq.s32.totalorder %s29, 1
    %p283 = por %p281, %p282
    %p285 = scmp.ne.s32.totalorder %s270, %s284
    %p286 = scmp.eq.s32.totalorder %s29, 0
    %p287 = por %p285, %p286
    %s289 = sadd.s32 %s288, 1
    %p292 = scmp.eq.s32.totalorder %s23, 1
    %p293 = scmp.ne.s32.totalorder %s288, %s290
    %p294 = scmp.eq.s32.totalorder %s23, 0
    %p295 = por %p293, %p294
    %p296 = scmp.ne.s32.totalorder %s288, %s290
    %p297 = scmp.eq.s32.totalorder %s28, 1
    %p298 = por %p296, %p297
    %p299 = scmp.ne.s32.totalorder %s290, %s291
    %p300 = scmp.eq.s32.totalorder %s28, 0
    %p301 = por %p299, %p300
    %p302 = scmp.ne.s32.totalorder %s290, %s291
    %p303 = scmp.eq.s32.totalorder %s29, 1
    %p304 = por %p302, %p303
    %p306 = scmp.ne.s32.totalorder %s291, %s305
    %p307 = scmp.eq.s32.totalorder %s29, 0
    %p308 = por %p306, %p307
    %s310 = sadd.s32 %s309, 1
    %p313 = scmp.eq.s32.totalorder %s23, 1
    %p314 = scmp.ne.s32.totalorder %s309, %s311
    %p315 = scmp.eq.s32.totalorder %s23, 0
    %p316 = por %p314, %p315
    %p317 = scmp.ne.s32.totalorder %s309, %s311
    %p318 = scmp.eq.s32.totalorder %s28, 1
    %p319 = por %p317, %p318
    %p320 = scmp.ne.s32.totalorder %s311, %s312
    %p321 = scmp.eq.s32.totalorder %s28, 0
    %p322 = por %p320, %p321
    %p323 = scmp.ne.s32.totalorder %s311, %s312
    %p324 = scmp.eq.s32.totalorder %s29, 1
    %p325 = por %p323, %p324
    %p327 = scmp.ne.s32.totalorder %s312, %s326
    %p328 = scmp.eq.s32.totalorder %s29, 0
    %p329 = por %p327, %p328
    %s331 = sadd.s32 %s330, 1
    %p334 = scmp.eq.s32.totalorder %s23, 1
    %p335 = scmp.ne.s32.totalorder %s330, %s332
    %p336 = scmp.eq.s32.totalorder %s23, 0
    %p337 = por %p335, %p336
    %p338 = scmp.ne.s32.totalorder %s330, %s332
    %p339 = scmp.eq.s32.totalorder %s28, 1
    %p340 = por %p338, %p339
    %p341 = scmp.ne.s32.totalorder %s332, %s333
    %p342 = scmp.eq.s32.totalorder %s28, 0
    %p343 = por %p341, %p342
    %p344 = scmp.ne.s32.totalorder %s332, %s333
    %p345 = scmp.eq.s32.totalorder %s29, 1
    %p346 = por %p344, %p345
    %p348 = scmp.ne.s32.totalorder %s333, %s347
    %p349 = scmp.eq.s32.totalorder %s29, 0
    %p350 = por %p348, %p349
    %s352 = sadd.s32 %s351, 1
    %p355 = scmp.eq.s32.totalorder %s23, 1
    %p356 = scmp.ne.s32.totalorder %s351, %s353
    %p357 = scmp.eq.s32.totalorder %s23, 0
    %p358 = por %p356, %p357
    %p359 = scmp.ne.s32.totalorder %s351, %s353
    %p360 = scmp.eq.s32.totalorder %s28, 1
    %p361 = por %p359, %p360
    %p362 = scmp.ne.s32.totalorder %s353, %s354
    %p363 = scmp.eq.s32.totalorder %s28, 0
    %p364 = por %p362, %p363
    %p365 = scmp.ne.s32.totalorder %s353, %s354
    %p366 = scmp.eq.s32.totalorder %s29, 1
    %p367 = por %p365, %p366
    %p369 = scmp.ne.s32.totalorder %s354, %s368
    %p370 = scmp.eq.s32.totalorder %s29, 0
    %p371 = por %p369, %p370
    %s373 = sadd.s32 %s372, 1
    %p376 = scmp.eq.s32.totalorder %s23, 1
    %p377 = scmp.ne.s32.totalorder %s372, %s374
    %p378 = scmp.eq.s32.totalorder %s23, 0
    %p379 = por %p377, %p378
    %p380 = scmp.ne.s32.totalorder %s372, %s374
    %p381 = scmp.eq.s32.totalorder %s28, 1
    %p382 = por %p380, %p381
    %p383 = scmp.ne.s32.totalorder %s374, %s375
    %p384 = scmp.eq.s32.totalorder %s28, 0
    %p385 = por %p383, %p384
    %p386 = scmp.ne.s32.totalorder %s374, %s375
    %p387 = scmp.eq.s32.totalorder %s29, 1
    %p388 = por %p386, %p387
    %p390 = scmp.ne.s32.totalorder %s375, %s389
    %p391 = scmp.eq.s32.totalorder %s29, 0
    %p392 = por %p390, %p391
    %s393 = ssub.s32 %s23, %s30
    %p394 = scmp.eq.s32.totalorder %s393, 0
    %s396 = sadd.s32 %s395, 1
    %s397 = scalar_select %p394, %s395, %s396
    %p400 = pneg %p394
    %p401 = scmp.eq.s32.totalorder %s23, 1
    %p402 = por %p400, %p401
    %p403 = scmp.ne.s32.totalorder %s395, %s398
    %p404 = scmp.eq.s32.totalorder %s23, 0
    %p405 = por %p403, %p404
    %p406 = scmp.ne.s32.totalorder %s395, %s398
    %p407 = scmp.eq.s32.totalorder %s28, 1
    %p408 = por %p406, %p407
    %p409 = scmp.ne.s32.totalorder %s398, %s399
    %p410 = scmp.eq.s32.totalorder %s28, 0
    %p411 = por %p409, %p410
    %p412 = scmp.ne.s32.totalorder %s398, %s399
    %p413 = scmp.eq.s32.totalorder %s29, 1
    %p414 = por %p412, %p413
    %p416 = scmp.ne.s32.totalorder %s399, %s415
    %p417 = scmp.eq.s32.totalorder %s29, 0
    %p418 = por %p416, %p417
    %p419 = scmp.le.s32.totalorder 1, %s23
    %p420 = scmp.lt.s32.totalorder %s23, 3
    %p421 = pnand %p419, %p420
    %p422 = pneg %p421
    // Predicated region
    $region9: #{smiles_transformer_forward.9} parent=5 // pred_check
      _
    $region10: #{smiles_transformer_forward.9} parent=5 // pred_check_branch
      %424 = sbr.rel (%p421) target = $region12
    $region11: #{smiles_transformer_forward.9} parent=5 // pred_region
      %s425 = ssub.s32 %s23, 1
      // Predicated region
      $region13: #{smiles_transformer_forward.9} parent=11 // pred_check
        %p426 = pneg %p70
      $region14: #{smiles_transformer_forward.9} parent=11 // pred_check_branch
        %428 = sbr.rel (%p426) target = $region16
      $region15: #{smiles_transformer_forward.9} parent=11 // pred_region
        _
      $region16: #{smiles_transformer_forward.9} parent=11 // pred_fallthru
        _
      // Predicated region
      $region17: #{smiles_transformer_forward.9} parent=11 // pred_check
        %p429 = pneg %p91
      $region18: #{smiles_transformer_forward.9} parent=11 // pred_check_branch
        %431 = sbr.rel (%p429) target = $region20
      $region19: #{smiles_transformer_forward.9} parent=11 // pred_region
        _
      $region20: #{smiles_transformer_forward.9} parent=11 // pred_fallthru
        _
      // Predicated region
      $region21: #{smiles_transformer_forward.9} parent=11 // pred_check
        %p432 = pneg %p112
      $region22: #{smiles_transformer_forward.9} parent=11 // pred_check_branch
        %434 = sbr.rel (%p432) target = $region24
      $region23: #{smiles_transformer_forward.9} parent=11 // pred_region
        _
      $region24: #{smiles_transformer_forward.9} parent=11 // pred_fallthru
        _
      // Predicated region
      $region25: #{smiles_transformer_forward.9} parent=11 // pred_check
        %p435 = pneg %p133
      $region26: #{smiles_transformer_forward.9} parent=11 // pred_check_branch
        %437 = sbr.rel (%p435) target = $region28
      $region27: #{smiles_transformer_forward.9} parent=11 // pred_region
        _
      $region28: #{smiles_transformer_forward.9} parent=11 // pred_fallthru
        _
      // Predicated region
      $region29: #{smiles_transformer_forward.9} parent=11 // pred_check
        %p438 = pneg %p154
      $region30: #{smiles_transformer_forward.9} parent=11 // pred_check_branch
        %440 = sbr.rel (%p438) target = $region32
      $region31: #{smiles_transformer_forward.9} parent=11 // pred_region
        _
      $region32: #{smiles_transformer_forward.9} parent=11 // pred_fallthru
        _
      // Predicated region
      $region33: #{smiles_transformer_forward.9} parent=11 // pred_check
        %p441 = pneg %p175
      $region34: #{smiles_transformer_forward.9} parent=11 // pred_check_branch
        %443 = sbr.rel (%p441) target = $region36
      $region35: #{smiles_transformer_forward.9} parent=11 // pred_region
        _
      $region36: #{smiles_transformer_forward.9} parent=11 // pred_fallthru
        _
      // Predicated region
      $region37: #{smiles_transformer_forward.9} parent=11 // pred_check
        %p444 = pneg %p196
      $region38: #{smiles_transformer_forward.9} parent=11 // pred_check_branch
        %446 = sbr.rel (%p444) target = $region40
      $region39: #{smiles_transformer_forward.9} parent=11 // pred_region
        _
      $region40: #{smiles_transformer_forward.9} parent=11 // pred_fallthru
        _
      // Predicated region
      $region41: #{smiles_transformer_forward.9} parent=11 // pred_check
        %p447 = pneg %p217
      $region42: #{smiles_transformer_forward.9} parent=11 // pred_check_branch
        %449 = sbr.rel (%p447) target = $region44
      $region43: #{smiles_transformer_forward.9} parent=11 // pred_region
        _
      $region44: #{smiles_transformer_forward.9} parent=11 // pred_fallthru
        _
      // Predicated region
      $region45: #{smiles_transformer_forward.9} parent=11 // pred_check
        %p450 = pneg %p238
      $region46: #{smiles_transformer_forward.9} parent=11 // pred_check_branch
        %452 = sbr.rel (%p450) target = $region48
      $region47: #{smiles_transformer_forward.9} parent=11 // pred_region
        _
      $region48: #{smiles_transformer_forward.9} parent=11 // pred_fallthru
        _
      // Predicated region
      $region49: #{smiles_transformer_forward.9} parent=11 // pred_check
        %p453 = pneg %p259
      $region50: #{smiles_transformer_forward.9} parent=11 // pred_check_branch
        %455 = sbr.rel (%p453) target = $region52
      $region51: #{smiles_transformer_forward.9} parent=11 // pred_region
        _
      $region52: #{smiles_transformer_forward.9} parent=11 // pred_fallthru
        _
      // Predicated region
      $region53: #{smiles_transformer_forward.9} parent=11 // pred_check
        %p456 = pneg %p280
      $region54: #{smiles_transformer_forward.9} parent=11 // pred_check_branch
        %458 = sbr.rel (%p456) target = $region56
      $region55: #{smiles_transformer_forward.9} parent=11 // pred_region
        _
      $region56: #{smiles_transformer_forward.9} parent=11 // pred_fallthru
        _
      // Predicated region
      $region57: #{smiles_transformer_forward.9} parent=11 // pred_check
        %p459 = pneg %p301
      $region58: #{smiles_transformer_forward.9} parent=11 // pred_check_branch
        %461 = sbr.rel (%p459) target = $region60
      $region59: #{smiles_transformer_forward.9} parent=11 // pred_region
        _
      $region60: #{smiles_transformer_forward.9} parent=11 // pred_fallthru
        _
      // Predicated region
      $region61: #{smiles_transformer_forward.9} parent=11 // pred_check
        %p462 = pneg %p322
      $region62: #{smiles_transformer_forward.9} parent=11 // pred_check_branch
        %464 = sbr.rel (%p462) target = $region64
      $region63: #{smiles_transformer_forward.9} parent=11 // pred_region
        _
      $region64: #{smiles_transformer_forward.9} parent=11 // pred_fallthru
        _
      // Predicated region
      $region65: #{smiles_transformer_forward.9} parent=11 // pred_check
        %p465 = pneg %p343
      $region66: #{smiles_transformer_forward.9} parent=11 // pred_check_branch
        %467 = sbr.rel (%p465) target = $region68
      $region67: #{smiles_transformer_forward.9} parent=11 // pred_region
        _
      $region68: #{smiles_transformer_forward.9} parent=11 // pred_fallthru
        _
      // Predicated region
      $region69: #{smiles_transformer_forward.9} parent=11 // pred_check
        %p468 = pneg %p364
      $region70: #{smiles_transformer_forward.9} parent=11 // pred_check_branch
        %470 = sbr.rel (%p468) target = $region72
      $region71: #{smiles_transformer_forward.9} parent=11 // pred_region
        _
      $region72: #{smiles_transformer_forward.9} parent=11 // pred_fallthru
        _
      // Predicated region
      $region73: #{smiles_transformer_forward.9} parent=11 // pred_check
        %p471 = pneg %p385
      $region74: #{smiles_transformer_forward.9} parent=11 // pred_check_branch
        %473 = sbr.rel (%p471) target = $region76
      $region75: #{smiles_transformer_forward.9} parent=11 // pred_region
        _
      $region76: #{smiles_transformer_forward.9} parent=11 // pred_fallthru
        _
    $region12: #{smiles_transformer_forward.9} parent=5 // pred_fallthru
      _
    %p474 = scmp.lt.s32.totalorder %s23, 2
    // Predicated region
    $region77: #{smiles_transformer_forward.9} parent=5 // pred_check
      %p475 = pneg %p474
    $region78: #{smiles_transformer_forward.9} parent=5 // pred_check_branch
      %477 = sbr.rel (%p475) target = $region80
    $region79: #{smiles_transformer_forward.9} parent=5 // pred_region
      // Predicated region
      $region81: #{smiles_transformer_forward.9} parent=79 // pred_check
        %p478 = pneg %p43
      $region82: #{smiles_transformer_forward.9} parent=79 // pred_check_branch
        %480 = sbr.rel (%p478) target = $region84
      $region83: #{smiles_transformer_forward.9} parent=79 // pred_region
        %p481 = scmp.lt.s32.totalorder %s23, 1
        %s482 = scalar_select %p481, %s23, 1
        %s483 = smul.addr %s482, 2
        %s484 = smul.addr %s483, 8
        %s485 = scalar_lea.vmem %s0, %s484
      $region84: #{smiles_transformer_forward.9} parent=79 // pred_fallthru
        _
    $region80: #{smiles_transformer_forward.9} parent=5 // pred_fallthru
      _
    %p486 = scmp.le.s32.totalorder 1, %s23
    %p487 = scmp.lt.s32.totalorder %s23, 3
    %p488 = pnand %p486, %p487
    %p489 = pneg %p488
    // Predicated region
    $region85: #{smiles_transformer_forward.9} parent=5 // pred_check
      _
    $region86: #{smiles_transformer_forward.9} parent=5 // pred_check_branch
      %491 = sbr.rel (%p488) target = $region88
    $region87: #{smiles_transformer_forward.9} parent=5 // pred_region
      %s492 = ssub.s32 %s23, 1
      %p493 = scmp.lt.s32.totalorder %s28, 1
      %s494 = scalar_select %p493, %s28, 1
      %s495 = smul.addr %s494, 2
      %s496 = smul.addr %s495, 8
      %s497 = scalar_lea.vmem %s0, %s496
      %p498 = pneg %p49
      %p499 = pneg %p46
      %p500 = pneg %p70
      %p501 = pneg %p67
      %p502 = pneg %p91
      %p503 = pneg %p88
      %p504 = pneg %p112
      %p505 = pneg %p109
      %p506 = pneg %p133
      %p507 = pneg %p130
      %p508 = pneg %p154
      %p509 = pneg %p151
      %p510 = pneg %p175
      %p511 = pneg %p172
      %p512 = pneg %p196
      %p513 = pneg %p193
      %p514 = pneg %p217
      %p515 = pneg %p214
      %p516 = pneg %p238
      %p517 = pneg %p235
      %p518 = pneg %p259
      %p519 = pneg %p256
      %p520 = pneg %p280
      %p521 = pneg %p277
      %p522 = pneg %p301
      %p523 = pneg %p298
      %p524 = pneg %p322
      %p525 = pneg %p319
      %p526 = pneg %p343
      %p527 = pneg %p340
      %p528 = pneg %p364
      %p529 = pneg %p361
      %p530 = pneg %p385
      %p531 = pneg %p382
      %p532 = pneg %p411
      %p533 = pneg %p408
      %p534 = scmp.lt.s32.totalorder %s28, 1
      %s535 = scalar_select %p534, %s28, 1
      %s536 = smul.addr %s535, 2
      %s537 = smul.addr %s536, 8
      %s538 = scalar_lea.vmem %s17, %s537
      %p539 = scmp.lt.s32.totalorder %s28, 1
      %s540 = scalar_select %p539, %s28, 1
      %s541 = smul.addr %s540, 2
      %s542 = smul.addr %s541, 8
      %s543 = scalar_lea.vmem %s0, %s542
      %p544 = scmp.lt.s32.totalorder %s28, 1
      %s545 = scalar_select %p544, %s28, 1
      %s546 = smul.addr %s545, 2
      %s547 = smul.addr %s546, 8
      %s548 = scalar_lea.vmem %s17, %s547
      %v550 = vlaneseq
      %v551 = vshrl.u32 %v550, 7
      %v552 = vadd.s32 %v551, 8
      %v553 = vlaneseq
      %v554 = vand.u32 %v553, 127
      %vm555 = vcmp.le.s32.totalorder %v554, %v551
      %vm556 = vcmp.le.s32.totalorder %v554, %v552
      %v557 = vsel %vm555, 0.0, -1e+09
      %v558 = vsel %vm556, 0.0, -1e+09
      %v559 = vld [vmem:[%s543] sm:$0xff]
      %v560 = vld [vmem:[%s543 + $0x8] sm:$0x1]
      %v561 = vld [vmem:[%s1] sm:$0x1]
      %v562 = vld [vmem:[%s2] sm:$0x1]
      %vm563 = vcmask 261120
      %v564 = vsel %vm563, %v559, 0.0
      %565 = vadd.xlane.f32.xlu0 %v564
      %v566 = vpop.xlane.xlu0 %565
      %vm567 = vcmask 253952
      %v568 = vsel %vm567, %v560, 0.0
      %569 = vadd.xlane.f32.xlu0 %v568
      %v570 = vpop.xlane.xlu0 %569
      %v571 = vrcp.pop 32.0
      %v572 = vmul.f32 32.0, %v571
      %v573 = vsub.f32 1.0, %v572
      %v574 = vmul.f32 %v571, %v573
      %v575 = vadd.f32 %v571, %v574
      %vm576 = vweird.f32 %v571
      %v577 = vsel %vm576, %v571, %v575
      %v578 = vmul.f32 %v566, %v577
      %v579 = vmul.f32 %v570, %v577
      %v580 = vsub.f32 %v559, %v578
      %v581 = vsub.f32 %v560, %v579
      %v582 = vmul.f32 %v580, %v580
      %v583 = vmul.f32 %v581, %v581
      %v584 = vsel %vm563, %v582, 0.0
      %585 = vadd.xlane.f32.xlu0 %v584
      %v586 = vpop.xlane.xlu0 %585
      %v587 = vsel %vm567, %v583, 0.0
      %588 = vadd.xlane.f32.xlu0 %v587
      %v589 = vpop.xlane.xlu0 %588
      %v590 = vmul.f32 %v586, %v577
      %v591 = vmul.f32 %v589, %v577
      %v592 = vadd.f32 %v590, 1e-05
      %v593 = vadd.f32 %v591, 1e-05
      %v594 = vrsqrt.pop %v592
      %v595 = vmul.f32 %v594, %v592
      %v596 = vmul.f32 %v595, %v594
      %v597 = vmul.f32 0.5, %v596
      %v598 = vsub.f32 1.5, %v597
      %v599 = vmul.f32 %v594, %v598
      %vm600 = vweird.f32 %v592
      %vm601 = vweird.f32 %v594
      %vm602 = vmor %vm600, %vm601
      %v603 = vsel %vm602, %v594, %v599
      %v604 = vrsqrt.pop %v593
      %v605 = vmul.f32 %v604, %v593
      %v606 = vmul.f32 %v605, %v604
      %v607 = vmul.f32 0.5, %v606
      %v608 = vsub.f32 1.5, %v607
      %v609 = vmul.f32 %v604, %v608
      %vm610 = vweird.f32 %v593
      %vm611 = vweird.f32 %v604
      %vm612 = vmor %vm610, %vm611
      %v613 = vsel %vm612, %v604, %v609
      %v614 = vmul.f32 %v580, %v603
      %v615 = vmul.f32 %v581, %v613
      %v617 = vperm.slane %v561, 0
      %v619 = vmul.f32 %v614, %v617
      %v620 = vmul.f32 %v615, %v617
      %v622 = vperm.slane %v562, 0
      %v624 = vadd.f32 %v619, %v622
      %v625 = vadd.f32 %v620, %v622
      %v626 = vpack.c.bf16 %v625, %v624
      %v627 = vld [vmem:[%s10] sm:$0x1]
      %v628 = vld [vmem:[%s3] sm:$0xff]
      %v629 = vld [vmem:[%s3 + $0x8] sm:$0xff]
      %v630 = vld [vmem:[%s3 + $0x10] sm:$0xff]
      %v631 = vld [vmem:[%s3 + $0x18] sm:$0xff]
      %v632 = vpack.c.bf16 %v629, %v628
      %v633 = vpack.c.bf16 %v631, %v630
      %v634 = vld [vmem:[%s4] sm:$0x1]
      %v636 = vperm.slane %v634, 0
      %v639 = vsel %vm563, %v626, 0
      %641 = vmatpush.bf16.msra.mxu0 0
      %642 = vmatpush.bf16.msra.mxu0 0
      %643 = vmatpush.bf16.msra.mxu0 0
      %644 = vmatpush.bf16.msra.mxu0 0
      %645 = vmatpush.bf16.msra.mxu0 0
      %646 = vmatpush.bf16.msra.mxu0 0
      %647 = vmatpush.bf16.msra.mxu0 %v633
      %648 = vmatpush.bf16.msra.mxu0 %v632
      %649 = vmatmul.bf16.gmra.mxu0 %v639
      %v650 = vpop.f32.mrf.mxu0
      %v651 = vadd.f32 %v636, %v650
      %v652 = vpop.f32.mrf.mxu0
      %v653 = vadd.f32 %v636, %v652
      %654 = vdwg.mxu0
      %v655 = vmul.f32 %v651, 0.35355338
      %v656 = vmul.f32 %v653, 0.35355338
      %v657 = vld [vmem:[%s5] sm:$0xff]
      %v658 = vld [vmem:[%s5 + $0x8] sm:$0xff]
      %v659 = vld [vmem:[%s5 + $0x10] sm:$0xff]
      %v660 = vld [vmem:[%s5 + $0x18] sm:$0xff]
      %v661 = vpack.c.bf16 %v658, %v657
      %v662 = vpack.c.bf16 %v660, %v659
      %v663 = vld [vmem:[%s6] sm:$0x1]
      %v665 = vperm.slane %v663, 0
      %667 = vmatpush.bf16.msra.mxu0 0
      %668 = vmatpush.bf16.msra.mxu0 0
      %669 = vmatpush.bf16.msra.mxu0 0
      %670 = vmatpush.bf16.msra.mxu0 0
      %671 = vmatpush.bf16.msra.mxu0 0
      %672 = vmatpush.bf16.msra.mxu0 0
      %673 = vmatpush.bf16.msra.mxu0 %v662
      %674 = vmatpush.bf16.msra.mxu0 %v661
      %675 = vmatmul.bf16.gmra.mxu0 %v639
      %v676 = vpop.f32.mrf.mxu0
      %v677 = vadd.f32 %v665, %v676
      %v678 = vpop.f32.mrf.mxu0
      %v679 = vadd.f32 %v665, %v678
      %680 = vdwg.mxu0
      %v681 = vld [vmem:[%s7] sm:$0xff]
      %v682 = vld [vmem:[%s7 + $0x8] sm:$0xff]
      %v683 = vld [vmem:[%s7 + $0x10] sm:$0xff]
      %v684 = vld [vmem:[%s7 + $0x18] sm:$0xff]
      %v685 = vpack.c.bf16 %v682, %v681
      %v686 = vpack.c.bf16 %v684, %v683
      %v687 = vld [vmem:[%s8] sm:$0x1]
      %v689 = vperm.slane %v687, 0
      %691 = vmatpush.bf16.msra.mxu0 0
      %692 = vmatpush.bf16.msra.mxu0 0
      %693 = vmatpush.bf16.msra.mxu0 0
      %694 = vmatpush.bf16.msra.mxu0 0
      %695 = vmatpush.bf16.msra.mxu0 0
      %696 = vmatpush.bf16.msra.mxu0 0
      %697 = vmatpush.bf16.msra.mxu0 %v686
      %698 = vmatpush.bf16.msra.mxu0 %v685
      %699 = vmatmul.bf16.gmra.mxu0 %v639
      %v700 = vpop.f32.mrf.mxu0
      %v701 = vadd.f32 %v689, %v700
      %v702 = vpop.f32.mrf.mxu0
      %v703 = vadd.f32 %v689, %v702
      %704 = vdwg.mxu0
      %v705 = vpack.c.bf16 %v656, %v655
      %v706 = vpack.c.bf16 %v679, %v677
      %vm707 = vcmask 64512
      %v709 = vsel %vm707, %v705, 0
      %v712 = vsel %vm707, %v706, 0
      %714 = vmatpush.bf16.xpose.msra.mxu0 0
      %715 = vmatpush.bf16.xpose.msra.mxu0 0
      %716 = vmatpush.bf16.xpose.msra.mxu0 0
      %717 = vmatpush.bf16.xpose.msra.mxu0 0
      %718 = vmatpush.bf16.xpose.msra.mxu0 0
      %719 = vmatpush.bf16.xpose.msra.mxu0 0
      %720 = vmatpush.bf16.xpose.msra.mxu0 0
      %721 = vmatpush.bf16.xpose.msra.mxu0 %v712
      %722 = vmatmul.bf16.gmra.mxu0 %v709
      %v723 = vpop.f32.mrf.mxu0
      %v724 = vadd.f32 %v557, %v723
      %v725 = vpop.f32.mrf.mxu0
      %v726 = vadd.f32 %v558, %v725
      %727 = vdwg.mxu0
      %vm728 = vcmask 72704
      %v729 = vsel %vm728, %v724, -inf
      %730 = vmax.xlane.f32.xlu0 %v729
      %v731 = vpop.xlane.xlu0 %730
      %vm732 = vcmask 65536
      %v733 = vsel %vm732, %v726, -inf
      %734 = vmax.xlane.f32.xlu0 %v733
      %v735 = vpop.xlane.xlu0 %734
      %v736 = vsub.f32 %v724, %v731
      %v737 = vsub.f32 %v726, %v735
      %v738 = vmul.f32 %v736, 1.442695
      %v739 = vpow.pop %v738
      %v740 = vmul.f32 %v737, 1.442695
      %v741 = vpow.pop %v740
      %v742 = vsel %vm728, %v739, 0.0
      %743 = vadd.xlane.f32.xlu0 %v742
      %v744 = vpop.xlane.xlu0 %743
      %v745 = vsel %vm732, %v741, 0.0
      %746 = vadd.xlane.f32.xlu0 %v745
      %v747 = vpop.xlane.xlu0 %746
      %v748 = vrcp.pop %v744
      %v749 = vrcp.pop %v747
      %v750 = vmul.f32 %v739, %v748
      %v751 = vmul.f32 %v741, %v749
      %v752 = vpack.c.bf16 %v751, %v750
      %v753 = vpack.c.bf16 %v703, %v701
      %v755 = vsel %vm728, %v752, 0
      %vm757 = vcmask 1043456
      %vm758 = vcmask 1044480
      %v759 = vsel %vm757, 4294967295, 65535
      %v760 = vsel %vm758, %v759, 0
      %v762 = vand.u32 %v753, %v760
      %764 = vmatpush.bf16.msra.mxu0 0
      %765 = vmatpush.bf16.msra.mxu0 0
      %766 = vmatpush.bf16.msra.mxu0 0
      %767 = vmatpush.bf16.msra.mxu0 0
      %768 = vmatpush.bf16.msra.mxu0 0
      %769 = vmatpush.bf16.msra.mxu0 0
      %770 = vmatpush.bf16.msra.mxu0 0
      %771 = vmatpush.bf16.msra.mxu0 %v762
      %772 = vmatmul.bf16.gmra.mxu0 %v755
      %v773 = vpop.f32.mrf.mxu0
      %v774 = vadd.f32 0.0, %v773
      %v775 = vpop.f32.mrf.mxu0
      %v776 = vadd.f32 0.0, %v775
      %777 = vdwg.mxu0
      %v778 = vpack.c.bf16 %v776, %v774
      %v779 = vld [vmem:[%s9] sm:$0xff]
      %v780 = vpack.c.bf16 %v779, %v779
      %v782 = vsel %vm707, %v778, 0
      %v785 = vsel %vm757, %v780, 0
      %787 = vmatpush.bf16.msra.mxu0 0
      %788 = vmatpush.bf16.msra.mxu0 0
      %789 = vmatpush.bf16.msra.mxu0 0
      %790 = vmatpush.bf16.msra.mxu0 0
      %791 = vmatpush.bf16.msra.mxu0 0
      %792 = vmatpush.bf16.msra.mxu0 0
      %793 = vmatpush.bf16.msra.mxu0 0
      %794 = vmatpush.bf16.msra.mxu0 %v785
      %795 = vmatmul.bf16.gmra.mxu0 %v782
      %v796 = vpop.f32.mrf.mxu0
      %v797 = vadd.f32 0.0, %v796
      %v798 = vpop.f32.mrf.mxu0
      %v799 = vadd.f32 0.0, %v798
      %800 = vdwg.mxu0
      %v802 = vperm.slane %v627, 0
      %v804 = vadd.f32 %v802, %v797
      %v805 = vadd.f32 %v802, %v799
      %s806 = scalar_lea.vmem %s3, 32
      %v807 = vld [vmem:[%s806] sm:$0xff]
      %v808 = vld [vmem:[%s806 + $0x8] sm:$0xff]
      %v809 = vld [vmem:[%s806 + $0x10] sm:$0xff]
      %v810 = vld [vmem:[%s806 + $0x18] sm:$0xff]
      %v811 = vpack.c.bf16 %v808, %v807
      %v812 = vpack.c.bf16 %v810, %v809
      %s813 = scalar_lea.vmem %s4, 1
      %v814 = vld [vmem:[%s813] sm:$0x1]
      %v816 = vperm.slane %v814, 0
      %818 = vmatpush.bf16.msra.mxu0 0
      %819 = vmatpush.bf16.msra.mxu0 0
      %820 = vmatpush.bf16.msra.mxu0 0
      %821 = vmatpush.bf16.msra.mxu0 0
      %822 = vmatpush.bf16.msra.mxu0 0
      %823 = vmatpush.bf16.msra.mxu0 0
      %824 = vmatpush.bf16.msra.mxu0 %v812
      %825 = vmatpush.bf16.msra.mxu0 %v811
      %826 = vmatmul.bf16.gmra.mxu0 %v639
      %v827 = vpop.f32.mrf.mxu0
      %v828 = vadd.f32 %v816, %v827
      %v829 = vpop.f32.mrf.mxu0
      %v830 = vadd.f32 %v816, %v829
      %831 = vdwg.mxu0
      %v832 = vmul.f32 %v828, 0.35355338
      %v833 = vmul.f32 %v830, 0.35355338
      %s834 = scalar_lea.vmem %s5, 32
      %v835 = vld [vmem:[%s834] sm:$0xff]
      %v836 = vld [vmem:[%s834 + $0x8] sm:$0xff]
      %v837 = vld [vmem:[%s834 + $0x10] sm:$0xff]
      %v838 = vld [vmem:[%s834 + $0x18] sm:$0xff]
      %v839 = vpack.c.bf16 %v836, %v835
      %v840 = vpack.c.bf16 %v838, %v837
      %s841 = scalar_lea.vmem %s6, 1
      %v842 = vld [vmem:[%s841] sm:$0x1]
      %v844 = vperm.slane %v842, 0
      %846 = vmatpush.bf16.msra.mxu0 0
      %847 = vmatpush.bf16.msra.mxu0 0
      %848 = vmatpush.bf16.msra.mxu0 0
      %849 = vmatpush.bf16.msra.mxu0 0
      %850 = vmatpush.bf16.msra.mxu0 0
      %851 = vmatpush.bf16.msra.mxu0 0
      %852 = vmatpush.bf16.msra.mxu0 %v840
      %853 = vmatpush.bf16.msra.mxu0 %v839
      %854 = vmatmul.bf16.gmra.mxu0 %v639
      %v855 = vpop.f32.mrf.mxu0
      %v856 = vadd.f32 %v844, %v855
      %v857 = vpop.f32.mrf.mxu0
      %v858 = vadd.f32 %v844, %v857
      %859 = vdwg.mxu0
      %s860 = scalar_lea.vmem %s7, 32
      %v861 = vld [vmem:[%s860] sm:$0xff]
      %v862 = vld [vmem:[%s860 + $0x8] sm:$0xff]
      %v863 = vld [vmem:[%s860 + $0x10] sm:$0xff]
      %v864 = vld [vmem:[%s860 + $0x18] sm:$0xff]
      %v865 = vpack.c.bf16 %v862, %v861
      %v866 = vpack.c.bf16 %v864, %v863
      %s867 = scalar_lea.vmem %s8, 1
      %v868 = vld [vmem:[%s867] sm:$0x1]
      %v870 = vperm.slane %v868, 0
      %872 = vmatpush.bf16.msra.mxu0 0
      %873 = vmatpush.bf16.msra.mxu0 0
      %874 = vmatpush.bf16.msra.mxu0 0
      %875 = vmatpush.bf16.msra.mxu0 0
      %876 = vmatpush.bf16.msra.mxu0 0
      %877 = vmatpush.bf16.msra.mxu0 0
      %878 = vmatpush.bf16.msra.mxu0 %v866
      %879 = vmatpush.bf16.msra.mxu0 %v865
      %880 = vmatmul.bf16.gmra.mxu0 %v639
      %v881 = vpop.f32.mrf.mxu0
      %v882 = vadd.f32 %v870, %v881
      %v883 = vpop.f32.mrf.mxu0
      %v884 = vadd.f32 %v870, %v883
      %885 = vdwg.mxu0
      %v886 = vpack.c.bf16 %v833, %v832
      %v887 = vpack.c.bf16 %v858, %v856
      %v889 = vsel %vm707, %v886, 0
      %v892 = vsel %vm707, %v887, 0
      %894 = vmatpush.bf16.xpose.msra.mxu0 0
      %895 = vmatpush.bf16.xpose.msra.mxu0 0
      %896 = vmatpush.bf16.xpose.msra.mxu0 0
      %897 = vmatpush.bf16.xpose.msra.mxu0 0
      %898 = vmatpush.bf16.xpose.msra.mxu0 0
      %899 = vmatpush.bf16.xpose.msra.mxu0 0
      %900 = vmatpush.bf16.xpose.msra.mxu0 0
      %901 = vmatpush.bf16.xpose.msra.mxu0 %v892
      %902 = vmatmul.bf16.gmra.mxu0 %v889
      %v903 = vpop.f32.mrf.mxu0
      %v904 = vadd.f32 %v557, %v903
      %v905 = vpop.f32.mrf.mxu0
      %v906 = vadd.f32 %v558, %v905
      %907 = vdwg.mxu0
      %v908 = vsel %vm728, %v904, -inf
      %909 = vmax.xlane.f32.xlu0 %v908
      %v910 = vpop.xlane.xlu0 %909
      %v911 = vsel %vm732, %v906, -inf
      %912 = vmax.xlane.f32.xlu0 %v911
      %v913 = vpop.xlane.xlu0 %912
      %v914 = vsub.f32 %v904, %v910
      %v915 = vsub.f32 %v906, %v913
      %v916 = vmul.f32 %v914, 1.442695
      %v917 = vpow.pop %v916
      %v918 = vmul.f32 %v915, 1.442695
      %v919 = vpow.pop %v918
      %v920 = vsel %vm728, %v917, 0.0
      %921 = vadd.xlane.f32.xlu0 %v920
      %v922 = vpop.xlane.xlu0 %921
      %v923 = vsel %vm732, %v919, 0.0
      %924 = vadd.xlane.f32.xlu0 %v923
      %v925 = vpop.xlane.xlu0 %924
      %v926 = vrcp.pop %v922
      %v927 = vrcp.pop %v925
      %v928 = vmul.f32 %v917, %v926
      %v929 = vmul.f32 %v919, %v927
      %v930 = vpack.c.bf16 %v929, %v928
      %v931 = vpack.c.bf16 %v884, %v882
      %v933 = vsel %vm728, %v930, 0
      %v936 = vand.u32 %v931, %v760
      %938 = vmatpush.bf16.msra.mxu0 0
      %939 = vmatpush.bf16.msra.mxu0 0
      %940 = vmatpush.bf16.msra.mxu0 0
      %941 = vmatpush.bf16.msra.mxu0 0
      %942 = vmatpush.bf16.msra.mxu0 0
      %943 = vmatpush.bf16.msra.mxu0 0
      %944 = vmatpush.bf16.msra.mxu0 0
      %945 = vmatpush.bf16.msra.mxu0 %v936
      %946 = vmatmul.bf16.gmra.mxu0 %v933
      %v947 = vpop.f32.mrf.mxu0
      %v948 = vadd.f32 0.0, %v947
      %v949 = vpop.f32.mrf.mxu0
      %v950 = vadd.f32 0.0, %v949
      %951 = vdwg.mxu0
      %v952 = vpack.c.bf16 %v950, %v948
      %s953 = scalar_lea.vmem %s9, 8
      %v954 = vld [vmem:[%s953] sm:$0xff]
      %v955 = vpack.c.bf16 %v954, %v954
      %v957 = vsel %vm707, %v952, 0
      %v960 = vsel %vm757, %v955, 0
      %962 = vmatpush.bf16.msra.mxu0 0
      %963 = vmatpush.bf16.msra.mxu0 0
      %964 = vmatpush.bf16.msra.mxu0 0
      %965 = vmatpush.bf16.msra.mxu0 0
      %966 = vmatpush.bf16.msra.mxu0 0
      %967 = vmatpush.bf16.msra.mxu0 0
      %968 = vmatpush.bf16.msra.mxu0 0
      %969 = vmatpush.bf16.msra.mxu0 %v960
      %970 = vmatmul.bf16.gmra.mxu0 %v957
      %v971 = vpop.f32.mrf.mxu0
      %v972 = vadd.f32 0.0, %v971
      %v973 = vpop.f32.mrf.mxu0
      %v974 = vadd.f32 0.0, %v973
      %975 = vdwg.mxu0
      %v976 = vadd.f32 %v804, %v972
      %v977 = vadd.f32 %v805, %v974
      %s978 = scalar_lea.vmem %s3, 64
      %v979 = vld [vmem:[%s978] sm:$0xff]
      %v980 = vld [vmem:[%s978 + $0x8] sm:$0xff]
      %v981 = vld [vmem:[%s978 + $0x10] sm:$0xff]
      %v982 = vld [vmem:[%s978 + $0x18] sm:$0xff]
      %v983 = vpack.c.bf16 %v980, %v979
      %v984 = vpack.c.bf16 %v982, %v981
      %s985 = scalar_lea.vmem %s4, 2
      %v986 = vld [vmem:[%s985] sm:$0x1]
      %v988 = vperm.slane %v986, 0
      %990 = vmatpush.bf16.msra.mxu0 0
      %991 = vmatpush.bf16.msra.mxu0 0
      %992 = vmatpush.bf16.msra.mxu0 0
      %993 = vmatpush.bf16.msra.mxu0 0
      %994 = vmatpush.bf16.msra.mxu0 0
      %995 = vmatpush.bf16.msra.mxu0 0
      %996 = vmatpush.bf16.msra.mxu0 %v984
      %997 = vmatpush.bf16.msra.mxu0 %v983
      %998 = vmatmul.bf16.gmra.mxu0 %v639
      %v999 = vpop.f32.mrf.mxu0
      %v1000 = vadd.f32 %v988, %v999
      %v1001 = vpop.f32.mrf.mxu0
      %v1002 = vadd.f32 %v988, %v1001
      %1003 = vdwg.mxu0
      %v1004 = vmul.f32 %v1000, 0.35355338
      %v1005 = vmul.f32 %v1002, 0.35355338
      %s1006 = scalar_lea.vmem %s5, 64
      %v1007 = vld [vmem:[%s1006] sm:$0xff]
      %v1008 = vld [vmem:[%s1006 + $0x8] sm:$0xff]
      %v1009 = vld [vmem:[%s1006 + $0x10] sm:$0xff]
      %v1010 = vld [vmem:[%s1006 + $0x18] sm:$0xff]
      %v1011 = vpack.c.bf16 %v1008, %v1007
      %v1012 = vpack.c.bf16 %v1010, %v1009
      %s1013 = scalar_lea.vmem %s6, 2
      %v1014 = vld [vmem:[%s1013] sm:$0x1]
      %v1016 = vperm.slane %v1014, 0
      %1018 = vmatpush.bf16.msra.mxu0 0
      %1019 = vmatpush.bf16.msra.mxu0 0
      %1020 = vmatpush.bf16.msra.mxu0 0
      %1021 = vmatpush.bf16.msra.mxu0 0
      %1022 = vmatpush.bf16.msra.mxu0 0
      %1023 = vmatpush.bf16.msra.mxu0 0
      %1024 = vmatpush.bf16.msra.mxu0 %v1012
      %1025 = vmatpush.bf16.msra.mxu0 %v1011
      %1026 = vmatmul.bf16.gmra.mxu0 %v639
      %v1027 = vpop.f32.mrf.mxu0
      %v1028 = vadd.f32 %v1016, %v1027
      %v1029 = vpop.f32.mrf.mxu0
      %v1030 = vadd.f32 %v1016, %v1029
      %1031 = vdwg.mxu0
      %s1032 = scalar_lea.vmem %s7, 64
      %v1033 = vld [vmem:[%s1032] sm:$0xff]
      %v1034 = vld [vmem:[%s1032 + $0x8] sm:$0xff]
      %v1035 = vld [vmem:[%s1032 + $0x10] sm:$0xff]
      %v1036 = vld [vmem:[%s1032 + $0x18] sm:$0xff]
      %v1037 = vpack.c.bf16 %v1034, %v1033
      %v1038 = vpack.c.bf16 %v1036, %v1035
      %s1039 = scalar_lea.vmem %s8, 2
      %v1040 = vld [vmem:[%s1039] sm:$0x1]
      %v1042 = vperm.slane %v1040, 0
      %1044 = vmatpush.bf16.msra.mxu0 0
      %1045 = vmatpush.bf16.msra.mxu0 0
      %1046 = vmatpush.bf16.msra.mxu0 0
      %1047 = vmatpush.bf16.msra.mxu0 0
      %1048 = vmatpush.bf16.msra.mxu0 0
      %1049 = vmatpush.bf16.msra.mxu0 0
      %1050 = vmatpush.bf16.msra.mxu0 %v1038
      %1051 = vmatpush.bf16.msra.mxu0 %v1037
      %1052 = vmatmul.bf16.gmra.mxu0 %v639
      %v1053 = vpop.f32.mrf.mxu0
      %v1054 = vadd.f32 %v1042, %v1053
      %v1055 = vpop.f32.mrf.mxu0
      %v1056 = vadd.f32 %v1042, %v1055
      %1057 = vdwg.mxu0
      %v1058 = vpack.c.bf16 %v1005, %v1004
      %v1059 = vpack.c.bf16 %v1030, %v1028
      %v1061 = vsel %vm707, %v1058, 0
      %v1064 = vsel %vm707, %v1059, 0
      %1066 = vmatpush.bf16.xpose.msra.mxu0 0
      %1067 = vmatpush.bf16.xpose.msra.mxu0 0
      %1068 = vmatpush.bf16.xpose.msra.mxu0 0
      %1069 = vmatpush.bf16.xpose.msra.mxu0 0
      %1070 = vmatpush.bf16.xpose.msra.mxu0 0
      %1071 = vmatpush.bf16.xpose.msra.mxu0 0
      %1072 = vmatpush.bf16.xpose.msra.mxu0 0
      %1073 = vmatpush.bf16.xpose.msra.mxu0 %v1064
      %1074 = vmatmul.bf16.gmra.mxu0 %v1061
      %v1075 = vpop.f32.mrf.mxu0
      %v1076 = vadd.f32 %v557, %v1075
      %v1077 = vpop.f32.mrf.mxu0
      %v1078 = vadd.f32 %v558, %v1077
      %1079 = vdwg.mxu0
      %v1080 = vsel %vm728, %v1076, -inf
      %1081 = vmax.xlane.f32.xlu0 %v1080
      %v1082 = vpop.xlane.xlu0 %1081
      %v1083 = vsel %vm732, %v1078, -inf
      %1084 = vmax.xlane.f32.xlu0 %v1083
      %v1085 = vpop.xlane.xlu0 %1084
      %v1086 = vsub.f32 %v1076, %v1082
      %v1087 = vsub.f32 %v1078, %v1085
      %v1088 = vmul.f32 %v1086, 1.442695
      %v1089 = vpow.pop %v1088
      %v1090 = vmul.f32 %v1087, 1.442695
      %v1091 = vpow.pop %v1090
      %v1092 = vsel %vm728, %v1089, 0.0
      %1093 = vadd.xlane.f32.xlu0 %v1092
      %v1094 = vpop.xlane.xlu0 %1093
      %v1095 = vsel %vm732, %v1091, 0.0
      %1096 = vadd.xlane.f32.xlu0 %v1095
      %v1097 = vpop.xlane.xlu0 %1096
      %v1098 = vrcp.pop %v1094
      %v1099 = vrcp.pop %v1097
      %v1100 = vmul.f32 %v1089, %v1098
      %v1101 = vmul.f32 %v1091, %v1099
      %v1102 = vpack.c.bf16 %v1101, %v1100
      %v1103 = vpack.c.bf16 %v1056, %v1054
      %v1105 = vsel %vm728, %v1102, 0
      %v1108 = vand.u32 %v1103, %v760
      %1110 = vmatpush.bf16.msra.mxu0 0
      %1111 = vmatpush.bf16.msra.mxu0 0
      %1112 = vmatpush.bf16.msra.mxu0 0
      %1113 = vmatpush.bf16.msra.mxu0 0
      %1114 = vmatpush.bf16.msra.mxu0 0
      %1115 = vmatpush.bf16.msra.mxu0 0
      %1116 = vmatpush.bf16.msra.mxu0 0
      %1117 = vmatpush.bf16.msra.mxu0 %v1108
      %1118 = vmatmul.bf16.gmra.mxu0 %v1105
      %v1119 = vpop.f32.mrf.mxu0
      %v1120 = vadd.f32 0.0, %v1119
      %v1121 = vpop.f32.mrf.mxu0
      %v1122 = vadd.f32 0.0, %v1121
      %1123 = vdwg.mxu0
      %v1124 = vpack.c.bf16 %v1122, %v1120
      %s1125 = scalar_lea.vmem %s9, 16
      %v1126 = vld [vmem:[%s1125] sm:$0xff]
      %v1127 = vpack.c.bf16 %v1126, %v1126
      %v1129 = vsel %vm707, %v1124, 0
      %v1132 = vsel %vm757, %v1127, 0
      %1134 = vmatpush.bf16.msra.mxu0 0
      %1135 = vmatpush.bf16.msra.mxu0 0
      %1136 = vmatpush.bf16.msra.mxu0 0
      %1137 = vmatpush.bf16.msra.mxu0 0
      %1138 = vmatpush.bf16.msra.mxu0 0
      %1139 = vmatpush.bf16.msra.mxu0 0
      %1140 = vmatpush.bf16.msra.mxu0 0
      %1141 = vmatpush.bf16.msra.mxu0 %v1132
      %1142 = vmatmul.bf16.gmra.mxu0 %v1129
      %v1143 = vpop.f32.mrf.mxu0
      %v1144 = vadd.f32 0.0, %v1143
      %v1145 = vpop.f32.mrf.mxu0
      %v1146 = vadd.f32 0.0, %v1145
      %1147 = vdwg.mxu0
      %v1148 = vadd.f32 %v976, %v1144
      %v1149 = vadd.f32 %v977, %v1146
      %s1150 = scalar_lea.vmem %s3, 96
      %v1151 = vld [vmem:[%s1150] sm:$0xff]
      %v1152 = vld [vmem:[%s1150 + $0x8] sm:$0xff]
      %v1153 = vld [vmem:[%s1150 + $0x10] sm:$0xff]
      %v1154 = vld [vmem:[%s1150 + $0x18] sm:$0xff]
      %v1155 = vpack.c.bf16 %v1152, %v1151
      %v1156 = vpack.c.bf16 %v1154, %v1153
      %s1157 = scalar_lea.vmem %s4, 3
      %v1158 = vld [vmem:[%s1157] sm:$0x1]
      %v1160 = vperm.slane %v1158, 0
      %1162 = vmatpush.bf16.msra.mxu0 0
      %1163 = vmatpush.bf16.msra.mxu0 0
      %1164 = vmatpush.bf16.msra.mxu0 0
      %1165 = vmatpush.bf16.msra.mxu0 0
      %1166 = vmatpush.bf16.msra.mxu0 0
      %1167 = vmatpush.bf16.msra.mxu0 0
      %1168 = vmatpush.bf16.msra.mxu0 %v1156
      %1169 = vmatpush.bf16.msra.mxu0 %v1155
      %1170 = vmatmul.bf16.gmra.mxu0 %v639
      %v1171 = vpop.f32.mrf.mxu0
      %v1172 = vadd.f32 %v1160, %v1171
      %v1173 = vpop.f32.mrf.mxu0
      %v1174 = vadd.f32 %v1160, %v1173
      %1175 = vdwg.mxu0
      %v1176 = vmul.f32 %v1172, 0.35355338
      %v1177 = vmul.f32 %v1174, 0.35355338
      %s1178 = scalar_lea.vmem %s5, 96
      %v1179 = vld [vmem:[%s1178] sm:$0xff]
      %v1180 = vld [vmem:[%s1178 + $0x8] sm:$0xff]
      %v1181 = vld [vmem:[%s1178 + $0x10] sm:$0xff]
      %v1182 = vld [vmem:[%s1178 + $0x18] sm:$0xff]
      %v1183 = vpack.c.bf16 %v1180, %v1179
      %v1184 = vpack.c.bf16 %v1182, %v1181
      %s1185 = scalar_lea.vmem %s6, 3
      %v1186 = vld [vmem:[%s1185] sm:$0x1]
      %v1188 = vperm.slane %v1186, 0
      %1190 = vmatpush.bf16.msra.mxu0 0
      %1191 = vmatpush.bf16.msra.mxu0 0
      %1192 = vmatpush.bf16.msra.mxu0 0
      %1193 = vmatpush.bf16.msra.mxu0 0
      %1194 = vmatpush.bf16.msra.mxu0 0
      %1195 = vmatpush.bf16.msra.mxu0 0
      %1196 = vmatpush.bf16.msra.mxu0 %v1184
      %1197 = vmatpush.bf16.msra.mxu0 %v1183
      %1198 = vmatmul.bf16.gmra.mxu0 %v639
      %v1199 = vpop.f32.mrf.mxu0
      %v1200 = vadd.f32 %v1188, %v1199
      %v1201 = vpop.f32.mrf.mxu0
      %v1202 = vadd.f32 %v1188, %v1201
      %1203 = vdwg.mxu0
      %s1204 = scalar_lea.vmem %s7, 96
      %v1205 = vld [vmem:[%s1204] sm:$0xff]
      %v1206 = vld [vmem:[%s1204 + $0x8] sm:$0xff]
      %v1207 = vld [vmem:[%s1204 + $0x10] sm:$0xff]
      %v1208 = vld [vmem:[%s1204 + $0x18] sm:$0xff]
      %v1209 = vpack.c.bf16 %v1206, %v1205
      %v1210 = vpack.c.bf16 %v1208, %v1207
      %s1211 = scalar_lea.vmem %s8, 3
      %v1212 = vld [vmem:[%s1211] sm:$0x1]
      %v1214 = vperm.slane %v1212, 0
      %1216 = vmatpush.bf16.msra.mxu0 0
      %1217 = vmatpush.bf16.msra.mxu0 0
      %1218 = vmatpush.bf16.msra.mxu0 0
      %1219 = vmatpush.bf16.msra.mxu0 0
      %1220 = vmatpush.bf16.msra.mxu0 0
      %1221 = vmatpush.bf16.msra.mxu0 0
      %1222 = vmatpush.bf16.msra.mxu0 %v1210
      %1223 = vmatpush.bf16.msra.mxu0 %v1209
      %1224 = vmatmul.bf16.gmra.mxu0 %v639
      %v1225 = vpop.f32.mrf.mxu0
      %v1226 = vadd.f32 %v1214, %v1225
      %v1227 = vpop.f32.mrf.mxu0
      %v1228 = vadd.f32 %v1214, %v1227
      %1229 = vdwg.mxu0
      %v1230 = vpack.c.bf16 %v1177, %v1176
      %v1231 = vpack.c.bf16 %v1202, %v1200
      %v1233 = vsel %vm707, %v1230, 0
      %v1236 = vsel %vm707, %v1231, 0
      %1238 = vmatpush.bf16.xpose.msra.mxu0 0
      %1239 = vmatpush.bf16.xpose.msra.mxu0 0
      %1240 = vmatpush.bf16.xpose.msra.mxu0 0
      %1241 = vmatpush.bf16.xpose.msra.mxu0 0
      %1242 = vmatpush.bf16.xpose.msra.mxu0 0
      %1243 = vmatpush.bf16.xpose.msra.mxu0 0
      %1244 = vmatpush.bf16.xpose.msra.mxu0 0
      %1245 = vmatpush.bf16.xpose.msra.mxu0 %v1236
      %1246 = vmatmul.bf16.gmra.mxu0 %v1233
      %v1247 = vpop.f32.mrf.mxu0
      %v1248 = vadd.f32 %v557, %v1247
      %v1249 = vpop.f32.mrf.mxu0
      %v1250 = vadd.f32 %v558, %v1249
      %1251 = vdwg.mxu0
      %v1252 = vsel %vm728, %v1248, -inf
      %1253 = vmax.xlane.f32.xlu0 %v1252
      %v1254 = vpop.xlane.xlu0 %1253
      %v1255 = vsel %vm732, %v1250, -inf
      %1256 = vmax.xlane.f32.xlu0 %v1255
      %v1257 = vpop.xlane.xlu0 %1256
      %v1258 = vsub.f32 %v1248, %v1254
      %v1259 = vsub.f32 %v1250, %v1257
      %v1260 = vmul.f32 %v1258, 1.442695
      %v1261 = vpow.pop %v1260
      %v1262 = vmul.f32 %v1259, 1.442695
      %v1263 = vpow.pop %v1262
      %v1264 = vsel %vm728, %v1261, 0.0
      %1265 = vadd.xlane.f32.xlu0 %v1264
      %v1266 = vpop.xlane.xlu0 %1265
      %v1267 = vsel %vm732, %v1263, 0.0
      %1268 = vadd.xlane.f32.xlu0 %v1267
      %v1269 = vpop.xlane.xlu0 %1268
      %v1270 = vrcp.pop %v1266
      %v1271 = vrcp.pop %v1269
      %v1272 = vmul.f32 %v1261, %v1270
      %v1273 = vmul.f32 %v1263, %v1271
      %v1274 = vpack.c.bf16 %v1273, %v1272
      %v1275 = vpack.c.bf16 %v1228, %v1226
      %v1277 = vsel %vm728, %v1274, 0
      %v1280 = vand.u32 %v1275, %v760
      %1282 = vmatpush.bf16.msra.mxu0 0
      %1283 = vmatpush.bf16.msra.mxu0 0
      %1284 = vmatpush.bf16.msra.mxu0 0
      %1285 = vmatpush.bf16.msra.mxu0 0
      %1286 = vmatpush.bf16.msra.mxu0 0
      %1287 = vmatpush.bf16.msra.mxu0 0
      %1288 = vmatpush.bf16.msra.mxu0 0
      %1289 = vmatpush.bf16.msra.mxu0 %v1280
      %1290 = vmatmul.bf16.gmra.mxu0 %v1277
      %v1291 = vpop.f32.mrf.mxu0
      %v1292 = vadd.f32 0.0, %v1291
      %v1293 = vpop.f32.mrf.mxu0
      %v1294 = vadd.f32 0.0, %v1293
      %1295 = vdwg.mxu0
      %v1296 = vpack.c.bf16 %v1294, %v1292
      %s1297 = scalar_lea.vmem %s9, 24
      %v1298 = vld [vmem:[%s1297] sm:$0xff]
      %v1299 = vpack.c.bf16 %v1298, %v1298
      %v1301 = vsel %vm707, %v1296, 0
      %v1304 = vsel %vm757, %v1299, 0
      %1306 = vmatpush.bf16.msra.mxu0 0
      %1307 = vmatpush.bf16.msra.mxu0 0
      %1308 = vmatpush.bf16.msra.mxu0 0
      %1309 = vmatpush.bf16.msra.mxu0 0
      %1310 = vmatpush.bf16.msra.mxu0 0
      %1311 = vmatpush.bf16.msra.mxu0 0
      %1312 = vmatpush.bf16.msra.mxu0 0
      %1313 = vmatpush.bf16.msra.mxu0 %v1304
      %1314 = vmatmul.bf16.gmra.mxu0 %v1301
      %v1315 = vpop.f32.mrf.mxu0
      %v1316 = vadd.f32 0.0, %v1315
      %v1317 = vpop.f32.mrf.mxu0
      %v1318 = vadd.f32 0.0, %v1317
      %1319 = vdwg.mxu0
      %v1320 = vadd.f32 %v1148, %v1316
      %v1321 = vadd.f32 %v1149, %v1318
      %v1322 = vadd.f32 %v559, %v1320
      %v1323 = vadd.f32 %v560, %v1321
      %v1324 = vld [vmem:[%s11] sm:$0x1]
      %v1325 = vld [vmem:[%s12] sm:$0x1]
      %v1326 = vsel %vm563, %v1322, 0.0
      %1327 = vadd.xlane.f32.xlu0 %v1326
      %v1328 = vpop.xlane.xlu0 %1327
      %v1329 = vsel %vm567, %v1323, 0.0
      %1330 = vadd.xlane.f32.xlu0 %v1329
      %v1331 = vpop.xlane.xlu0 %1330
      %v1332 = vmul.f32 %v1328, %v577
      %v1333 = vmul.f32 %v1331, %v577
      %v1334 = vsub.f32 %v1322, %v1332
      %v1335 = vsub.f32 %v1323, %v1333
      %v1336 = vmul.f32 %v1334, %v1334
      %v1337 = vmul.f32 %v1335, %v1335
      %v1338 = vsel %vm563, %v1336, 0.0
      %1339 = vadd.xlane.f32.xlu0 %v1338
      %v1340 = vpop.xlane.xlu0 %1339
      %v1341 = vsel %vm567, %v1337, 0.0
      %1342 = vadd.xlane.f32.xlu0 %v1341
      %v1343 = vpop.xlane.xlu0 %1342
      %v1344 = vmul.f32 %v1340, %v577
      %v1345 = vmul.f32 %v1343, %v577
      %v1346 = vadd.f32 %v1344, 1e-05
      %v1347 = vadd.f32 %v1345, 1e-05
      %v1348 = vrsqrt.pop %v1346
      %v1349 = vmul.f32 %v1348, %v1346
      %v1350 = vmul.f32 %v1349, %v1348
      %v1351 = vmul.f32 0.5, %v1350
      %v1352 = vsub.f32 1.5, %v1351
      %v1353 = vmul.f32 %v1348, %v1352
      %vm1354 = vweird.f32 %v1346
      %vm1355 = vweird.f32 %v1348
      %vm1356 = vmor %vm1354, %vm1355
      %v1357 = vsel %vm1356, %v1348, %v1353
      %v1358 = vrsqrt.pop %v1347
      %v1359 = vmul.f32 %v1358, %v1347
      %v1360 = vmul.f32 %v1359, %v1358
      %v1361 = vmul.f32 0.5, %v1360
      %v1362 = vsub.f32 1.5, %v1361
      %v1363 = vmul.f32 %v1358, %v1362
      %vm1364 = vweird.f32 %v1347
      %vm1365 = vweird.f32 %v1358
      %vm1366 = vmor %vm1364, %vm1365
      %v1367 = vsel %vm1366, %v1358, %v1363
      %v1368 = vmul.f32 %v1334, %v1357
      %v1369 = vmul.f32 %v1335, %v1367
      %v1371 = vperm.slane %v1324, 0
      %v1373 = vmul.f32 %v1368, %v1371
      %v1374 = vmul.f32 %v1369, %v1371
      %v1376 = vperm.slane %v1325, 0
      %v1378 = vadd.f32 %v1373, %v1376
      %v1379 = vadd.f32 %v1374, %v1376
      %v1380 = vpack.c.bf16 %v1379, %v1378
      %v1381 = vld [vmem:[%s13] sm:$0xff]
      %v1382 = vld [vmem:[%s13 + $0x8] sm:$0xff]
      %v1383 = vld [vmem:[%s13 + $0x10] sm:$0xff]
      %v1384 = vld [vmem:[%s13 + $0x18] sm:$0xff]
      %v1385 = vpack.c.bf16 %v1382, %v1381
      %v1386 = vpack.c.bf16 %v1384, %v1383
      %v1387 = vld [vmem:[%s14] sm:$0x1]
      %v1389 = vperm.slane %v1387, 0
      %v1392 = vsel %vm563, %v1380, 0
      %1394 = vmatpush.bf16.msra.mxu0 0
      %1395 = vmatpush.bf16.msra.mxu0 0
      %1396 = vmatpush.bf16.msra.mxu0 0
      %1397 = vmatpush.bf16.msra.mxu0 0
      %1398 = vmatpush.bf16.msra.mxu0 0
      %1399 = vmatpush.bf16.msra.mxu0 0
      %1400 = vmatpush.bf16.msra.mxu0 %v1386
      %1401 = vmatpush.bf16.msra.mxu0 %v1385
      %1402 = vmatmul.bf16.gmra.mxu0 %v1392
      %v1403 = vpop.f32.mrf.mxu0
      %v1404 = vadd.f32 %v1389, %v1403
      %v1405 = vpop.f32.mrf.mxu0
      %v1406 = vadd.f32 %v1389, %v1405
      %1407 = vdwg.mxu0
      %v1408 = vmul.f32 %v1404, %v1404
      %v1409 = vmul.f32 %v1406, %v1406
      %v1410 = vmul.f32 %v1404, %v1408
      %v1411 = vmul.f32 %v1406, %v1409
      %v1412 = vmul.f32 %v1410, 0.044715
      %v1413 = vmul.f32 %v1411, 0.044715
      %v1414 = vadd.f32 %v1404, %v1412
      %v1415 = vadd.f32 %v1406, %v1413
      %v1416 = vmul.f32 %v1414, 0.7978846
      %v1417 = vmul.f32 %v1415, 0.7978846
      %v1418 = vtanh.pop %v1416
      %v1419 = vtanh.pop %v1417
      %v1420 = vadd.f32 %v1418, 1.0
      %v1421 = vadd.f32 %v1419, 1.0
      %v1422 = vmul.f32 %v1420, 0.5
      %v1423 = vmul.f32 %v1421, 0.5
      %v1424 = vmul.f32 %v1404, %v1422
      %v1425 = vmul.f32 %v1406, %v1423
      %v1426 = vpack.c.bf16 %v1425, %v1424
      %v1427 = vld [vmem:[%s15] sm:$0xff]
      %v1428 = vld [vmem:[%s15 + $0x8] sm:$0xff]
      %v1429 = vld [vmem:[%s15 + $0x10] sm:$0xff]
      %v1430 = vld [vmem:[%s15 + $0x18] sm:$0xff]
      %v1431 = vld [vmem:[%s15 + $0x20] sm:$0xff]
      %v1432 = vld [vmem:[%s15 + $0x28] sm:$0xff]
      %v1433 = vld [vmem:[%s15 + $0x30] sm:$0xff]
      %v1434 = vld [vmem:[%s15 + $0x38] sm:$0xff]
      %v1435 = vld [vmem:[%s15 + $0x40] sm:$0xff]
      %v1436 = vld [vmem:[%s15 + $0x48] sm:$0xff]
      %v1437 = vld [vmem:[%s15 + $0x50] sm:$0xff]
      %v1438 = vld [vmem:[%s15 + $0x58] sm:$0xff]
      %v1439 = vld [vmem:[%s15 + $0x60] sm:$0xff]
      %v1440 = vld [vmem:[%s15 + $0x68] sm:$0xff]
      %v1441 = vld [vmem:[%s15 + $0x70] sm:$0xff]
      %v1442 = vld [vmem:[%s15 + $0x78] sm:$0xff]
      %v1443 = vpack.c.bf16 %v1428, %v1427
      %v1444 = vpack.c.bf16 %v1430, %v1429
      %v1445 = vpack.c.bf16 %v1432, %v1431
      %v1446 = vpack.c.bf16 %v1434, %v1433
      %v1447 = vpack.c.bf16 %v1436, %v1435
      %v1448 = vpack.c.bf16 %v1438, %v1437
      %v1449 = vpack.c.bf16 %v1440, %v1439
      %v1450 = vpack.c.bf16 %v1442, %v1441
      %1451 = vmatpush.bf16.msra.mxu0 %v1450
      %1452 = vmatpush.bf16.msra.mxu0 %v1449
      %1453 = vmatpush.bf16.msra.mxu0 %v1448
      %1454 = vmatpush.bf16.msra.mxu0 %v1447
      %1455 = vmatpush.bf16.msra.mxu0 %v1446
      %1456 = vmatpush.bf16.msra.mxu0 %v1445
      %1457 = vmatpush.bf16.msra.mxu0 %v1444
      %1458 = vmatpush.bf16.msra.mxu0 %v1443
      %1459 = vmatmul.bf16.gmra.mxu0 %v1426
      %v1460 = vpop.f32.mrf.mxu0
      %v1461 = vadd.f32 0.0, %v1460
      %v1462 = vpop.f32.mrf.mxu0
      %v1463 = vadd.f32 0.0, %v1462
      %1464 = vdwg.mxu0
      %v1465 = vadd.f32 %v1322, %v1461
      %v1466 = vadd.f32 %v1323, %v1463
      %v1467 = vld [vmem:[%s16] sm:$0x1]
      %v1469 = vperm.slane %v1467, 0
      %v1471 = vadd.f32 %v1465, %v1469
      %v1472 = vadd.f32 %v1466, %v1469
      %1473 = vst.msk [vmem:[%s548] sm:$0xff] %vm563, %v1471
      %1474 = vst.msk [vmem:[%s548 + $0x8] sm:$0x1] %vm567, %v1472
      %p1475 = scmp.lt.s32.totalorder %s28, 1
      %s1476 = scalar_select %p1475, %s28, 1
      %s1477 = smul.addr %s1476, 2
      %s1478 = smul.addr %s1477, 8
      %s1479 = scalar_lea.vmem %s17, %s1478
      // Predicated region
      $region89: #{smiles_transformer_forward.9} parent=87 // pred_check
        %p1480 = pneg %p408
      $region90: #{smiles_transformer_forward.9} parent=87 // pred_check_branch
        %1482 = sbr.rel (%p1480) target = $region92
      $region91: #{smiles_transformer_forward.9} parent=87 // pred_region
        _
      $region92: #{smiles_transformer_forward.9} parent=87 // pred_fallthru
        _
    $region88: #{smiles_transformer_forward.9} parent=5 // pred_fallthru
      _
    %p1483 = scmp.le.s32.totalorder 2, %s23
    // Predicated region
    $region93: #{smiles_transformer_forward.9} parent=5 // pred_check
      %p1484 = pneg %p1483
    $region94: #{smiles_transformer_forward.9} parent=5 // pred_check_branch
      %1486 = sbr.rel (%p1484) target = $region96
    $region95: #{smiles_transformer_forward.9} parent=5 // pred_region
      %s1487 = ssub.s32 %s23, 2
      // Predicated region
      $region97: #{smiles_transformer_forward.9} parent=95 // pred_check
        %p1488 = pneg %p414
      $region98: #{smiles_transformer_forward.9} parent=95 // pred_check_branch
        %1490 = sbr.rel (%p1488) target = $region100
      $region99: #{smiles_transformer_forward.9} parent=95 // pred_region
        %p1491 = scmp.lt.s32.totalorder %s29, 1
        %s1492 = scalar_select %p1491, %s29, 1
        %s1493 = smul.addr %s1492, 2
        %s1494 = smul.addr %s1493, 8
        %s1495 = scalar_lea.vmem %s17, %s1494
      $region100: #{smiles_transformer_forward.9} parent=95 // pred_fallthru
        _
    $region96: #{smiles_transformer_forward.9} parent=5 // pred_fallthru
      _
  $region6: #{smiles_transformer_forward.9} parent=0 // loop_footer
    %s27 = sadd.s32 1, %s23
  $region7: #{smiles_transformer_forward.9} parent=0 // loop_footer_branch
    %22 = sbr.rel target = $region3
  $region8: #{smiles_transformer_forward.9} parent=0 // loop_exit
    _

</llo_original>
